<compile_context>
chip_gen: v7x
topology: tpu7x:2x2x1
jax: 0.10.0
libtpu: 0.0.40
codegen_flags: <defaults>
</compile_context>

<pallas_src>
import math
import functools

import jax
import jax.numpy as jnp
from jax import lax
from jax.experimental import pallas as pl
from jax.experimental.pallas import tpu as pltpu


# --------------------------------------------------------------------------- #
# helpers
# --------------------------------------------------------------------------- #
def _layernorm(x, gamma, beta, eps=1e-5):
    # x: (R, D) f32, gamma/beta: (1, D) f32
    mean = jnp.mean(x, axis=-1, keepdims=True)
    var = jnp.mean((x - mean) ** 2, axis=-1, keepdims=True)
    return (x - mean) * lax.rsqrt(var + eps) * gamma + beta


def _ceil_to(x, m):
    return ((x + m - 1) // m) * m


def _buffered(n):
    """pipeline_mode kwargs; degrade gracefully if pl.Buffered is unavailable."""
    try:
        return {"pipeline_mode": pl.Buffered(n)}
    except Exception:  # pragma: no cover - older jax
        return {}


def _chip_info():
    kind = ""
    try:
        kind = jax.devices()[0].device_kind.lower()
    except Exception:
        pass
    is_v5e = ("v5e" in kind) or ("v5 lite" in kind) or ("v5litepod" in kind)
    is_v7x = "v7" in kind
    has_bf16_eup = ("v6" in kind) or ("v7" in kind)
    vmem_bytes = 0
    try:
        vmem_bytes = int(pltpu.get_tpu_info().vmem_capacity_bytes)
    except Exception:
        vmem_bytes = 0
    if vmem_bytes <= 0:
        vmem_bytes = (64 if is_v7x else 128) * 1024 * 1024
    default_scoped = (16 if is_v5e else 32) * 1024 * 1024
    return {
        "is_v5e": is_v5e,
        "is_v7x": is_v7x,
        "has_bf16_eup": has_bf16_eup,
        "vmem_bytes": vmem_bytes,
        "default_scoped": default_scoped,
    }


def _pick_q_tile(L, max_tile=512):
    """Prefer q tiles that are multiples of 256 (MXU M dim), then 128, then 8."""
    if L <= max_tile:
        return L
    for align in (256, 128, 8):
        start = max_tile - (max_tile % align)
        for t in range(start, 0, -align):
            if t > 0 and L % t == 0:
                return t
    return L


def _pick_head_group(n_head, q_tile, L, budget_bytes=6 << 20):
    """Largest divisor of n_head keeping the live score block under budget."""
    per_head = q_tile * _ceil_to(L, 128) * 10  # ~f32 scores + bf16 probs + f32 copy
    for d in range(n_head, 0, -1):
        if n_head % d == 0 and d * per_head <= budget_bytes:
            return d
    return 1


def _vmem_bytes_estimate(L, lt, D, mlp_w, n_head, head_group, kv_chunk,
                         x_buffers=2):
    """Per-core VMEM budget (bytes), counting lane/sublane padding."""
    dh = D // n_head
    bf, f = 2, 4
    padL = _ceil_to(L, 128)
    pad_dh = _ceil_to(dh, 128)
    pad_lt = _ceil_to(lt, 8)
    pad_kc = _ceil_to(kv_chunk, 8)
    # single-buffered bf16 weights + f32 biases / LN params (Buffered(1))
    weights = bf * (D * D + D * 2 * D + D * D + D * mlp_w + mlp_w * D)
    biases = f * (2 * D + D + 2 * D + D + 2 * D + mlp_w + D)
    # pipelined activations: x full-seq block(s) + double-buffered output tile
    io = x_buffers * f * _ceil_to(L, 8) * D + 2 * f * pad_lt * D
    # persistent scratch
    scratch = bf * n_head * _ceil_to(dh, 8) * padL        # K (H, dh, L) lane-dense
    scratch += bf * n_head * _ceil_to(L, 8) * pad_dh      # V (H, L, dh)
    scratch += bf * n_head * pad_lt * pad_dh              # q_sc (H, Lt, dh)
    scratch += f * n_head * pad_lt * pad_dh               # oh_sc (H, Lt, dh)
    # transients: score group, q/h/attn f32 tiles, fc/gelu, KV-proj chunk temps
    trans = head_group * pad_lt * padL * (f + f + bf)
    trans += 4 * f * pad_lt * D
    trans += 2 * f * pad_lt * mlp_w
    trans += f * pad_kc * (3 * D + 2 * D)
    return int((weights + biases + io + scratch + trans) * 1.15)


# --------------------------------------------------------------------------- #
# kernel
# --------------------------------------------------------------------------- #
def _block_kernel(x_ref,
                  ln1_g_ref, ln1_b_ref,
                  wq_ref, bq_ref,
                  wkv_ref, bkv_ref,
                  wo_ref, bo_ref,
                  ln2_g_ref, ln2_b_ref,
                  wfc_ref, bfc_ref,
                  wproj_ref, bproj_ref,
                  o_ref,
                  k_sc, v_sc, q_sc, oh_sc,
                  *, n_head, q_tile, kv_chunk, head_group, exp_dtype):
    qt = pl.program_id(1)
    H = n_head
    L = x_ref.shape[1]
    D = x_ref.shape[2]
    dh = D // H
    Lt = q_tile
    n_chunks = L // kv_chunk
    n_groups = H // head_group

    # ---- K/V projection for the full sequence: once per batch element,
    # chunked over L so peak f32 temporaries stay chunk-sized -----------------
    @pl.when(qt == 0)
    def _():
        def project_chunk(start):
            xc = x_ref[0, pl.ds(start, kv_chunk), :].astype(jnp.float32)
            hc = _layernorm(xc, ln1_g_ref[...], ln1_b_ref[...])
            kv = jnp.dot(hc.astype(jnp.bfloat16), wkv_ref[...],
                         preferred_element_type=jnp.float32) + bkv_ref[...]
            kc = kv[:, :D].reshape(kv_chunk, H, dh)
            vc = kv[:, D:].reshape(kv_chunk, H, dh)
            # K lane-dense (H, dh, chunk); V sublane-major (H, chunk, dh)
            k_sc[:, :, pl.ds(start, kv_chunk)] = (
                jnp.transpose(kc, (1, 2, 0)).astype(jnp.bfloat16))
            v_sc[:, pl.ds(start, kv_chunk), :] = (
                jnp.transpose(vc, (1, 0, 2)).astype(jnp.bfloat16))

        if n_chunks == 1:
            project_chunk(0)
        else:
            def body(c, carry):
                project_chunk(pl.multiple_of(c * kv_chunk, kv_chunk))
                return carry
            lax.fori_loop(0, n_chunks, body, 0)

    # ---- query tile, sliced out of the already-resident full-seq block ------
    q_start = pl.multiple_of(qt * Lt, Lt)
    x = x_ref[0, pl.ds(q_start, Lt), :].astype(jnp.float32)            # (Lt, D)
    h1 = _layernorm(x, ln1_g_ref[...], ln1_b_ref[...])
    # 1/sqrt(dh) is pre-folded into wq/bq on the host.
    q = jnp.dot(h1.astype(jnp.bfloat16), wq_ref[...],
                preferred_element_type=jnp.float32) + bq_ref[...]      # (Lt, D)
    q_sc[...] = jnp.transpose(q.reshape(Lt, H, dh), (1, 0, 2)).astype(jnp.bfloat16)

    # ---- attention, chunked over head groups so scores stay small in VMEM ---
    def attend(hs):
        qg = q_sc[pl.ds(hs, head_group)]                               # (Hc, Lt, dh)
        kg = k_sc[pl.ds(hs, head_group)]                               # (Hc, dh, L)
        vg = v_sc[pl.ds(hs, head_group)]                               # (Hc, L, dh)
        s = jnp.einsum('hqd,hdk->hqk', qg, kg,
                       preferred_element_type=jnp.float32)             # (Hc, Lt, L)
        m = jnp.max(s, axis=-1, keepdims=True)
        p = jnp.exp((s - m).astype(exp_dtype))                         # bf16 on v6e/v7x
        row = jnp.sum(p.astype(jnp.float32), axis=-1, keepdims=True)   # f32 row sums
        og = jnp.einsum('hqk,hkd->hqd', p.astype(jnp.bfloat16), vg,
                        preferred_element_type=jnp.float32)            # (Hc, Lt, dh)
        oh_sc[pl.ds(hs, head_group)] = og * pl.reciprocal(row, approx=True)

    if n_groups == 1:
        attend(0)
    else:
        def hbody(g, carry):
            attend(pl.multiple_of(g * head_group, head_group))
            return carry
        lax.fori_loop(0, n_groups, hbody, 0)

    attn = jnp.transpose(oh_sc[...], (1, 0, 2)).reshape(Lt, D)
    attn = jnp.dot(attn.astype(jnp.bfloat16), wo_ref[...],
                   preferred_element_type=jnp.float32) + bo_ref[...]
    x = x + attn                                                       # residual 1

    # ---- ln_2 + MLP ----------------------------------------------------------
    h2 = _layernorm(x, ln2_g_ref[...], ln2_b_ref[...])
    fc = jnp.dot(h2.astype(jnp.bfloat16), wfc_ref[...],
                 preferred_element_type=jnp.float32) + bfc_ref[...]
    # exact (erf-based) GELU, matching torch.nn.GELU default, in f32
    gelu = 0.5 * fc * (1.0 + lax.erf(fc * (1.0 / math.sqrt(2.0))))
    mlp = jnp.dot(gelu.astype(jnp.bfloat16), wproj_ref[...],
                  preferred_element_type=jnp.float32) + bproj_ref[...]
    o_ref[0] = (x + mlp).astype(o_ref.dtype)                          # residual 2


# --------------------------------------------------------------------------- #
# host-side param prep + wrapper
# --------------------------------------------------------------------------- #
def prepare_kernel_params(params, n_head):
    """Transpose weights to (in, out), fold 1/sqrt(dh) into Q projection,
    split Q from K/V, cast weights to bf16 (biases / LN params stay f32)."""
    D = params["w_out"].shape[0]
    dh = D // n_head
    scale = 1.0 / math.sqrt(dh)
    w_qkv = params["w_qkv"]                 # (3D, D), rows = [Wq; Wk; Wv]
    b_qkv = params["b_qkv"].reshape(-1)     # (3D,)
    bf, f32 = jnp.bfloat16, jnp.float32
    return {
        "ln1_g": params["ln1_g"].astype(f32),
        "ln1_b": params["ln1_b"].astype(f32),
        "w_q":  (w_qkv[:D].T * scale).astype(bf),          # (D, D), scale folded in
        "b_q":  (b_qkv[:D] * scale).reshape(1, D).astype(f32),
        "w_kv": w_qkv[D:].T.astype(bf),                    # (D, 2D)
        "b_kv": b_qkv[D:].reshape(1, 2 * D).astype(f32),
        "w_out": params["w_out"].T.astype(bf),             # (D, D)
        "b_out": params["b_out"].reshape(1, D).astype(f32),
        "ln2_g": params["ln2_g"].astype(f32),
        "ln2_b": params["ln2_b"].astype(f32),
        "w_fc":  params["w_fc"].T.astype(bf),              # (D, mlp_w)
        "b_fc":  params["b_fc"].reshape(1, -1).astype(f32),
        "w_proj": params["w_proj"].T.astype(bf),           # (mlp_w, D)
        "b_proj": params["b_proj"].reshape(1, D).astype(f32),
    }


def residual_attention_block(x_lnd, params, n_head, *, max_q_tile=512):
    """x_lnd: (L, N, D) float32 — same (seq, batch, d_model) layout as PyTorch."""
    L, N, D = x_lnd.shape
    kp = prepare_kernel_params(params, n_head)
    mlp_w = kp["w_fc"].shape[1]
    dh = D // n_head

    info = _chip_info()
    x = jnp.transpose(x_lnd, (1, 0, 2))                   # (N, L, D) for the kernel

    lt = _pick_q_tile(L, max_q_tile)
    n_qt = L // lt
    # K/V projection chunk: reuse lt when its dynamic lane-dim stores stay
    # 128-aligned, otherwise fall back to a single full-sequence chunk.
    kv_chunk = lt if (lt == L or lt % 128 == 0) else L
    head_group = _pick_head_group(n_head, lt, L)
    exp_dtype = jnp.bfloat16 if info["has_bf16_eup"] else jnp.float32

    # Constant-index weights/biases: resident, single-buffered (DMA'd once).
    const = lambda shape: pl.BlockSpec(shape, lambda n, t: (0, 0), **_buffered(1))
    # On v7x (64 MiB VMEM) single-buffer the full-sequence x block as well.
    x_kwargs = _buffered(1) if info["is_v7x"] else {}

    flops = N * (2 * L * D * 2 * D          # K/V projection
                 + 2 * L * D * D            # Q projection
                 + 4 * L * L * D            # scores + PV
                 + 2 * L * D * D            # out projection
                 + 4 * L * D * mlp_w)       # MLP
    transcendentals = N * (n_head * L * L + L * mlp_w)
    bytes_accessed = (2 * N * L * D * 4                     # x in + out
                      + 2 * (4 * D * D + 2 * D * mlp_w)     # bf16 weights
                      + 4 * (9 * D + mlp_w))

    est = _vmem_bytes_estimate(L, lt, D, mlp_w, n_head, head_group, kv_chunk,
                               x_buffers=(1 if info["is_v7x"] else 2))
    # The q-tile axis must stay "arbitrary": the K/V scratch written at qt==0 is
    # reused by every query tile of the same batch element.
    compiler_kwargs = dict(dimension_semantics=("parallel", "arbitrary"))
    if est > info["default_scoped"]:
        cap = info["vmem_bytes"] * 7 // 8                  # headroom below physical
        compiler_kwargs["vmem_limit_bytes"] = int(
            max(min(est * 5 // 4, cap), info["default_scoped"]))

    out = pl.pallas_call(
        functools.partial(_block_kernel, n_head=n_head, q_tile=lt,
                          kv_chunk=kv_chunk, head_group=head_group,
                          exp_dtype=exp_dtype),
        out_shape=jax.ShapeDtypeStruct((N, L, D), x.dtype),
        grid_spec=pltpu.PrefetchScalarGridSpec(
            num_scalar_prefetch=0,
            grid=(N, n_qt),
            in_specs=[
                pl.BlockSpec((1, L, D), lambda n, t: (n, 0, 0), **x_kwargs),  # x
                const((1, D)), const((1, D)),                       # ln_1 gamma, beta
                const((D, D)), const((1, D)),                       # W_q (scaled), b_q
                const((D, 2 * D)), const((1, 2 * D)),               # W_kv, b_kv
                const((D, D)), const((1, D)),                       # W_out, b_out
                const((1, D)), const((1, D)),                       # ln_2 gamma, beta
                const((D, mlp_w)), const((1, mlp_w)),               # W_fc, b_fc
                const((mlp_w, D)), const((1, D)),                   # W_proj, b_proj
            ],
            out_specs=pl.BlockSpec((1, lt, D), lambda n, t: (n, t, 0)),
            scratch_shapes=[
                pltpu.VMEM((n_head, dh, L), jnp.bfloat16),   # K, lane-dense
                pltpu.VMEM((n_head, L, dh), jnp.bfloat16),   # V, head-major
                pltpu.VMEM((n_head, lt, dh), jnp.bfloat16),  # Q, head-major (this tile)
                pltpu.VMEM((n_head, lt, dh), jnp.float32),   # per-head attn output
            ],
        ),
        compiler_params=pltpu.CompilerParams(**compiler_kwargs),
        cost_estimate=pl.CostEstimate(
            flops=int(flops),
            transcendentals=int(transcendentals),
            bytes_accessed=int(bytes_accessed)),
    )(x,
      kp["ln1_g"], kp["ln1_b"],
      kp["w_q"], kp["b_q"],
      kp["w_kv"], kp["b_kv"],
      kp["w_out"], kp["b_out"],
      kp["ln2_g"], kp["ln2_b"],
      kp["w_fc"], kp["b_fc"],
      kp["w_proj"], kp["b_proj"])

    return jnp.transpose(out, (1, 0, 2))                  # back to (L, N, D)


# --------------------------------------------------------------------------- #
# pure-JAX reference + test
# --------------------------------------------------------------------------- #
def reference_block(x_lnd, params, n_head):
    """Pure-JAX f32 reference (same math as the PyTorch module)."""
    L, N, D = x_lnd.shape
    dh = D // n_head

    def ln(x, g, b):
        m = jnp.mean(x, axis=-1, keepdims=True)
        v = jnp.mean((x - m) ** 2, axis=-1, keepdims=True)
        return (x - m) * lax.rsqrt(v + 1e-5) * g + b

    x = x_lnd
    h = ln(x, params["ln1_g"], params["ln1_b"])
    qkv = h @ params["w_qkv"].T + params["b_qkv"]
    q, k, v = qkv[..., :D], qkv[..., D:2 * D], qkv[..., 2 * D:]

    def split(t):
        return jnp.transpose(t.reshape(L, N, n_head, dh), (1, 2, 0, 3))
    qh, kh, vh = split(q), split(k), split(v)
    s = jnp.einsum("nhld,nhmd->nhlm", qh, kh) / math.sqrt(dh)
    p = jax.nn.softmax(s, axis=-1)
    o = jnp.einsum("nhlm,nhmd->nhld", p, vh)
    o = jnp.transpose(o, (2, 0, 1, 3)).reshape(L, N, D)
    attn = o @ params["w_out"].T + params["b_out"]
    x = x + attn
    h2 = ln(x, params["ln2_g"], params["ln2_b"])
    fc = h2 @ params["w_fc"].T + params["b_fc"]
    g = 0.5 * fc * (1.0 + lax.erf(fc / math.sqrt(2.0)))
    mlp = g @ params["w_proj"].T + params["b_proj"]
    return x + mlp


def make_params(key, d_model, n_head, mlp_ratio):
    mlp_w = int(d_model * mlp_ratio)
    ks = jax.random.split(key, 6)
    s = 0.02
    return {
        "ln1_g": jnp.ones((1, d_model), jnp.float32),
        "ln1_b": jnp.zeros((1, d_model), jnp.float32),
        "w_qkv": s * jax.random.normal(ks[0], (3 * d_model, d_model), jnp.float32),
        "b_qkv": s * jax.random.normal(ks[1], (1, 3 * d_model), jnp.float32),
        "w_out": s * jax.random.normal(ks[2], (d_model, d_model), jnp.float32),
        "b_out": jnp.zeros((1, d_model), jnp.float32),
        "ln2_g": jnp.ones((1, d_model), jnp.float32),
        "ln2_b": jnp.zeros((1, d_model), jnp.float32),
        "w_fc":  s * jax.random.normal(ks[3], (mlp_w, d_model), jnp.float32),
        "b_fc":  s * jax.random.normal(ks[4], (1, mlp_w), jnp.float32),
        "w_proj": s * jax.random.normal(ks[5], (d_model, mlp_w), jnp.float32),
        "b_proj": jnp.zeros((1, d_model), jnp.float32),
    }


if __name__ == "__main__":
    L, N, D, H = 8, 2, 32, 4          # seq, batch, d_model, n_head
    MLP_RATIO = 4.0

    key = jax.random.PRNGKey(0)
    kx, kp = jax.random.split(key)
    x = jax.random.normal(kx, (L, N, D), jnp.float32)      # (seq, batch, d_model)
    params = make_params(kp, D, H, MLP_RATIO)

    out = residual_attention_block(x, params, H)
    out = jax.block_until_ready(out)

    ref = reference_block(x, params, H)
    assert out.shape == (L, N, D)
    # Kernel uses bf16 MXU operands (f32 accumulation), bf16 exp on v6e/v7x and
    # an approx reciprocal; compare against f32 reference at bf16 tolerance.
    assert jnp.allclose(out, ref, rtol=2e-2, atol=2e-2), \
        f"max abs err {jnp.max(jnp.abs(out - ref))}"

    print("KERNEL_OK")
</pallas_src>

<mosaic_0001>
module attributes {stable_mosaic.version = 11 : i64} {
  func.func @_block_kernel(%arg0: i32, %arg1: i32, %arg2: memref<1x8x32xf32, #tpu.memory_space<vmem>>, %arg3: memref<1x32xf32, #tpu.memory_space<vmem>>, %arg4: memref<1x32xf32, #tpu.memory_space<vmem>>, %arg5: memref<32x32xbf16, #tpu.memory_space<vmem>>, %arg6: memref<1x32xf32, #tpu.memory_space<vmem>>, %arg7: memref<32x64xbf16, #tpu.memory_space<vmem>>, %arg8: memref<1x64xf32, #tpu.memory_space<vmem>>, %arg9: memref<32x32xbf16, #tpu.memory_space<vmem>>, %arg10: memref<1x32xf32, #tpu.memory_space<vmem>>, %arg11: memref<1x32xf32, #tpu.memory_space<vmem>>, %arg12: memref<1x32xf32, #tpu.memory_space<vmem>>, %arg13: memref<32x128xbf16, #tpu.memory_space<vmem>>, %arg14: memref<1x128xf32, #tpu.memory_space<vmem>>, %arg15: memref<128x32xbf16, #tpu.memory_space<vmem>>, %arg16: memref<1x32xf32, #tpu.memory_space<vmem>>, %arg17: memref<1x8x32xf32, #tpu.memory_space<vmem>>, %arg18: memref<4x8x8xbf16, #tpu.memory_space<vmem>>, %arg19: memref<4x8x8xbf16, #tpu.memory_space<vmem>>, %arg20: memref<4x8x8xbf16, #tpu.memory_space<vmem>>, %arg21: memref<4x8x8xf32, #tpu.memory_space<vmem>>) attributes {dimension_semantics = [#tpu.dimension_semantics<parallel>, #tpu.dimension_semantics<arbitrary>], iteration_bounds = array<i64: 2, 1>, scalar_prefetch = 0 : i64, scratch_operands = 4 : i64, tpu.core_type = #tpu.core_type<tc>, window_params = [{transform_indices = @transform_0, window_bounds = array<i64: 1, 8, 32>}, {pipeline_mode = #tpu.pipeline_mode<synchronous>, transform_indices = @transform_1, window_bounds = array<i64: 1, 32>}, {pipeline_mode = #tpu.pipeline_mode<synchronous>, transform_indices = @transform_2, window_bounds = array<i64: 1, 32>}, {pipeline_mode = #tpu.pipeline_mode<synchronous>, transform_indices = @transform_3, window_bounds = array<i64: 32, 32>}, {pipeline_mode = #tpu.pipeline_mode<synchronous>, transform_indices = @transform_4, window_bounds = array<i64: 1, 32>}, {pipeline_mode = #tpu.pipeline_mode<synchronous>, transform_indices = @transform_5, window_bounds = array<i64: 32, 64>}, {pipeline_mode = #tpu.pipeline_mode<synchronous>, transform_indices = @transform_6, window_bounds = array<i64: 1, 64>}, {pipeline_mode = #tpu.pipeline_mode<synchronous>, transform_indices = @transform_7, window_bounds = array<i64: 32, 32>}, {pipeline_mode = #tpu.pipeline_mode<synchronous>, transform_indices = @transform_8, window_bounds = array<i64: 1, 32>}, {pipeline_mode = #tpu.pipeline_mode<synchronous>, transform_indices = @transform_9, window_bounds = array<i64: 1, 32>}, {pipeline_mode = #tpu.pipeline_mode<synchronous>, transform_indices = @transform_10, window_bounds = array<i64: 1, 32>}, {pipeline_mode = #tpu.pipeline_mode<synchronous>, transform_indices = @transform_11, window_bounds = array<i64: 32, 128>}, {pipeline_mode = #tpu.pipeline_mode<synchronous>, transform_indices = @transform_12, window_bounds = array<i64: 1, 128>}, {pipeline_mode = #tpu.pipeline_mode<synchronous>, transform_indices = @transform_13, window_bounds = array<i64: 128, 32>}, {pipeline_mode = #tpu.pipeline_mode<synchronous>, transform_indices = @transform_14, window_bounds = array<i64: 1, 32>}, {transform_indices = @transform_15, window_bounds = array<i64: 1, 8, 32>}]} {
    %c0_i32 = arith.constant 0 : i32
    %0 = arith.cmpi eq, %arg1, %c0_i32 : i32
    %1 = arith.extui %0 : i1 to i32
    %c0_i32_0 = arith.constant 0 : i32
    %2 = arith.cmpi ne, %1, %c0_i32_0 : i32
    scf.if %2 {
      %c0_67 = arith.constant 0 : index
      %c0_68 = arith.constant 0 : index
      %c0_69 = arith.constant 0 : index
      %117 = vector.load %arg2[%c0_67, %c0_68, %c0_69] : memref<1x8x32xf32, #tpu.memory_space<vmem>>, vector<1x8x32xf32>
      %118 = vector.shape_cast %117 : vector<1x8x32xf32> to vector<8x32xf32>
      %c0_70 = arith.constant 0 : index
      %c0_71 = arith.constant 0 : index
      %119 = vector.load %arg3[%c0_70, %c0_71] : memref<1x32xf32, #tpu.memory_space<vmem>>, vector<1x32xf32>
      %c0_72 = arith.constant 0 : index
      %c0_73 = arith.constant 0 : index
      %120 = vector.load %arg4[%c0_72, %c0_73] : memref<1x32xf32, #tpu.memory_space<vmem>>, vector<1x32xf32>
      %cst_74 = arith.constant dense<0.000000e+00> : vector<8xf32>
      %121 = vector.multi_reduction <add>, %118, %cst_74 [1] : vector<8x32xf32> to vector<8xf32>
      %122 = vector.shape_cast %121 : vector<8xf32> to vector<8x1xf32>
      %cst_75 = arith.constant 3.200000e+01 : f32
      %123 = vector.broadcast %cst_75 : f32 to vector<8x1xf32>
      %124 = arith.divf %122, %123 : vector<8x1xf32>
      %125 = vector.broadcast %124 : vector<8x1xf32> to vector<8x32xf32>
      %126 = arith.subf %118, %125 : vector<8x32xf32>
      %127 = arith.mulf %126, %126 : vector<8x32xf32>
      %cst_76 = arith.constant dense<0.000000e+00> : vector<8xf32>
      %128 = vector.multi_reduction <add>, %127, %cst_76 [1] : vector<8x32xf32> to vector<8xf32>
      %129 = vector.shape_cast %128 : vector<8xf32> to vector<8x1xf32>
      %cst_77 = arith.constant 3.200000e+01 : f32
      %130 = vector.broadcast %cst_77 : f32 to vector<8x1xf32>
      %131 = arith.divf %129, %130 : vector<8x1xf32>
      %132 = vector.broadcast %124 : vector<8x1xf32> to vector<8x32xf32>
      %133 = arith.subf %118, %132 : vector<8x32xf32>
      %cst_78 = arith.constant 9.99999974E-6 : f32
      %134 = vector.broadcast %cst_78 : f32 to vector<8x1xf32>
      %135 = arith.addf %131, %134 : vector<8x1xf32>
      %136 = math.rsqrt %135 : vector<8x1xf32>
      %137 = vector.broadcast %136 : vector<8x1xf32> to vector<8x32xf32>
      %138 = arith.mulf %133, %137 : vector<8x32xf32>
      %139 = vector.broadcast %119 : vector<1x32xf32> to vector<8x32xf32>
      %140 = arith.mulf %138, %139 : vector<8x32xf32>
      %141 = vector.broadcast %120 : vector<1x32xf32> to vector<8x32xf32>
      %142 = arith.addf %140, %141 : vector<8x32xf32>
      %143 = arith.truncf %142 : vector<8x32xf32> to vector<8x32xbf16>
      %c0_79 = arith.constant 0 : index
      %c0_80 = arith.constant 0 : index
      %144 = vector.load %arg7[%c0_79, %c0_80] : memref<32x64xbf16, #tpu.memory_space<vmem>>, vector<32x64xbf16>
      %cst_81 = arith.constant dense<0.000000e+00> : vector<8x64xf32>
      %145 = tpu.matmul %143, %144, %cst_81 {dimension_numbers = #tpu.dot_dimension_numbers<[1], [0], [0], [1], [0, 0, 1, 1], [], []>} : vector<8x32xbf16>, vector<32x64xbf16>, vector<8x64xf32> -> vector<8x64xf32>
      %c0_82 = arith.constant 0 : index
      %c0_83 = arith.constant 0 : index
      %146 = vector.load %arg8[%c0_82, %c0_83] : memref<1x64xf32, #tpu.memory_space<vmem>>, vector<1x64xf32>
      %147 = vector.broadcast %146 : vector<1x64xf32> to vector<8x64xf32>
      %148 = arith.addf %145, %147 : vector<8x64xf32>
      %149 = vector.extract_strided_slice %148 {offsets = [0, 0], sizes = [8, 32], strides = [1, 1]} : vector<8x64xf32> to vector<8x32xf32>
      %150 = vector.shape_cast %149 : vector<8x32xf32> to vector<8x4x8xf32>
      %151 = vector.extract_strided_slice %148 {offsets = [0, 32], sizes = [8, 32], strides = [1, 1]} : vector<8x64xf32> to vector<8x32xf32>
      %152 = vector.shape_cast %151 : vector<8x32xf32> to vector<8x4x8xf32>
      %153 = tpu.transpose %150, [1, 2, 0] : vector<8x4x8xf32> -> vector<4x8x8xf32>
      %154 = arith.truncf %153 : vector<4x8x8xf32> to vector<4x8x8xbf16>
      %c0_84 = arith.constant 0 : index
      %c0_85 = arith.constant 0 : index
      %c0_86 = arith.constant 0 : index
      %155 = vector.load %arg18[%c0_84, %c0_85, %c0_86] : memref<4x8x8xbf16, #tpu.memory_space<vmem>>, vector<4x8x8xbf16>
      tpu.vector_store %arg18[%c0_84, %c0_85, %c0_86], %154 {strides = array<i32>} : memref<4x8x8xbf16, #tpu.memory_space<vmem>>, vector<4x8x8xbf16>,
      %156 = tpu.transpose %152, [1, 0, 2] : vector<8x4x8xf32> -> vector<4x8x8xf32>
      %157 = arith.truncf %156 : vector<4x8x8xf32> to vector<4x8x8xbf16>
      %c0_87 = arith.constant 0 : index
      %c0_88 = arith.constant 0 : index
      %c0_89 = arith.constant 0 : index
      %158 = vector.load %arg19[%c0_87, %c0_88, %c0_89] : memref<4x8x8xbf16, #tpu.memory_space<vmem>>, vector<4x8x8xbf16>
      tpu.vector_store %arg19[%c0_87, %c0_88, %c0_89], %157 {strides = array<i32>} : memref<4x8x8xbf16, #tpu.memory_space<vmem>>, vector<4x8x8xbf16>,
    } else {
    }
    %c8_i32 = arith.constant 8 : i32
    %3 = arith.muli %arg1, %c8_i32 : i32
    %4 = tpu.assume_multiple %3, 8 : i32
    %c0 = arith.constant 0 : index
    %5 = arith.index_cast %4 : i32 to index
    %c0_1 = arith.constant 0 : index
    %6 = vector.load %arg2[%c0, %5, %c0_1] : memref<1x8x32xf32, #tpu.memory_space<vmem>>, vector<1x8x32xf32>
    %7 = vector.shape_cast %6 : vector<1x8x32xf32> to vector<8x32xf32>
    %c0_2 = arith.constant 0 : index
    %c0_3 = arith.constant 0 : index
    %8 = vector.load %arg3[%c0_2, %c0_3] : memref<1x32xf32, #tpu.memory_space<vmem>>, vector<1x32xf32>
    %c0_4 = arith.constant 0 : index
    %c0_5 = arith.constant 0 : index
    %9 = vector.load %arg4[%c0_4, %c0_5] : memref<1x32xf32, #tpu.memory_space<vmem>>, vector<1x32xf32>
    %cst = arith.constant dense<0.000000e+00> : vector<8xf32>
    %10 = vector.multi_reduction <add>, %7, %cst [1] : vector<8x32xf32> to vector<8xf32>
    %11 = vector.shape_cast %10 : vector<8xf32> to vector<8x1xf32>
    %cst_6 = arith.constant 3.200000e+01 : f32
    %12 = vector.broadcast %cst_6 : f32 to vector<8x1xf32>
    %13 = arith.divf %11, %12 : vector<8x1xf32>
    %14 = vector.broadcast %13 : vector<8x1xf32> to vector<8x32xf32>
    %15 = arith.subf %7, %14 : vector<8x32xf32>
    %16 = arith.mulf %15, %15 : vector<8x32xf32>
    %cst_7 = arith.constant dense<0.000000e+00> : vector<8xf32>
    %17 = vector.multi_reduction <add>, %16, %cst_7 [1] : vector<8x32xf32> to vector<8xf32>
    %18 = vector.shape_cast %17 : vector<8xf32> to vector<8x1xf32>
    %cst_8 = arith.constant 3.200000e+01 : f32
    %19 = vector.broadcast %cst_8 : f32 to vector<8x1xf32>
    %20 = arith.divf %18, %19 : vector<8x1xf32>
    %21 = vector.broadcast %13 : vector<8x1xf32> to vector<8x32xf32>
    %22 = arith.subf %7, %21 : vector<8x32xf32>
    %cst_9 = arith.constant 9.99999974E-6 : f32
    %23 = vector.broadcast %cst_9 : f32 to vector<8x1xf32>
    %24 = arith.addf %20, %23 : vector<8x1xf32>
    %25 = math.rsqrt %24 : vector<8x1xf32>
    %26 = vector.broadcast %25 : vector<8x1xf32> to vector<8x32xf32>
    %27 = arith.mulf %22, %26 : vector<8x32xf32>
    %28 = vector.broadcast %8 : vector<1x32xf32> to vector<8x32xf32>
    %29 = arith.mulf %27, %28 : vector<8x32xf32>
    %30 = vector.broadcast %9 : vector<1x32xf32> to vector<8x32xf32>
    %31 = arith.addf %29, %30 : vector<8x32xf32>
    %32 = arith.truncf %31 : vector<8x32xf32> to vector<8x32xbf16>
    %c0_10 = arith.constant 0 : index
    %c0_11 = arith.constant 0 : index
    %33 = vector.load %arg5[%c0_10, %c0_11] : memref<32x32xbf16, #tpu.memory_space<vmem>>, vector<32x32xbf16>
    %cst_12 = arith.constant dense<0.000000e+00> : vector<8x32xf32>
    %34 = tpu.matmul %32, %33, %cst_12 {dimension_numbers = #tpu.dot_dimension_numbers<[1], [0], [0], [1], [0, 0, 1, 1], [], []>} : vector<8x32xbf16>, vector<32x32xbf16>, vector<8x32xf32> -> vector<8x32xf32>
    %c0_13 = arith.constant 0 : index
    %c0_14 = arith.constant 0 : index
    %35 = vector.load %arg6[%c0_13, %c0_14] : memref<1x32xf32, #tpu.memory_space<vmem>>, vector<1x32xf32>
    %36 = vector.broadcast %35 : vector<1x32xf32> to vector<8x32xf32>
    %37 = arith.addf %34, %36 : vector<8x32xf32>
    %38 = vector.shape_cast %37 : vector<8x32xf32> to vector<8x4x8xf32>
    %39 = tpu.transpose %38, [1, 0, 2] : vector<8x4x8xf32> -> vector<4x8x8xf32>
    %40 = arith.truncf %39 : vector<4x8x8xf32> to vector<4x8x8xbf16>
    %c0_15 = arith.constant 0 : index
    %c0_16 = arith.constant 0 : index
    %c0_17 = arith.constant 0 : index
    %41 = vector.load %arg20[%c0_15, %c0_16, %c0_17] : memref<4x8x8xbf16, #tpu.memory_space<vmem>>, vector<4x8x8xbf16>
    tpu.vector_store %arg20[%c0_15, %c0_16, %c0_17], %40 {strides = array<i32>} : memref<4x8x8xbf16, #tpu.memory_space<vmem>>, vector<4x8x8xbf16>,
    %c0_18 = arith.constant 0 : index
    %c0_19 = arith.constant 0 : index
    %c0_20 = arith.constant 0 : index
    %42 = vector.load %arg20[%c0_18, %c0_19, %c0_20] : memref<4x8x8xbf16, #tpu.memory_space<vmem>>, vector<4x8x8xbf16>
    %c0_21 = arith.constant 0 : index
    %c0_22 = arith.constant 0 : index
    %c0_23 = arith.constant 0 : index
    %43 = vector.load %arg18[%c0_21, %c0_22, %c0_23] : memref<4x8x8xbf16, #tpu.memory_space<vmem>>, vector<4x8x8xbf16>
    %c0_24 = arith.constant 0 : index
    %c0_25 = arith.constant 0 : index
    %c0_26 = arith.constant 0 : index
    %44 = vector.load %arg19[%c0_24, %c0_25, %c0_26] : memref<4x8x8xbf16, #tpu.memory_space<vmem>>, vector<4x8x8xbf16>
    "tpu.trace_start"() <{level = 10 : i32, message = "hqd,hdk->hqk"}> : () -> ()
    %cst_27 = arith.constant dense<0.000000e+00> : vector<4x8x8xf32>
    %45 = tpu.matmul %42, %43, %cst_27 {dimension_numbers = #tpu.dot_dimension_numbers<[2], [1], [1], [2], [0, 0, 0, 1, 1, 2], [0], [0]>} : vector<4x8x8xbf16>, vector<4x8x8xbf16>, vector<4x8x8xf32> -> vector<4x8x8xf32>
    "tpu.trace_stop"() : () -> ()
    %cst_28 = arith.constant dense<0xFF800000> : vector<4x8xf32>
    %46 = vector.multi_reduction <maximumf>, %45, %cst_28 [2] : vector<4x8x8xf32> to vector<4x8xf32>
    %47 = vector.shape_cast %46 : vector<4x8xf32> to vector<4x8x1xf32>
    %48 = vector.broadcast %47 : vector<4x8x1xf32> to vector<4x8x8xf32>
    %49 = arith.subf %45, %48 : vector<4x8x8xf32>
    %50 = math.exp %49 : vector<4x8x8xf32>
    %cst_29 = arith.constant dense<0.000000e+00> : vector<4x8xf32>
    %51 = vector.multi_reduction <add>, %50, %cst_29 [2] : vector<4x8x8xf32> to vector<4x8xf32>
    %52 = vector.shape_cast %51 : vector<4x8xf32> to vector<4x8x1xf32>
    %53 = arith.truncf %50 : vector<4x8x8xf32> to vector<4x8x8xbf16>
    "tpu.trace_start"() <{level = 10 : i32, message = "hqk,hkd->hqd"}> : () -> ()
    %cst_30 = arith.constant dense<0.000000e+00> : vector<4x8x8xf32>
    %54 = tpu.matmul %53, %44, %cst_30 {dimension_numbers = #tpu.dot_dimension_numbers<[2], [1], [1], [2], [0, 0, 0, 1, 1, 2], [0], [0]>} : vector<4x8x8xbf16>, vector<4x8x8xbf16>, vector<4x8x8xf32> -> vector<4x8x8xf32>
    "tpu.trace_stop"() : () -> ()
    %55 = tpu.reciprocal %52 {approx = true} : vector<4x8x1xf32> -> vector<4x8x1xf32>
    %56 = vector.broadcast %55 : vector<4x8x1xf32> to vector<4x8x8xf32>
    %57 = arith.mulf %54, %56 : vector<4x8x8xf32>
    %c0_31 = arith.constant 0 : index
    %c0_32 = arith.constant 0 : index
    %c0_33 = arith.constant 0 : index
    %58 = vector.load %arg21[%c0_31, %c0_32, %c0_33] : memref<4x8x8xf32, #tpu.memory_space<vmem>>, vector<4x8x8xf32>
    tpu.vector_store %arg21[%c0_31, %c0_32, %c0_33], %57 {strides = array<i32>} : memref<4x8x8xf32, #tpu.memory_space<vmem>>, vector<4x8x8xf32>,
    %c0_34 = arith.constant 0 : index
    %c0_35 = arith.constant 0 : index
    %c0_36 = arith.constant 0 : index
    %59 = vector.load %arg21[%c0_34, %c0_35, %c0_36] : memref<4x8x8xf32, #tpu.memory_space<vmem>>, vector<4x8x8xf32>
    %60 = tpu.transpose %59, [1, 0, 2] : vector<4x8x8xf32> -> vector<8x4x8xf32>
    %61 = vector.shape_cast %60 : vector<8x4x8xf32> to vector<8x32xf32>
    %62 = arith.truncf %61 : vector<8x32xf32> to vector<8x32xbf16>
    %c0_37 = arith.constant 0 : index
    %c0_38 = arith.constant 0 : index
    %63 = vector.load %arg9[%c0_37, %c0_38] : memref<32x32xbf16, #tpu.memory_space<vmem>>, vector<32x32xbf16>
    %cst_39 = arith.constant dense<0.000000e+00> : vector<8x32xf32>
    %64 = tpu.matmul %62, %63, %cst_39 {dimension_numbers = #tpu.dot_dimension_numbers<[1], [0], [0], [1], [0, 0, 1, 1], [], []>} : vector<8x32xbf16>, vector<32x32xbf16>, vector<8x32xf32> -> vector<8x32xf32>
    %c0_40 = arith.constant 0 : index
    %c0_41 = arith.constant 0 : index
    %65 = vector.load %arg10[%c0_40, %c0_41] : memref<1x32xf32, #tpu.memory_space<vmem>>, vector<1x32xf32>
    %66 = vector.broadcast %65 : vector<1x32xf32> to vector<8x32xf32>
    %67 = arith.addf %64, %66 : vector<8x32xf32>
    %68 = arith.addf %7, %67 : vector<8x32xf32>
    %c0_42 = arith.constant 0 : index
    %c0_43 = arith.constant 0 : index
    %69 = vector.load %arg11[%c0_42, %c0_43] : memref<1x32xf32, #tpu.memory_space<vmem>>, vector<1x32xf32>
    %c0_44 = arith.constant 0 : index
    %c0_45 = arith.constant 0 : index
    %70 = vector.load %arg12[%c0_44, %c0_45] : memref<1x32xf32, #tpu.memory_space<vmem>>, vector<1x32xf32>
    %cst_46 = arith.constant dense<0.000000e+00> : vector<8xf32>
    %71 = vector.multi_reduction <add>, %68, %cst_46 [1] : vector<8x32xf32> to vector<8xf32>
    %72 = vector.shape_cast %71 : vector<8xf32> to vector<8x1xf32>
    %cst_47 = arith.constant 3.200000e+01 : f32
    %73 = vector.broadcast %cst_47 : f32 to vector<8x1xf32>
    %74 = arith.divf %72, %73 : vector<8x1xf32>
    %75 = vector.broadcast %74 : vector<8x1xf32> to vector<8x32xf32>
    %76 = arith.subf %68, %75 : vector<8x32xf32>
    %77 = arith.mulf %76, %76 : vector<8x32xf32>
    %cst_48 = arith.constant dense<0.000000e+00> : vector<8xf32>
    %78 = vector.multi_reduction <add>, %77, %cst_48 [1] : vector<8x32xf32> to vector<8xf32>
    %79 = vector.shape_cast %78 : vector<8xf32> to vector<8x1xf32>
    %cst_49 = arith.constant 3.200000e+01 : f32
    %80 = vector.broadcast %cst_49 : f32 to vector<8x1xf32>
    %81 = arith.divf %79, %80 : vector<8x1xf32>
    %82 = vector.broadcast %74 : vector<8x1xf32> to vector<8x32xf32>
    %83 = arith.subf %68, %82 : vector<8x32xf32>
    %cst_50 = arith.constant 9.99999974E-6 : f32
    %84 = vector.broadcast %cst_50 : f32 to vector<8x1xf32>
    %85 = arith.addf %81, %84 : vector<8x1xf32>
    %86 = math.rsqrt %85 : vector<8x1xf32>
    %87 = vector.broadcast %86 : vector<8x1xf32> to vector<8x32xf32>
    %88 = arith.mulf %83, %87 : vector<8x32xf32>
    %89 = vector.broadcast %69 : vector<1x32xf32> to vector<8x32xf32>
    %90 = arith.mulf %88, %89 : vector<8x32xf32>
    %91 = vector.broadcast %70 : vector<1x32xf32> to vector<8x32xf32>
    %92 = arith.addf %90, %91 : vector<8x32xf32>
    %93 = arith.truncf %92 : vector<8x32xf32> to vector<8x32xbf16>
    %c0_51 = arith.constant 0 : index
    %c0_52 = arith.constant 0 : index
    %94 = vector.load %arg13[%c0_51, %c0_52] : memref<32x128xbf16, #tpu.memory_space<vmem>>, vector<32x128xbf16>
    %cst_53 = arith.constant dense<0.000000e+00> : vector<8x128xf32>
    %95 = tpu.matmul %93, %94, %cst_53 {dimension_numbers = #tpu.dot_dimension_numbers<[1], [0], [0], [1], [0, 0, 1, 1], [], []>} : vector<8x32xbf16>, vector<32x128xbf16>, vector<8x128xf32> -> vector<8x128xf32>
    %c0_54 = arith.constant 0 : index
    %c0_55 = arith.constant 0 : index
    %96 = vector.load %arg14[%c0_54, %c0_55] : memref<1x128xf32, #tpu.memory_space<vmem>>, vector<1x128xf32>
    %97 = vector.broadcast %96 : vector<1x128xf32> to vector<8x128xf32>
    %98 = arith.addf %95, %97 : vector<8x128xf32>
    %cst_56 = arith.constant 5.000000e-01 : f32
    %99 = vector.broadcast %cst_56 : f32 to vector<8x128xf32>
    %100 = arith.mulf %99, %98 : vector<8x128xf32>
    %cst_57 = arith.constant 0.707106769 : f32
    %101 = vector.broadcast %cst_57 : f32 to vector<8x128xf32>
    %102 = arith.mulf %98, %101 : vector<8x128xf32>
    %103 = math.erf %102 : vector<8x128xf32>
    %cst_58 = arith.constant 1.000000e+00 : f32
    %104 = vector.broadcast %cst_58 : f32 to vector<8x128xf32>
    %105 = arith.addf %104, %103 : vector<8x128xf32>
    %106 = arith.mulf %100, %105 : vector<8x128xf32>
    %107 = arith.truncf %106 : vector<8x128xf32> to vector<8x128xbf16>
    %c0_59 = arith.constant 0 : index
    %c0_60 = arith.constant 0 : index
    %108 = vector.load %arg15[%c0_59, %c0_60] : memref<128x32xbf16, #tpu.memory_space<vmem>>, vector<128x32xbf16>
    %cst_61 = arith.constant dense<0.000000e+00> : vector<8x32xf32>
    %109 = tpu.matmul %107, %108, %cst_61 {dimension_numbers = #tpu.dot_dimension_numbers<[1], [0], [0], [1], [0, 0, 1, 1], [], []>} : vector<8x128xbf16>, vector<128x32xbf16>, vector<8x32xf32> -> vector<8x32xf32>
    %c0_62 = arith.constant 0 : index
    %c0_63 = arith.constant 0 : index
    %110 = vector.load %arg16[%c0_62, %c0_63] : memref<1x32xf32, #tpu.memory_space<vmem>>, vector<1x32xf32>
    %111 = vector.broadcast %110 : vector<1x32xf32> to vector<8x32xf32>
    %112 = arith.addf %109, %111 : vector<8x32xf32>
    %113 = arith.addf %68, %112 : vector<8x32xf32>
    %c0_64 = arith.constant 0 : index
    %c0_65 = arith.constant 0 : index
    %c0_66 = arith.constant 0 : index
    %114 = vector.load %arg17[%c0_64, %c0_65, %c0_66] : memref<1x8x32xf32, #tpu.memory_space<vmem>>, vector<1x8x32xf32>
    %115 = vector.shape_cast %114 : vector<1x8x32xf32> to vector<8x32xf32>
    %116 = vector.shape_cast %113 : vector<8x32xf32> to vector<1x8x32xf32>
    tpu.vector_store %arg17[%c0_64, %c0_65, %c0_66], %116 {strides = array<i32>} : memref<1x8x32xf32, #tpu.memory_space<vmem>>, vector<1x8x32xf32>,
    return
  }
  func.func @transform_0(%arg0: i32, %arg1: i32) -> (i32, i32, i32) {
    %c0_i32 = arith.constant 0 : i32
    %c0_i32_0 = arith.constant 0 : i32
    %c0_i32_1 = arith.constant 0 : i32
    return %arg0, %c0_i32, %c0_i32_0 : i32, i32, i32
  }
  func.func @transform_1(%arg0: i32, %arg1: i32) -> (i32, i32) {
    %c0_i32 = arith.constant 0 : i32
    %c0_i32_0 = arith.constant 0 : i32
    %c0_i32_1 = arith.constant 0 : i32
    return %c0_i32, %c0_i32_0 : i32, i32
  }
  func.func @transform_2(%arg0: i32, %arg1: i32) -> (i32, i32) {
    %c0_i32 = arith.constant 0 : i32
    %c0_i32_0 = arith.constant 0 : i32
    %c0_i32_1 = arith.constant 0 : i32
    return %c0_i32, %c0_i32_0 : i32, i32
  }
  func.func @transform_3(%arg0: i32, %arg1: i32) -> (i32, i32) {
    %c0_i32 = arith.constant 0 : i32
    %c0_i32_0 = arith.constant 0 : i32
    %c0_i32_1 = arith.constant 0 : i32
    return %c0_i32, %c0_i32_0 : i32, i32
  }
  func.func @transform_4(%arg0: i32, %arg1: i32) -> (i32, i32) {
    %c0_i32 = arith.constant 0 : i32
    %c0_i32_0 = arith.constant 0 : i32
    %c0_i32_1 = arith.constant 0 : i32
    return %c0_i32, %c0_i32_0 : i32, i32
  }
  func.func @transform_5(%arg0: i32, %arg1: i32) -> (i32, i32) {
    %c0_i32 = arith.constant 0 : i32
    %c0_i32_0 = arith.constant 0 : i32
    %c0_i32_1 = arith.constant 0 : i32
    return %c0_i32, %c0_i32_0 : i32, i32
  }
  func.func @transform_6(%arg0: i32, %arg1: i32) -> (i32, i32) {
    %c0_i32 = arith.constant 0 : i32
    %c0_i32_0 = arith.constant 0 : i32
    %c0_i32_1 = arith.constant 0 : i32
    return %c0_i32, %c0_i32_0 : i32, i32
  }
  func.func @transform_7(%arg0: i32, %arg1: i32) -> (i32, i32) {
    %c0_i32 = arith.constant 0 : i32
    %c0_i32_0 = arith.constant 0 : i32
    %c0_i32_1 = arith.constant 0 : i32
    return %c0_i32, %c0_i32_0 : i32, i32
  }
  func.func @transform_8(%arg0: i32, %arg1: i32) -> (i32, i32) {
    %c0_i32 = arith.constant 0 : i32
    %c0_i32_0 = arith.constant 0 : i32
    %c0_i32_1 = arith.constant 0 : i32
    return %c0_i32, %c0_i32_0 : i32, i32
  }
  func.func @transform_9(%arg0: i32, %arg1: i32) -> (i32, i32) {
    %c0_i32 = arith.constant 0 : i32
    %c0_i32_0 = arith.constant 0 : i32
    %c0_i32_1 = arith.constant 0 : i32
    return %c0_i32, %c0_i32_0 : i32, i32
  }
  func.func @transform_10(%arg0: i32, %arg1: i32) -> (i32, i32) {
    %c0_i32 = arith.constant 0 : i32
    %c0_i32_0 = arith.constant 0 : i32
    %c0_i32_1 = arith.constant 0 : i32
    return %c0_i32, %c0_i32_0 : i32, i32
  }
  func.func @transform_11(%arg0: i32, %arg1: i32) -> (i32, i32) {
    %c0_i32 = arith.constant 0 : i32
    %c0_i32_0 = arith.constant 0 : i32
    %c0_i32_1 = arith.constant 0 : i32
    return %c0_i32, %c0_i32_0 : i32, i32
  }
  func.func @transform_12(%arg0: i32, %arg1: i32) -> (i32, i32) {
    %c0_i32 = arith.constant 0 : i32
    %c0_i32_0 = arith.constant 0 : i32
    %c0_i32_1 = arith.constant 0 : i32
    return %c0_i32, %c0_i32_0 : i32, i32
  }
  func.func @transform_13(%arg0: i32, %arg1: i32) -> (i32, i32) {
    %c0_i32 = arith.constant 0 : i32
    %c0_i32_0 = arith.constant 0 : i32
    %c0_i32_1 = arith.constant 0 : i32
    return %c0_i32, %c0_i32_0 : i32, i32
  }
  func.func @transform_14(%arg0: i32, %arg1: i32) -> (i32, i32) {
    %c0_i32 = arith.constant 0 : i32
    %c0_i32_0 = arith.constant 0 : i32
    %c0_i32_1 = arith.constant 0 : i32
    return %c0_i32, %c0_i32_0 : i32, i32
  }
  func.func @transform_15(%arg0: i32, %arg1: i32) -> (i32, i32, i32) {
    %c0_i32 = arith.constant 0 : i32
    %c0_i32_0 = arith.constant 0 : i32
    return %arg0, %arg1, %c0_i32 : i32, i32, i32
  }
}

</mosaic_0001>

<llo_original>
// kernel: tpu_custom_call.1
$region0: #{tpu_custom_call.1}
  #allocation0 [shape = 'u32[]', space=smem, size = 0x4, offset = 0x4, fixed_abs, tag = 'smem constant byte address 0x4 - core index']
  #allocation1 [shape = 'u32[144,128]{1,0:T(1,128)}', space=vmem, size = 0x12000, scoped, tag = 'internal scratch']
  #allocation2 [shape = 'bf16[4,8,8]{2,1,0:T(8,128)(2,1)}', space=vmem, size = 0x2000, scoped, tag = 'scratch operand']
  #allocation3 [shape = 'bf16[4,8,8]{2,1,0:T(8,128)(2,1)}', space=vmem, size = 0x2000, scoped, tag = 'scratch operand']
  #allocation4 [shape = 'bf16[4,8,8]{2,1,0:T(8,128)(2,1)}', space=vmem, size = 0x2000, scoped, tag = 'scratch operand']
  #allocation5 [shape = 'f32[4,8,8]{2,1,0:T(8,128)}', space=vmem, size = 0x4000, scoped, tag = 'scratch operand']
  %s0 = inlined_call_operand.vmem [shape: f32[2,8,32], index: 0, kind: input, shape index: {}]
  %s1 = inlined_call_operand.vmem [shape: f32[1,32], index: 1, kind: input, shape index: {}]
  %s2 = inlined_call_operand.vmem [shape: f32[1,32], index: 2, kind: input, shape index: {}]
  %s3 = inlined_call_operand.vmem [shape: bf16[32,32], index: 3, kind: input, shape index: {}]
  %s4 = inlined_call_operand.vmem [shape: f32[1,32], index: 4, kind: input, shape index: {}]
  %s5 = inlined_call_operand.vmem [shape: bf16[32,64], index: 5, kind: input, shape index: {}]
  %s6 = inlined_call_operand.vmem [shape: f32[1,64], index: 6, kind: input, shape index: {}]
  %s7 = inlined_call_operand.vmem [shape: bf16[32,32], index: 7, kind: input, shape index: {}]
  %s8 = inlined_call_operand.vmem [shape: f32[1,32], index: 8, kind: input, shape index: {}]
  %s9 = inlined_call_operand.vmem [shape: f32[1,32], index: 9, kind: input, shape index: {}]
  %s10 = inlined_call_operand.vmem [shape: f32[1,32], index: 10, kind: input, shape index: {}]
  %s11 = inlined_call_operand.vmem [shape: bf16[32,128], index: 11, kind: input, shape index: {}]
  %s12 = inlined_call_operand.vmem [shape: f32[1,128], index: 12, kind: input, shape index: {}]
  %s13 = inlined_call_operand.vmem [shape: bf16[128,32], index: 13, kind: input, shape index: {}]
  %s14 = inlined_call_operand.vmem [shape: f32[1,32], index: 14, kind: input, shape index: {}]
  %s15 = inlined_call_operand.hbm [shape: f32[2,8,32], index: 15, kind: output, shape index: {}]
  %s16 = sld [smem:[#allocation0]]
  $region97: #{tpu_custom_call.1} parent=0
    _
  %s18 = ssub.s32 1, %s16
  %s19 = scalar_select 0, %s18, %s16
  $region1: #{tpu_custom_call.1} parent=0
    #allocation6 [shape = 'u8[8192]{0}', space=vmem, size = 0x2000, scoped, tag = 'output window, operand 0']
    #allocation7 [shape = 's32[2]{0}', space=sflag, size = 0x8, scoped, tag = 'scoped memory for tpu_custom_call.1']
    %20 = vsyncpa [#allocation7], 0
    %s21 = scalar_lea.sflag [#allocation7], 1
    %22 = vsyncpa %s21, 0
    loop: start=0, step=1, limit=4
    $region2: #{tpu_custom_call.1} parent=1 // loop_pre_header
      _
    $region3: #{tpu_custom_call.1} parent=1 // loop_header
      %s24 = sphi 0, %s28
      %p25 = scmp.ge.s32.totalorder %s24, 4
      %s31 = sphi 0, %s43
      %s32 = sphi 0, %s39
      %s33 = sphi 0, %s31
      %s34 = sphi 0, %s32
      %s35 = sphi 0, %s33
      %s36 = sphi 0, %s34
      %s46 = sphi 0, %s48
      %s49 = sphi 0, %s46
      %s50 = sphi 0, %s49
      %s66 = sphi 0, %s50
      %s70 = sphi 0, %s70
      %s72 = sphi 0, %s70
      %s73 = sphi 0, %s72
      %s87 = sphi 0, %s73
      %s91 = sphi 0, %s91
      %s93 = sphi 0, %s91
      %s94 = sphi 0, %s93
      %s108 = sphi 0, %s94
      %s112 = sphi 0, %s112
      %s114 = sphi 0, %s112
      %s115 = sphi 0, %s114
      %s129 = sphi 0, %s115
      %s133 = sphi 0, %s133
      %s135 = sphi 0, %s133
      %s136 = sphi 0, %s135
      %s150 = sphi 0, %s136
      %s154 = sphi 0, %s154
      %s156 = sphi 0, %s154
      %s157 = sphi 0, %s156
      %s171 = sphi 0, %s157
      %s175 = sphi 0, %s175
      %s177 = sphi 0, %s175
      %s178 = sphi 0, %s177
      %s192 = sphi 0, %s178
      %s196 = sphi 0, %s196
      %s198 = sphi 0, %s196
      %s199 = sphi 0, %s198
      %s213 = sphi 0, %s199
      %s217 = sphi 0, %s217
      %s219 = sphi 0, %s217
      %s220 = sphi 0, %s219
      %s234 = sphi 0, %s220
      %s238 = sphi 0, %s238
      %s240 = sphi 0, %s238
      %s241 = sphi 0, %s240
      %s255 = sphi 0, %s241
      %s259 = sphi 0, %s259
      %s261 = sphi 0, %s259
      %s262 = sphi 0, %s261
      %s276 = sphi 0, %s262
      %s280 = sphi 0, %s280
      %s282 = sphi 0, %s280
      %s283 = sphi 0, %s282
      %s297 = sphi 0, %s283
      %s301 = sphi 0, %s301
      %s303 = sphi 0, %s301
      %s304 = sphi 0, %s303
      %s318 = sphi 0, %s304
      %s322 = sphi 0, %s322
      %s324 = sphi 0, %s322
      %s325 = sphi 0, %s324
      %s339 = sphi 0, %s325
      %s343 = sphi 0, %s343
      %s345 = sphi 0, %s343
      %s346 = sphi 0, %s345
      %s360 = sphi 0, %s346
      %s368 = sphi 0, %s370
      %s371 = sphi 0, %s368
      %s372 = sphi 0, %s371
      %s388 = sphi 0, %s372
    $region4: #{tpu_custom_call.1} parent=1 // loop_header_branch
      %27 = sbr.rel (%p25) target = $region8
    $region5: #{tpu_custom_call.1} parent=1 // loop_body
      %s29 = ssub.s32 %s24, 1
      %s30 = ssub.s32 %s24, 2
      %s37 = sadd.s32 1, %s32
      %p38 = scmp.ge.s32.totalorder %s37, 1
      %s39 = scalar_select %p38, 0, %s37
      %s40 = sadd.s32 1, %s31
      %s41 = scalar_select %p38, %s40, %s31
      %p42 = scmp.ge.s32.totalorder %s41, 2
      %s43 = scalar_select %p42, 0, %s41
      %s44 = ssub.s32 %s31, %s43
      %p45 = scmp.eq.s32.totalorder %s44, 0
      %s47 = sadd.s32 %s46, 1
      %s48 = scalar_select %p45, %s46, %s47
      %p51 = pneg %p45
      %p52 = scmp.eq.s32.totalorder %s24, 1
      %p53 = por %p51, %p52
      %p54 = scmp.ne.s32.totalorder %s46, %s49
      %p55 = scmp.eq.s32.totalorder %s24, 0
      %p56 = por %p54, %p55
      %p57 = scmp.ne.s32.totalorder %s46, %s49
      %p58 = scmp.eq.s32.totalorder %s29, 1
      %p59 = por %p57, %p58
      %p60 = scmp.ne.s32.totalorder %s49, %s50
      %p61 = scmp.eq.s32.totalorder %s29, 0
      %p62 = por %p60, %p61
      %p63 = scmp.ne.s32.totalorder %s49, %s50
      %p64 = scmp.eq.s32.totalorder %s30, 1
      %p65 = por %p63, %p64
      %p67 = scmp.ne.s32.totalorder %s50, %s66
      %p68 = scmp.eq.s32.totalorder %s30, 0
      %p69 = por %p67, %p68
      %s71 = sadd.s32 %s70, 1
      %p74 = scmp.eq.s32.totalorder %s24, 1
      %p75 = scmp.ne.s32.totalorder %s70, %s72
      %p76 = scmp.eq.s32.totalorder %s24, 0
      %p77 = por %p75, %p76
      %p78 = scmp.ne.s32.totalorder %s70, %s72
      %p79 = scmp.eq.s32.totalorder %s29, 1
      %p80 = por %p78, %p79
      %p81 = scmp.ne.s32.totalorder %s72, %s73
      %p82 = scmp.eq.s32.totalorder %s29, 0
      %p83 = por %p81, %p82
      %p84 = scmp.ne.s32.totalorder %s72, %s73
      %p85 = scmp.eq.s32.totalorder %s30, 1
      %p86 = por %p84, %p85
      %p88 = scmp.ne.s32.totalorder %s73, %s87
      %p89 = scmp.eq.s32.totalorder %s30, 0
      %p90 = por %p88, %p89
      %s92 = sadd.s32 %s91, 1
      %p95 = scmp.eq.s32.totalorder %s24, 1
      %p96 = scmp.ne.s32.totalorder %s91, %s93
      %p97 = scmp.eq.s32.totalorder %s24, 0
      %p98 = por %p96, %p97
      %p99 = scmp.ne.s32.totalorder %s91, %s93
      %p100 = scmp.eq.s32.totalorder %s29, 1
      %p101 = por %p99, %p100
      %p102 = scmp.ne.s32.totalorder %s93, %s94
      %p103 = scmp.eq.s32.totalorder %s29, 0
      %p104 = por %p102, %p103
      %p105 = scmp.ne.s32.totalorder %s93, %s94
      %p106 = scmp.eq.s32.totalorder %s30, 1
      %p107 = por %p105, %p106
      %p109 = scmp.ne.s32.totalorder %s94, %s108
      %p110 = scmp.eq.s32.totalorder %s30, 0
      %p111 = por %p109, %p110
      %s113 = sadd.s32 %s112, 1
      %p116 = scmp.eq.s32.totalorder %s24, 1
      %p117 = scmp.ne.s32.totalorder %s112, %s114
      %p118 = scmp.eq.s32.totalorder %s24, 0
      %p119 = por %p117, %p118
      %p120 = scmp.ne.s32.totalorder %s112, %s114
      %p121 = scmp.eq.s32.totalorder %s29, 1
      %p122 = por %p120, %p121
      %p123 = scmp.ne.s32.totalorder %s114, %s115
      %p124 = scmp.eq.s32.totalorder %s29, 0
      %p125 = por %p123, %p124
      %p126 = scmp.ne.s32.totalorder %s114, %s115
      %p127 = scmp.eq.s32.totalorder %s30, 1
      %p128 = por %p126, %p127
      %p130 = scmp.ne.s32.totalorder %s115, %s129
      %p131 = scmp.eq.s32.totalorder %s30, 0
      %p132 = por %p130, %p131
      %s134 = sadd.s32 %s133, 1
      %p137 = scmp.eq.s32.totalorder %s24, 1
      %p138 = scmp.ne.s32.totalorder %s133, %s135
      %p139 = scmp.eq.s32.totalorder %s24, 0
      %p140 = por %p138, %p139
      %p141 = scmp.ne.s32.totalorder %s133, %s135
      %p142 = scmp.eq.s32.totalorder %s29, 1
      %p143 = por %p141, %p142
      %p144 = scmp.ne.s32.totalorder %s135, %s136
      %p145 = scmp.eq.s32.totalorder %s29, 0
      %p146 = por %p144, %p145
      %p147 = scmp.ne.s32.totalorder %s135, %s136
      %p148 = scmp.eq.s32.totalorder %s30, 1
      %p149 = por %p147, %p148
      %p151 = scmp.ne.s32.totalorder %s136, %s150
      %p152 = scmp.eq.s32.totalorder %s30, 0
      %p153 = por %p151, %p152
      %s155 = sadd.s32 %s154, 1
      %p158 = scmp.eq.s32.totalorder %s24, 1
      %p159 = scmp.ne.s32.totalorder %s154, %s156
      %p160 = scmp.eq.s32.totalorder %s24, 0
      %p161 = por %p159, %p160
      %p162 = scmp.ne.s32.totalorder %s154, %s156
      %p163 = scmp.eq.s32.totalorder %s29, 1
      %p164 = por %p162, %p163
      %p165 = scmp.ne.s32.totalorder %s156, %s157
      %p166 = scmp.eq.s32.totalorder %s29, 0
      %p167 = por %p165, %p166
      %p168 = scmp.ne.s32.totalorder %s156, %s157
      %p169 = scmp.eq.s32.totalorder %s30, 1
      %p170 = por %p168, %p169
      %p172 = scmp.ne.s32.totalorder %s157, %s171
      %p173 = scmp.eq.s32.totalorder %s30, 0
      %p174 = por %p172, %p173
      %s176 = sadd.s32 %s175, 1
      %p179 = scmp.eq.s32.totalorder %s24, 1
      %p180 = scmp.ne.s32.totalorder %s175, %s177
      %p181 = scmp.eq.s32.totalorder %s24, 0
      %p182 = por %p180, %p181
      %p183 = scmp.ne.s32.totalorder %s175, %s177
      %p184 = scmp.eq.s32.totalorder %s29, 1
      %p185 = por %p183, %p184
      %p186 = scmp.ne.s32.totalorder %s177, %s178
      %p187 = scmp.eq.s32.totalorder %s29, 0
      %p188 = por %p186, %p187
      %p189 = scmp.ne.s32.totalorder %s177, %s178
      %p190 = scmp.eq.s32.totalorder %s30, 1
      %p191 = por %p189, %p190
      %p193 = scmp.ne.s32.totalorder %s178, %s192
      %p194 = scmp.eq.s32.totalorder %s30, 0
      %p195 = por %p193, %p194
      %s197 = sadd.s32 %s196, 1
      %p200 = scmp.eq.s32.totalorder %s24, 1
      %p201 = scmp.ne.s32.totalorder %s196, %s198
      %p202 = scmp.eq.s32.totalorder %s24, 0
      %p203 = por %p201, %p202
      %p204 = scmp.ne.s32.totalorder %s196, %s198
      %p205 = scmp.eq.s32.totalorder %s29, 1
      %p206 = por %p204, %p205
      %p207 = scmp.ne.s32.totalorder %s198, %s199
      %p208 = scmp.eq.s32.totalorder %s29, 0
      %p209 = por %p207, %p208
      %p210 = scmp.ne.s32.totalorder %s198, %s199
      %p211 = scmp.eq.s32.totalorder %s30, 1
      %p212 = por %p210, %p211
      %p214 = scmp.ne.s32.totalorder %s199, %s213
      %p215 = scmp.eq.s32.totalorder %s30, 0
      %p216 = por %p214, %p215
      %s218 = sadd.s32 %s217, 1
      %p221 = scmp.eq.s32.totalorder %s24, 1
      %p222 = scmp.ne.s32.totalorder %s217, %s219
      %p223 = scmp.eq.s32.totalorder %s24, 0
      %p224 = por %p222, %p223
      %p225 = scmp.ne.s32.totalorder %s217, %s219
      %p226 = scmp.eq.s32.totalorder %s29, 1
      %p227 = por %p225, %p226
      %p228 = scmp.ne.s32.totalorder %s219, %s220
      %p229 = scmp.eq.s32.totalorder %s29, 0
      %p230 = por %p228, %p229
      %p231 = scmp.ne.s32.totalorder %s219, %s220
      %p232 = scmp.eq.s32.totalorder %s30, 1
      %p233 = por %p231, %p232
      %p235 = scmp.ne.s32.totalorder %s220, %s234
      %p236 = scmp.eq.s32.totalorder %s30, 0
      %p237 = por %p235, %p236
      %s239 = sadd.s32 %s238, 1
      %p242 = scmp.eq.s32.totalorder %s24, 1
      %p243 = scmp.ne.s32.totalorder %s238, %s240
      %p244 = scmp.eq.s32.totalorder %s24, 0
      %p245 = por %p243, %p244
      %p246 = scmp.ne.s32.totalorder %s238, %s240
      %p247 = scmp.eq.s32.totalorder %s29, 1
      %p248 = por %p246, %p247
      %p249 = scmp.ne.s32.totalorder %s240, %s241
      %p250 = scmp.eq.s32.totalorder %s29, 0
      %p251 = por %p249, %p250
      %p252 = scmp.ne.s32.totalorder %s240, %s241
      %p253 = scmp.eq.s32.totalorder %s30, 1
      %p254 = por %p252, %p253
      %p256 = scmp.ne.s32.totalorder %s241, %s255
      %p257 = scmp.eq.s32.totalorder %s30, 0
      %p258 = por %p256, %p257
      %s260 = sadd.s32 %s259, 1
      %p263 = scmp.eq.s32.totalorder %s24, 1
      %p264 = scmp.ne.s32.totalorder %s259, %s261
      %p265 = scmp.eq.s32.totalorder %s24, 0
      %p266 = por %p264, %p265
      %p267 = scmp.ne.s32.totalorder %s259, %s261
      %p268 = scmp.eq.s32.totalorder %s29, 1
      %p269 = por %p267, %p268
      %p270 = scmp.ne.s32.totalorder %s261, %s262
      %p271 = scmp.eq.s32.totalorder %s29, 0
      %p272 = por %p270, %p271
      %p273 = scmp.ne.s32.totalorder %s261, %s262
      %p274 = scmp.eq.s32.totalorder %s30, 1
      %p275 = por %p273, %p274
      %p277 = scmp.ne.s32.totalorder %s262, %s276
      %p278 = scmp.eq.s32.totalorder %s30, 0
      %p279 = por %p277, %p278
      %s281 = sadd.s32 %s280, 1
      %p284 = scmp.eq.s32.totalorder %s24, 1
      %p285 = scmp.ne.s32.totalorder %s280, %s282
      %p286 = scmp.eq.s32.totalorder %s24, 0
      %p287 = por %p285, %p286
      %p288 = scmp.ne.s32.totalorder %s280, %s282
      %p289 = scmp.eq.s32.totalorder %s29, 1
      %p290 = por %p288, %p289
      %p291 = scmp.ne.s32.totalorder %s282, %s283
      %p292 = scmp.eq.s32.totalorder %s29, 0
      %p293 = por %p291, %p292
      %p294 = scmp.ne.s32.totalorder %s282, %s283
      %p295 = scmp.eq.s32.totalorder %s30, 1
      %p296 = por %p294, %p295
      %p298 = scmp.ne.s32.totalorder %s283, %s297
      %p299 = scmp.eq.s32.totalorder %s30, 0
      %p300 = por %p298, %p299
      %s302 = sadd.s32 %s301, 1
      %p305 = scmp.eq.s32.totalorder %s24, 1
      %p306 = scmp.ne.s32.totalorder %s301, %s303
      %p307 = scmp.eq.s32.totalorder %s24, 0
      %p308 = por %p306, %p307
      %p309 = scmp.ne.s32.totalorder %s301, %s303
      %p310 = scmp.eq.s32.totalorder %s29, 1
      %p311 = por %p309, %p310
      %p312 = scmp.ne.s32.totalorder %s303, %s304
      %p313 = scmp.eq.s32.totalorder %s29, 0
      %p314 = por %p312, %p313
      %p315 = scmp.ne.s32.totalorder %s303, %s304
      %p316 = scmp.eq.s32.totalorder %s30, 1
      %p317 = por %p315, %p316
      %p319 = scmp.ne.s32.totalorder %s304, %s318
      %p320 = scmp.eq.s32.totalorder %s30, 0
      %p321 = por %p319, %p320
      %s323 = sadd.s32 %s322, 1
      %p326 = scmp.eq.s32.totalorder %s24, 1
      %p327 = scmp.ne.s32.totalorder %s322, %s324
      %p328 = scmp.eq.s32.totalorder %s24, 0
      %p329 = por %p327, %p328
      %p330 = scmp.ne.s32.totalorder %s322, %s324
      %p331 = scmp.eq.s32.totalorder %s29, 1
      %p332 = por %p330, %p331
      %p333 = scmp.ne.s32.totalorder %s324, %s325
      %p334 = scmp.eq.s32.totalorder %s29, 0
      %p335 = por %p333, %p334
      %p336 = scmp.ne.s32.totalorder %s324, %s325
      %p337 = scmp.eq.s32.totalorder %s30, 1
      %p338 = por %p336, %p337
      %p340 = scmp.ne.s32.totalorder %s325, %s339
      %p341 = scmp.eq.s32.totalorder %s30, 0
      %p342 = por %p340, %p341
      %s344 = sadd.s32 %s343, 1
      %p347 = scmp.eq.s32.totalorder %s24, 1
      %p348 = scmp.ne.s32.totalorder %s343, %s345
      %p349 = scmp.eq.s32.totalorder %s24, 0
      %p350 = por %p348, %p349
      %p351 = scmp.ne.s32.totalorder %s343, %s345
      %p352 = scmp.eq.s32.totalorder %s29, 1
      %p353 = por %p351, %p352
      %p354 = scmp.ne.s32.totalorder %s345, %s346
      %p355 = scmp.eq.s32.totalorder %s29, 0
      %p356 = por %p354, %p355
      %p357 = scmp.ne.s32.totalorder %s345, %s346
      %p358 = scmp.eq.s32.totalorder %s30, 1
      %p359 = por %p357, %p358
      %p361 = scmp.ne.s32.totalorder %s346, %s360
      %p362 = scmp.eq.s32.totalorder %s30, 0
      %p363 = por %p361, %p362
      %s364 = ssub.s32 %s31, %s43
      %s365 = ssub.s32 %s32, %s39
      %s366 = sor.u32 %s364, %s365
      %p367 = scmp.eq.s32.totalorder %s366, 0
      %s369 = sadd.s32 %s368, 1
      %s370 = scalar_select %p367, %s368, %s369
      %p373 = pneg %p367
      %p374 = scmp.eq.s32.totalorder %s24, 1
      %p375 = por %p373, %p374
      %p376 = scmp.ne.s32.totalorder %s368, %s371
      %p377 = scmp.eq.s32.totalorder %s24, 0
      %p378 = por %p376, %p377
      %p379 = scmp.ne.s32.totalorder %s368, %s371
      %p380 = scmp.eq.s32.totalorder %s29, 1
      %p381 = por %p379, %p380
      %p382 = scmp.ne.s32.totalorder %s371, %s372
      %p383 = scmp.eq.s32.totalorder %s29, 0
      %p384 = por %p382, %p383
      %p385 = scmp.ne.s32.totalorder %s371, %s372
      %p386 = scmp.eq.s32.totalorder %s30, 1
      %p387 = por %p385, %p386
      %p389 = scmp.ne.s32.totalorder %s372, %s388
      %p390 = scmp.eq.s32.totalorder %s30, 0
      %p391 = por %p389, %p390
      %p392 = scmp.le.s32.totalorder 1, %s24
      %p393 = scmp.lt.s32.totalorder %s24, 3
      %p394 = pnand %p392, %p393
      %p395 = pneg %p394
      // Predicated region
      $region9: #{tpu_custom_call.1} parent=5 // pred_check
        _
      $region10: #{tpu_custom_call.1} parent=5 // pred_check_branch
        %397 = sbr.rel (%p394) target = $region12
      $region11: #{tpu_custom_call.1} parent=5 // pred_region
        %s398 = ssub.s32 %s24, 1
        // Predicated region
        $region13: #{tpu_custom_call.1} parent=11 // pred_check
          %p399 = pneg %p83
        $region14: #{tpu_custom_call.1} parent=11 // pred_check_branch
          %401 = sbr.rel (%p399) target = $region16
        $region15: #{tpu_custom_call.1} parent=11 // pred_region
          _
        $region16: #{tpu_custom_call.1} parent=11 // pred_fallthru
          _
        // Predicated region
        $region17: #{tpu_custom_call.1} parent=11 // pred_check
          %p402 = pneg %p104
        $region18: #{tpu_custom_call.1} parent=11 // pred_check_branch
          %404 = sbr.rel (%p402) target = $region20
        $region19: #{tpu_custom_call.1} parent=11 // pred_region
          _
        $region20: #{tpu_custom_call.1} parent=11 // pred_fallthru
          _
        // Predicated region
        $region21: #{tpu_custom_call.1} parent=11 // pred_check
          %p405 = pneg %p125
        $region22: #{tpu_custom_call.1} parent=11 // pred_check_branch
          %407 = sbr.rel (%p405) target = $region24
        $region23: #{tpu_custom_call.1} parent=11 // pred_region
          _
        $region24: #{tpu_custom_call.1} parent=11 // pred_fallthru
          _
        // Predicated region
        $region25: #{tpu_custom_call.1} parent=11 // pred_check
          %p408 = pneg %p146
        $region26: #{tpu_custom_call.1} parent=11 // pred_check_branch
          %410 = sbr.rel (%p408) target = $region28
        $region27: #{tpu_custom_call.1} parent=11 // pred_region
          _
        $region28: #{tpu_custom_call.1} parent=11 // pred_fallthru
          _
        // Predicated region
        $region29: #{tpu_custom_call.1} parent=11 // pred_check
          %p411 = pneg %p167
        $region30: #{tpu_custom_call.1} parent=11 // pred_check_branch
          %413 = sbr.rel (%p411) target = $region32
        $region31: #{tpu_custom_call.1} parent=11 // pred_region
          _
        $region32: #{tpu_custom_call.1} parent=11 // pred_fallthru
          _
        // Predicated region
        $region33: #{tpu_custom_call.1} parent=11 // pred_check
          %p414 = pneg %p188
        $region34: #{tpu_custom_call.1} parent=11 // pred_check_branch
          %416 = sbr.rel (%p414) target = $region36
        $region35: #{tpu_custom_call.1} parent=11 // pred_region
          _
        $region36: #{tpu_custom_call.1} parent=11 // pred_fallthru
          _
        // Predicated region
        $region37: #{tpu_custom_call.1} parent=11 // pred_check
          %p417 = pneg %p209
        $region38: #{tpu_custom_call.1} parent=11 // pred_check_branch
          %419 = sbr.rel (%p417) target = $region40
        $region39: #{tpu_custom_call.1} parent=11 // pred_region
          _
        $region40: #{tpu_custom_call.1} parent=11 // pred_fallthru
          _
        // Predicated region
        $region41: #{tpu_custom_call.1} parent=11 // pred_check
          %p420 = pneg %p230
        $region42: #{tpu_custom_call.1} parent=11 // pred_check_branch
          %422 = sbr.rel (%p420) target = $region44
        $region43: #{tpu_custom_call.1} parent=11 // pred_region
          _
        $region44: #{tpu_custom_call.1} parent=11 // pred_fallthru
          _
        // Predicated region
        $region45: #{tpu_custom_call.1} parent=11 // pred_check
          %p423 = pneg %p251
        $region46: #{tpu_custom_call.1} parent=11 // pred_check_branch
          %425 = sbr.rel (%p423) target = $region48
        $region47: #{tpu_custom_call.1} parent=11 // pred_region
          _
        $region48: #{tpu_custom_call.1} parent=11 // pred_fallthru
          _
        // Predicated region
        $region49: #{tpu_custom_call.1} parent=11 // pred_check
          %p426 = pneg %p272
        $region50: #{tpu_custom_call.1} parent=11 // pred_check_branch
          %428 = sbr.rel (%p426) target = $region52
        $region51: #{tpu_custom_call.1} parent=11 // pred_region
          _
        $region52: #{tpu_custom_call.1} parent=11 // pred_fallthru
          _
        // Predicated region
        $region53: #{tpu_custom_call.1} parent=11 // pred_check
          %p429 = pneg %p293
        $region54: #{tpu_custom_call.1} parent=11 // pred_check_branch
          %431 = sbr.rel (%p429) target = $region56
        $region55: #{tpu_custom_call.1} parent=11 // pred_region
          _
        $region56: #{tpu_custom_call.1} parent=11 // pred_fallthru
          _
        // Predicated region
        $region57: #{tpu_custom_call.1} parent=11 // pred_check
          %p432 = pneg %p314
        $region58: #{tpu_custom_call.1} parent=11 // pred_check_branch
          %434 = sbr.rel (%p432) target = $region60
        $region59: #{tpu_custom_call.1} parent=11 // pred_region
          _
        $region60: #{tpu_custom_call.1} parent=11 // pred_fallthru
          _
        // Predicated region
        $region61: #{tpu_custom_call.1} parent=11 // pred_check
          %p435 = pneg %p335
        $region62: #{tpu_custom_call.1} parent=11 // pred_check_branch
          %437 = sbr.rel (%p435) target = $region64
        $region63: #{tpu_custom_call.1} parent=11 // pred_region
          _
        $region64: #{tpu_custom_call.1} parent=11 // pred_fallthru
          _
        // Predicated region
        $region65: #{tpu_custom_call.1} parent=11 // pred_check
          %p438 = pneg %p356
        $region66: #{tpu_custom_call.1} parent=11 // pred_check_branch
          %440 = sbr.rel (%p438) target = $region68
        $region67: #{tpu_custom_call.1} parent=11 // pred_region
          _
        $region68: #{tpu_custom_call.1} parent=11 // pred_fallthru
          _
      $region12: #{tpu_custom_call.1} parent=5 // pred_fallthru
        _
      %p441 = scmp.lt.s32.totalorder %s24, 2
      // Predicated region
      $region69: #{tpu_custom_call.1} parent=5 // pred_check
        %p442 = pneg %p441
      $region70: #{tpu_custom_call.1} parent=5 // pred_check_branch
        %444 = sbr.rel (%p442) target = $region72
      $region71: #{tpu_custom_call.1} parent=5 // pred_region
        // Predicated region
        $region73: #{tpu_custom_call.1} parent=71 // pred_check
          %p445 = pneg %p56
        $region74: #{tpu_custom_call.1} parent=71 // pred_check_branch
          %447 = sbr.rel (%p445) target = $region76
        $region75: #{tpu_custom_call.1} parent=71 // pred_region
          %p448 = scmp.lt.s32.totalorder %s31, 1
          %s449 = scalar_select %p448, %s31, 1
          %s450 = smul.addr %s449, 8
          %s451 = scalar_lea.vmem %s0, %s450
        $region76: #{tpu_custom_call.1} parent=71 // pred_fallthru
          _
      $region72: #{tpu_custom_call.1} parent=5 // pred_fallthru
        _
      %p452 = scmp.le.s32.totalorder 1, %s24
      %p453 = scmp.lt.s32.totalorder %s24, 3
      %p454 = pnand %p452, %p453
      %p455 = pneg %p454
      // Predicated region
      $region77: #{tpu_custom_call.1} parent=5 // pred_check
        _
      $region78: #{tpu_custom_call.1} parent=5 // pred_check_branch
        %457 = sbr.rel (%p454) target = $region80
      $region79: #{tpu_custom_call.1} parent=5 // pred_region
        %s458 = ssub.s32 %s24, 1
        %p459 = scmp.lt.s32.totalorder %s33, 1
        %s460 = scalar_select %p459, %s33, 1
        %s461 = smul.addr %s460, 8
        %s462 = scalar_lea.vmem %s0, %s461
        %p463 = pneg %p62
        %p464 = pneg %p59
        %p465 = pneg %p83
        %p466 = pneg %p80
        %p467 = pneg %p104
        %p468 = pneg %p101
        %p469 = pneg %p125
        %p470 = pneg %p122
        %p471 = pneg %p146
        %p472 = pneg %p143
        %p473 = pneg %p167
        %p474 = pneg %p164
        %p475 = pneg %p188
        %p476 = pneg %p185
        %p477 = pneg %p209
        %p478 = pneg %p206
        %p479 = pneg %p230
        %p480 = pneg %p227
        %p481 = pneg %p251
        %p482 = pneg %p248
        %p483 = pneg %p272
        %p484 = pneg %p269
        %p485 = pneg %p293
        %p486 = pneg %p290
        %p487 = pneg %p314
        %p488 = pneg %p311
        %p489 = pneg %p335
        %p490 = pneg %p332
        %p491 = pneg %p356
        %p492 = pneg %p353
        %p493 = pneg %p384
        %p494 = pneg %p381
        %s495 = sand.u32 %s371, 1
        %s496 = scalar_lea.sflag [#allocation7], %s495
        %s497 = sand.u32 %s371, 1
        %s498 = smul.addr %s497, 8
        %s499 = scalar_lea.vmem [#allocation6], %s498
        %p500 = scmp.lt.s32.totalorder %s33, 1
        %s501 = scalar_select %p500, %s33, 1
        %s502 = smul.addr %s501, 8
        %s503 = scalar_lea.vmem %s0, %s502
        %p505 = scmp.eq.s32.totalorder %s34, 0
        // Predicated region
        $region81: #{tpu_custom_call.1} parent=79 // pred_check
          %p506 = pneg %p505
        $region82: #{tpu_custom_call.1} parent=79 // pred_check_branch
          %508 = sbr.rel (%p506) target = $region84
        $region83: #{tpu_custom_call.1} parent=79 // pred_region
          %v509 = vld [vmem:[%s503] sm:$0xff]
          %v510 = vld [vmem:[%s1] sm:$0x1]
          %v511 = vld [vmem:[%s2] sm:$0x1]
          %vm512 = vcmask 261120
          %v513 = vsel %vm512, %v509, 0.0
          %514 = vadd.xlane.f32.xlu0 %v513
          %v515 = vpop.xlane.xlu0 %514
          %v516 = vrcp.pop 32.0
          %v517 = vmul.f32 %v515, %v516
          %v518 = vsub.f32 %v509, %v517
          %v519 = vmul.f32 %v518, %v518
          %v520 = vsel %vm512, %v519, 0.0
          %521 = vadd.xlane.f32.xlu0 %v520
          %v522 = vpop.xlane.xlu0 %521
          %v523 = vmul.f32 %v522, %v516
          %v524 = vadd.f32 %v523, 1e-05
          %v525 = vrsqrt.pop %v524
          %v526 = vmul.f32 %v518, %v525
          %v528 = vlaneseq
          %v529 = vshrl.u32 %v528, 7
          %v530 = vsub.s32 0, %v529
          %v531 = vrot.slane %v510, %v530
          %v533 = vmul.f32 %v526, %v531
          %v535 = vlaneseq
          %v536 = vshrl.u32 %v535, 7
          %v537 = vsub.s32 0, %v536
          %v538 = vrot.slane %v511, %v537
          %v540 = vadd.f32 %v533, %v538
          %v541 = vpack.c.bf16 %v540, %v540
          %v542 = vld [vmem:[%s5] sm:$0xf]
          %v543 = vld [vmem:[%s5 + $0x4] sm:$0xf]
          %v544 = vld [vmem:[%s5 + $0x8] sm:$0xf]
          %v545 = vld [vmem:[%s5 + $0xc] sm:$0xf]
          %v546 = vld [vmem:[%s6] sm:$0x1]
          %v548 = vlaneseq
          %v549 = vshrl.u32 %v548, 7
          %v550 = vsub.s32 0, %v549
          %v551 = vrot.slane %v546, %v550
          %v557 = vunpack.c.l.b16 %v542
          %v558 = vunpack.c.l.b16 %v543
          %v559 = vunpack.c.l.b16 %v544
          %v560 = vunpack.c.l.b16 %v545
          %v561 = vpack.c.b16 %v558, %v557
          %v562 = vpack.c.b16 %v560, %v559
          %v566 = vsel %vm512, %v541, 0
          %568 = vmatprep.subr.bf16.mxu0 0
          %569 = vmatpush1.bf16.msra.mxu0 %v561
          %570 = vmatprep.subr.bf16.mxu0 0
          %571 = vmatpush1.bf16.msra.mxu0 %v562
          %572 = vmatprep.subr.bf16.mxu0 0
          %573 = vmatpush1.bf16.msra.mxu0 0
          %574 = vmatprep.subr.bf16.mxu0 0
          %575 = vmatpush1.bf16.msra.mxu0 0
          %576 = vmatprep.subr.bf16.mxu0 0
          %577 = vmatpush1.bf16.msra.mxu0 0
          %578 = vmatprep.subr.bf16.mxu0 0
          %579 = vmatpush1.bf16.msra.mxu0 0
          %580 = vmatprep.subr.bf16.mxu0 0
          %581 = vmatpush1.bf16.msra.mxu0 0
          %582 = vmatprep.subr.bf16.mxu0 0
          %583 = vmatpush1.bf16.msra.mxu0 0
          %584 = vmatprep.subr.bf16.mxu0 0
          %585 = vmatpush1.bf16.msra.mxu0 0
          %586 = vmatprep.subr.bf16.mxu0 0
          %587 = vmatpush1.bf16.msra.mxu0 0
          %588 = vmatprep.subr.bf16.mxu0 0
          %589 = vmatpush1.bf16.msra.mxu0 0
          %590 = vmatprep.subr.bf16.mxu0 0
          %591 = vmatpush1.bf16.msra.mxu0 0
          %592 = vmatprep.subr.bf16.mxu0 0
          %593 = vmatpush1.bf16.msra.mxu0 0
          %594 = vmatprep.subr.bf16.mxu0 0
          %595 = vmatpush1.bf16.msra.mxu0 0
          %596 = vmatprep.subr.bf16.mxu0 0
          %597 = vmatpush1.bf16.msra.mxu0 0
          %598 = vmatprep.subr.bf16.mxu0 0
          %599 = vmatpush1.bf16.msra.mxu0 0
          %600 = vmatprep.mubr.bf16.mxu0 0
          %601 = vmatmul.mubr.bf16.gmra.mrb[0].mxu0 %v566
          %v602 = vpop.f32.mrb[0].mxu0
          %v603 = vadd.f32 %v551, %v602
          %v604 = vpop.f32.mrb[0].mxu0
          %v605 = vpop.f32.mrb[0].mxu0
          %v606 = vpop.f32.mrb[0].mxu0
          %607 = vdwg.mxu0
          %609 = vrot.lane.b32.xlu0 %v603, 120
          %v610 = vpop.permute.xlu0 %609
          %612 = vrot.lane.b32.xlu0 %v603, 112
          %v613 = vpop.permute.xlu0 %612
          %615 = vrot.lane.b32.xlu0 %v603, 104
          %v616 = vpop.permute.xlu0 %615
          %v618 = vcombine.low %v603, %v613
          %v619 = vcombine.high %v603, %v613
          %v621 = vunpack.c.l.s4 1983009808
          %v622 = vunpack.c.0.s8 %v621
          %v623 = vlaneseq
          %v624 = vshrl.u32 %v623, 7
          %v625 = vsub.s32 %v622, %v624
          %v626 = vrot.slane %v618, %v625
          %v628 = vunpack.c.l.s4 1983009808
          %v629 = vunpack.c.0.s8 %v628
          %v630 = vlaneseq
          %v631 = vshrl.u32 %v630, 7
          %v632 = vsub.s32 %v629, %v631
          %v633 = vrot.slane %v619, %v632
          %v634 = vcombine.low %v610, %v616
          %v635 = vcombine.high %v610, %v616
          %v637 = vunpack.c.l.s4 1983009808
          %v638 = vunpack.c.0.s8 %v637
          %v639 = vlaneseq
          %v640 = vshrl.u32 %v639, 7
          %v641 = vsub.s32 %v638, %v640
          %v642 = vrot.slane %v634, %v641
          %v644 = vunpack.c.l.s4 1983009808
          %v645 = vunpack.c.0.s8 %v644
          %v646 = vlaneseq
          %v647 = vshrl.u32 %v646, 7
          %v648 = vsub.s32 %v645, %v647
          %v649 = vrot.slane %v635, %v648
          %v650 = vcombine.low %v626, %v642
          %v651 = vcombine.high %v626, %v642
          %v653 = vunpack.c.l.s4 1934713408
          %v654 = vunpack.c.0.s8 %v653
          %v655 = vlaneseq
          %v656 = vshrl.u32 %v655, 7
          %v657 = vsub.s32 %v654, %v656
          %v658 = vrot.slane %v650, %v657
          %v660 = vunpack.c.l.s4 1934713408
          %v661 = vunpack.c.0.s8 %v660
          %v662 = vlaneseq
          %v663 = vshrl.u32 %v662, 7
          %v664 = vsub.s32 %v661, %v663
          %v665 = vrot.slane %v651, %v664
          %v666 = vcombine.low %v633, %v649
          %v667 = vcombine.high %v633, %v649
          %v669 = vunpack.c.l.s4 1934713408
          %v670 = vunpack.c.0.s8 %v669
          %v671 = vlaneseq
          %v672 = vshrl.u32 %v671, 7
          %v673 = vsub.s32 %v670, %v672
          %v674 = vrot.slane %v666, %v673
          %v676 = vunpack.c.l.s4 1934713408
          %v677 = vunpack.c.0.s8 %v676
          %v678 = vlaneseq
          %v679 = vshrl.u32 %v678, 7
          %v680 = vsub.s32 %v677, %v679
          %v681 = vrot.slane %v667, %v680
          %v682 = vcombine.high %v658, 0.0
          %v683 = vcombine.high %v665, 0.0
          %v684 = vcombine.high %v674, 0.0
          %v685 = vcombine.high %v681, 0.0
          %686 = vrot.lane.b32.xlu0 %v603, 96
          %v687 = vpop.permute.xlu0 %686
          %688 = vrot.lane.b32.xlu0 %v610, 96
          %v689 = vpop.permute.xlu0 %688
          %690 = vrot.lane.b32.xlu0 %v613, 96
          %v691 = vpop.permute.xlu0 %690
          %692 = vrot.lane.b32.xlu0 %v616, 96
          %v693 = vpop.permute.xlu0 %692
          %v698 = vcombine.low %v687, %v691
          %v699 = vcombine.high %v687, %v691
          %v701 = vunpack.c.l.s4 1983009808
          %v702 = vunpack.c.0.s8 %v701
          %v703 = vlaneseq
          %v704 = vshrl.u32 %v703, 7
          %v705 = vsub.s32 %v702, %v704
          %v706 = vrot.slane %v698, %v705
          %v708 = vunpack.c.l.s4 1983009808
          %v709 = vunpack.c.0.s8 %v708
          %v710 = vlaneseq
          %v711 = vshrl.u32 %v710, 7
          %v712 = vsub.s32 %v709, %v711
          %v713 = vrot.slane %v699, %v712
          %v714 = vcombine.low %v689, %v693
          %v715 = vcombine.high %v689, %v693
          %v717 = vunpack.c.l.s4 1983009808
          %v718 = vunpack.c.0.s8 %v717
          %v719 = vlaneseq
          %v720 = vshrl.u32 %v719, 7
          %v721 = vsub.s32 %v718, %v720
          %v722 = vrot.slane %v714, %v721
          %v724 = vunpack.c.l.s4 1983009808
          %v725 = vunpack.c.0.s8 %v724
          %v726 = vlaneseq
          %v727 = vshrl.u32 %v726, 7
          %v728 = vsub.s32 %v725, %v727
          %v729 = vrot.slane %v715, %v728
          %v730 = vcombine.low %v706, %v722
          %v731 = vcombine.high %v706, %v722
          %v733 = vunpack.c.l.s4 1934713408
          %v734 = vunpack.c.0.s8 %v733
          %v735 = vlaneseq
          %v736 = vshrl.u32 %v735, 7
          %v737 = vsub.s32 %v734, %v736
          %v738 = vrot.slane %v730, %v737
          %v740 = vunpack.c.l.s4 1934713408
          %v741 = vunpack.c.0.s8 %v740
          %v742 = vlaneseq
          %v743 = vshrl.u32 %v742, 7
          %v744 = vsub.s32 %v741, %v743
          %v745 = vrot.slane %v731, %v744
          %v746 = vcombine.low %v713, %v729
          %v747 = vcombine.high %v713, %v729
          %v749 = vunpack.c.l.s4 1934713408
          %v750 = vunpack.c.0.s8 %v749
          %v751 = vlaneseq
          %v752 = vshrl.u32 %v751, 7
          %v753 = vsub.s32 %v750, %v752
          %v754 = vrot.slane %v746, %v753
          %v756 = vunpack.c.l.s4 1934713408
          %v757 = vunpack.c.0.s8 %v756
          %v758 = vlaneseq
          %v759 = vshrl.u32 %v758, 7
          %v760 = vsub.s32 %v757, %v759
          %v761 = vrot.slane %v747, %v760
          %v762 = vcombine.high %v738, 0.0
          %v763 = vcombine.high %v745, 0.0
          %v764 = vcombine.high %v754, 0.0
          %v765 = vcombine.high %v761, 0.0
          %766 = vxpose.xlu0.b32.start [1/16] %v658, 128
          %767 = vxpose.xlu0.b32.cont [2/16] 0.0, 128
          %768 = vxpose.xlu0.b32.cont [3/16] 0.0, 128
          %769 = vxpose.xlu0.b32.cont [4/16] 0.0, 128
          %770 = vxpose.xlu0.b32.cont [5/16] 0.0, 128
          %771 = vxpose.xlu0.b32.cont [6/16] 0.0, 128
          %772 = vxpose.xlu0.b32.cont [7/16] 0.0, 128
          %773 = vxpose.xlu0.b32.cont [8/16] 0.0, 128
          %774 = vxpose.xlu0.b32.cont [9/16] 0.0, 128
          %775 = vxpose.xlu0.b32.cont [10/16] 0.0, 128
          %776 = vxpose.xlu0.b32.cont [11/16] 0.0, 128
          %777 = vxpose.xlu0.b32.cont [12/16] 0.0, 128
          %778 = vxpose.xlu0.b32.cont [13/16] 0.0, 128
          %779 = vxpose.xlu0.b32.cont [14/16] 0.0, 128
          %780 = vxpose.xlu0.b32.cont [15/16] 0.0, 128
          %781 = vxpose.xlu0.b32.end [16/16] 0.0, 128
          %v782 = vpop.trf.xlu0
          %v783 = vpop.trf.xlu0
          %v784 = vpop.trf.xlu0
          %v785 = vpop.trf.xlu0
          %v786 = vpop.trf.xlu0
          %v787 = vpop.trf.xlu0
          %v788 = vpop.trf.xlu0
          %v789 = vpop.trf.xlu0
          %v790 = vpop.trf.xlu0
          %v791 = vpop.trf.xlu0
          %v792 = vpop.trf.xlu0
          %v793 = vpop.trf.xlu0
          %v794 = vpop.trf.xlu0
          %v795 = vpop.trf.xlu0
          %v796 = vpop.trf.xlu0
          %v797 = vpop.trf.xlu0
          %798 = vxpose.xlu0.b32.start [1/16] %v682, 128
          %799 = vxpose.xlu0.b32.cont [2/16] 0.0, 128
          %800 = vxpose.xlu0.b32.cont [3/16] 0.0, 128
          %801 = vxpose.xlu0.b32.cont [4/16] 0.0, 128
          %802 = vxpose.xlu0.b32.cont [5/16] 0.0, 128
          %803 = vxpose.xlu0.b32.cont [6/16] 0.0, 128
          %804 = vxpose.xlu0.b32.cont [7/16] 0.0, 128
          %805 = vxpose.xlu0.b32.cont [8/16] 0.0, 128
          %806 = vxpose.xlu0.b32.cont [9/16] 0.0, 128
          %807 = vxpose.xlu0.b32.cont [10/16] 0.0, 128
          %808 = vxpose.xlu0.b32.cont [11/16] 0.0, 128
          %809 = vxpose.xlu0.b32.cont [12/16] 0.0, 128
          %810 = vxpose.xlu0.b32.cont [13/16] 0.0, 128
          %811 = vxpose.xlu0.b32.cont [14/16] 0.0, 128
          %812 = vxpose.xlu0.b32.cont [15/16] 0.0, 128
          %813 = vxpose.xlu0.b32.end [16/16] 0.0, 128
          %v814 = vpop.trf.xlu0
          %v815 = vpop.trf.xlu0
          %v816 = vpop.trf.xlu0
          %v817 = vpop.trf.xlu0
          %v818 = vpop.trf.xlu0
          %v819 = vpop.trf.xlu0
          %v820 = vpop.trf.xlu0
          %v821 = vpop.trf.xlu0
          %v822 = vpop.trf.xlu0
          %v823 = vpop.trf.xlu0
          %v824 = vpop.trf.xlu0
          %v825 = vpop.trf.xlu0
          %v826 = vpop.trf.xlu0
          %v827 = vpop.trf.xlu0
          %v828 = vpop.trf.xlu0
          %v829 = vpop.trf.xlu0
          %830 = vxpose.xlu0.b32.start [1/16] %v665, 128
          %831 = vxpose.xlu0.b32.cont [2/16] 0.0, 128
          %832 = vxpose.xlu0.b32.cont [3/16] 0.0, 128
          %833 = vxpose.xlu0.b32.cont [4/16] 0.0, 128
          %834 = vxpose.xlu0.b32.cont [5/16] 0.0, 128
          %835 = vxpose.xlu0.b32.cont [6/16] 0.0, 128
          %836 = vxpose.xlu0.b32.cont [7/16] 0.0, 128
          %837 = vxpose.xlu0.b32.cont [8/16] 0.0, 128
          %838 = vxpose.xlu0.b32.cont [9/16] 0.0, 128
          %839 = vxpose.xlu0.b32.cont [10/16] 0.0, 128
          %840 = vxpose.xlu0.b32.cont [11/16] 0.0, 128
          %841 = vxpose.xlu0.b32.cont [12/16] 0.0, 128
          %842 = vxpose.xlu0.b32.cont [13/16] 0.0, 128
          %843 = vxpose.xlu0.b32.cont [14/16] 0.0, 128
          %844 = vxpose.xlu0.b32.cont [15/16] 0.0, 128
          %845 = vxpose.xlu0.b32.end [16/16] 0.0, 128
          %v846 = vpop.trf.xlu0
          %v847 = vpop.trf.xlu0
          %v848 = vpop.trf.xlu0
          %v849 = vpop.trf.xlu0
          %v850 = vpop.trf.xlu0
          %v851 = vpop.trf.xlu0
          %v852 = vpop.trf.xlu0
          %v853 = vpop.trf.xlu0
          %v854 = vpop.trf.xlu0
          %v855 = vpop.trf.xlu0
          %v856 = vpop.trf.xlu0
          %v857 = vpop.trf.xlu0
          %v858 = vpop.trf.xlu0
          %v859 = vpop.trf.xlu0
          %v860 = vpop.trf.xlu0
          %v861 = vpop.trf.xlu0
          %862 = vxpose.xlu0.b32.start [1/16] %v683, 128
          %863 = vxpose.xlu0.b32.cont [2/16] 0.0, 128
          %864 = vxpose.xlu0.b32.cont [3/16] 0.0, 128
          %865 = vxpose.xlu0.b32.cont [4/16] 0.0, 128
          %866 = vxpose.xlu0.b32.cont [5/16] 0.0, 128
          %867 = vxpose.xlu0.b32.cont [6/16] 0.0, 128
          %868 = vxpose.xlu0.b32.cont [7/16] 0.0, 128
          %869 = vxpose.xlu0.b32.cont [8/16] 0.0, 128
          %870 = vxpose.xlu0.b32.cont [9/16] 0.0, 128
          %871 = vxpose.xlu0.b32.cont [10/16] 0.0, 128
          %872 = vxpose.xlu0.b32.cont [11/16] 0.0, 128
          %873 = vxpose.xlu0.b32.cont [12/16] 0.0, 128
          %874 = vxpose.xlu0.b32.cont [13/16] 0.0, 128
          %875 = vxpose.xlu0.b32.cont [14/16] 0.0, 128
          %876 = vxpose.xlu0.b32.cont [15/16] 0.0, 128
          %877 = vxpose.xlu0.b32.end [16/16] 0.0, 128
          %v878 = vpop.trf.xlu0
          %v879 = vpop.trf.xlu0
          %v880 = vpop.trf.xlu0
          %v881 = vpop.trf.xlu0
          %v882 = vpop.trf.xlu0
          %v883 = vpop.trf.xlu0
          %v884 = vpop.trf.xlu0
          %v885 = vpop.trf.xlu0
          %v886 = vpop.trf.xlu0
          %v887 = vpop.trf.xlu0
          %v888 = vpop.trf.xlu0
          %v889 = vpop.trf.xlu0
          %v890 = vpop.trf.xlu0
          %v891 = vpop.trf.xlu0
          %v892 = vpop.trf.xlu0
          %v893 = vpop.trf.xlu0
          %894 = vxpose.xlu0.b32.start [1/16] %v674, 128
          %895 = vxpose.xlu0.b32.cont [2/16] 0.0, 128
          %896 = vxpose.xlu0.b32.cont [3/16] 0.0, 128
          %897 = vxpose.xlu0.b32.cont [4/16] 0.0, 128
          %898 = vxpose.xlu0.b32.cont [5/16] 0.0, 128
          %899 = vxpose.xlu0.b32.cont [6/16] 0.0, 128
          %900 = vxpose.xlu0.b32.cont [7/16] 0.0, 128
          %901 = vxpose.xlu0.b32.cont [8/16] 0.0, 128
          %902 = vxpose.xlu0.b32.cont [9/16] 0.0, 128
          %903 = vxpose.xlu0.b32.cont [10/16] 0.0, 128
          %904 = vxpose.xlu0.b32.cont [11/16] 0.0, 128
          %905 = vxpose.xlu0.b32.cont [12/16] 0.0, 128
          %906 = vxpose.xlu0.b32.cont [13/16] 0.0, 128
          %907 = vxpose.xlu0.b32.cont [14/16] 0.0, 128
          %908 = vxpose.xlu0.b32.cont [15/16] 0.0, 128
          %909 = vxpose.xlu0.b32.end [16/16] 0.0, 128
          %v910 = vpop.trf.xlu0
          %v911 = vpop.trf.xlu0
          %v912 = vpop.trf.xlu0
          %v913 = vpop.trf.xlu0
          %v914 = vpop.trf.xlu0
          %v915 = vpop.trf.xlu0
          %v916 = vpop.trf.xlu0
          %v917 = vpop.trf.xlu0
          %v918 = vpop.trf.xlu0
          %v919 = vpop.trf.xlu0
          %v920 = vpop.trf.xlu0
          %v921 = vpop.trf.xlu0
          %v922 = vpop.trf.xlu0
          %v923 = vpop.trf.xlu0
          %v924 = vpop.trf.xlu0
          %v925 = vpop.trf.xlu0
          %926 = vxpose.xlu0.b32.start [1/16] %v684, 128
          %927 = vxpose.xlu0.b32.cont [2/16] 0.0, 128
          %928 = vxpose.xlu0.b32.cont [3/16] 0.0, 128
          %929 = vxpose.xlu0.b32.cont [4/16] 0.0, 128
          %930 = vxpose.xlu0.b32.cont [5/16] 0.0, 128
          %931 = vxpose.xlu0.b32.cont [6/16] 0.0, 128
          %932 = vxpose.xlu0.b32.cont [7/16] 0.0, 128
          %933 = vxpose.xlu0.b32.cont [8/16] 0.0, 128
          %934 = vxpose.xlu0.b32.cont [9/16] 0.0, 128
          %935 = vxpose.xlu0.b32.cont [10/16] 0.0, 128
          %936 = vxpose.xlu0.b32.cont [11/16] 0.0, 128
          %937 = vxpose.xlu0.b32.cont [12/16] 0.0, 128
          %938 = vxpose.xlu0.b32.cont [13/16] 0.0, 128
          %939 = vxpose.xlu0.b32.cont [14/16] 0.0, 128
          %940 = vxpose.xlu0.b32.cont [15/16] 0.0, 128
          %941 = vxpose.xlu0.b32.end [16/16] 0.0, 128
          %v942 = vpop.trf.xlu0
          %v943 = vpop.trf.xlu0
          %v944 = vpop.trf.xlu0
          %v945 = vpop.trf.xlu0
          %v946 = vpop.trf.xlu0
          %v947 = vpop.trf.xlu0
          %v948 = vpop.trf.xlu0
          %v949 = vpop.trf.xlu0
          %v950 = vpop.trf.xlu0
          %v951 = vpop.trf.xlu0
          %v952 = vpop.trf.xlu0
          %v953 = vpop.trf.xlu0
          %v954 = vpop.trf.xlu0
          %v955 = vpop.trf.xlu0
          %v956 = vpop.trf.xlu0
          %v957 = vpop.trf.xlu0
          %958 = vxpose.xlu0.b32.start [1/16] %v681, 128
          %959 = vxpose.xlu0.b32.cont [2/16] 0.0, 128
          %960 = vxpose.xlu0.b32.cont [3/16] 0.0, 128
          %961 = vxpose.xlu0.b32.cont [4/16] 0.0, 128
          %962 = vxpose.xlu0.b32.cont [5/16] 0.0, 128
          %963 = vxpose.xlu0.b32.cont [6/16] 0.0, 128
          %964 = vxpose.xlu0.b32.cont [7/16] 0.0, 128
          %965 = vxpose.xlu0.b32.cont [8/16] 0.0, 128
          %966 = vxpose.xlu0.b32.cont [9/16] 0.0, 128
          %967 = vxpose.xlu0.b32.cont [10/16] 0.0, 128
          %968 = vxpose.xlu0.b32.cont [11/16] 0.0, 128
          %969 = vxpose.xlu0.b32.cont [12/16] 0.0, 128
          %970 = vxpose.xlu0.b32.cont [13/16] 0.0, 128
          %971 = vxpose.xlu0.b32.cont [14/16] 0.0, 128
          %972 = vxpose.xlu0.b32.cont [15/16] 0.0, 128
          %973 = vxpose.xlu0.b32.end [16/16] 0.0, 128
          %v974 = vpop.trf.xlu0
          %v975 = vpop.trf.xlu0
          %v976 = vpop.trf.xlu0
          %v977 = vpop.trf.xlu0
          %v978 = vpop.trf.xlu0
          %v979 = vpop.trf.xlu0
          %v980 = vpop.trf.xlu0
          %v981 = vpop.trf.xlu0
          %v982 = vpop.trf.xlu0
          %v983 = vpop.trf.xlu0
          %v984 = vpop.trf.xlu0
          %v985 = vpop.trf.xlu0
          %v986 = vpop.trf.xlu0
          %v987 = vpop.trf.xlu0
          %v988 = vpop.trf.xlu0
          %v989 = vpop.trf.xlu0
          %990 = vxpose.xlu0.b32.start [1/16] %v685, 128
          %991 = vxpose.xlu0.b32.cont [2/16] 0.0, 128
          %992 = vxpose.xlu0.b32.cont [3/16] 0.0, 128
          %993 = vxpose.xlu0.b32.cont [4/16] 0.0, 128
          %994 = vxpose.xlu0.b32.cont [5/16] 0.0, 128
          %995 = vxpose.xlu0.b32.cont [6/16] 0.0, 128
          %996 = vxpose.xlu0.b32.cont [7/16] 0.0, 128
          %997 = vxpose.xlu0.b32.cont [8/16] 0.0, 128
          %998 = vxpose.xlu0.b32.cont [9/16] 0.0, 128
          %999 = vxpose.xlu0.b32.cont [10/16] 0.0, 128
          %1000 = vxpose.xlu0.b32.cont [11/16] 0.0, 128
          %1001 = vxpose.xlu0.b32.cont [12/16] 0.0, 128
          %1002 = vxpose.xlu0.b32.cont [13/16] 0.0, 128
          %1003 = vxpose.xlu0.b32.cont [14/16] 0.0, 128
          %1004 = vxpose.xlu0.b32.cont [15/16] 0.0, 128
          %1005 = vxpose.xlu0.b32.end [16/16] 0.0, 128
          %v1006 = vpop.trf.xlu0
          %v1007 = vpop.trf.xlu0
          %v1008 = vpop.trf.xlu0
          %v1009 = vpop.trf.xlu0
          %v1010 = vpop.trf.xlu0
          %v1011 = vpop.trf.xlu0
          %v1012 = vpop.trf.xlu0
          %v1013 = vpop.trf.xlu0
          %v1014 = vpop.trf.xlu0
          %v1015 = vpop.trf.xlu0
          %v1016 = vpop.trf.xlu0
          %v1017 = vpop.trf.xlu0
          %v1018 = vpop.trf.xlu0
          %v1019 = vpop.trf.xlu0
          %v1020 = vpop.trf.xlu0
          %v1021 = vpop.trf.xlu0
          %v1022 = vcombine.low %v782, %v846
          %v1023 = vcombine.high %v782, %v846
          %v1025 = vunpack.c.l.s4 1983009808
          %v1026 = vunpack.c.0.s8 %v1025
          %v1027 = vlaneseq
          %v1028 = vshrl.u32 %v1027, 7
          %v1029 = vsub.s32 %v1026, %v1028
          %v1030 = vrot.slane %v1022, %v1029
          %v1032 = vunpack.c.l.s4 1983009808
          %v1033 = vunpack.c.0.s8 %v1032
          %v1034 = vlaneseq
          %v1035 = vshrl.u32 %v1034, 7
          %v1036 = vsub.s32 %v1033, %v1035
          %v1037 = vrot.slane %v1023, %v1036
          %v1038 = vcombine.low %v814, %v878
          %v1039 = vcombine.high %v814, %v878
          %v1041 = vunpack.c.l.s4 1983009808
          %v1042 = vunpack.c.0.s8 %v1041
          %v1043 = vlaneseq
          %v1044 = vshrl.u32 %v1043, 7
          %v1045 = vsub.s32 %v1042, %v1044
          %v1046 = vrot.slane %v1038, %v1045
          %v1048 = vunpack.c.l.s4 1983009808
          %v1049 = vunpack.c.0.s8 %v1048
          %v1050 = vlaneseq
          %v1051 = vshrl.u32 %v1050, 7
          %v1052 = vsub.s32 %v1049, %v1051
          %v1053 = vrot.slane %v1039, %v1052
          %v1054 = vcombine.low %v910, %v974
          %v1055 = vcombine.high %v910, %v974
          %v1057 = vunpack.c.l.s4 1983009808
          %v1058 = vunpack.c.0.s8 %v1057
          %v1059 = vlaneseq
          %v1060 = vshrl.u32 %v1059, 7
          %v1061 = vsub.s32 %v1058, %v1060
          %v1062 = vrot.slane %v1054, %v1061
          %v1064 = vunpack.c.l.s4 1983009808
          %v1065 = vunpack.c.0.s8 %v1064
          %v1066 = vlaneseq
          %v1067 = vshrl.u32 %v1066, 7
          %v1068 = vsub.s32 %v1065, %v1067
          %v1069 = vrot.slane %v1055, %v1068
          %v1070 = vcombine.low %v942, %v1006
          %v1071 = vcombine.high %v942, %v1006
          %v1073 = vunpack.c.l.s4 1983009808
          %v1074 = vunpack.c.0.s8 %v1073
          %v1075 = vlaneseq
          %v1076 = vshrl.u32 %v1075, 7
          %v1077 = vsub.s32 %v1074, %v1076
          %v1078 = vrot.slane %v1070, %v1077
          %v1080 = vunpack.c.l.s4 1983009808
          %v1081 = vunpack.c.0.s8 %v1080
          %v1082 = vlaneseq
          %v1083 = vshrl.u32 %v1082, 7
          %v1084 = vsub.s32 %v1081, %v1083
          %v1085 = vrot.slane %v1071, %v1084
          %v1086 = vcombine.low %v1030, %v1046
          %v1087 = vcombine.high %v1030, %v1046
          %v1089 = vunpack.c.l.s4 1934713408
          %v1090 = vunpack.c.0.s8 %v1089
          %v1091 = vlaneseq
          %v1092 = vshrl.u32 %v1091, 7
          %v1093 = vsub.s32 %v1090, %v1092
          %v1094 = vrot.slane %v1086, %v1093
          %v1096 = vunpack.c.l.s4 1934713408
          %v1097 = vunpack.c.0.s8 %v1096
          %v1098 = vlaneseq
          %v1099 = vshrl.u32 %v1098, 7
          %v1100 = vsub.s32 %v1097, %v1099
          %v1101 = vrot.slane %v1087, %v1100
          %v1102 = vcombine.low %v1037, %v1053
          %v1103 = vcombine.high %v1037, %v1053
          %v1105 = vunpack.c.l.s4 1934713408
          %v1106 = vunpack.c.0.s8 %v1105
          %v1107 = vlaneseq
          %v1108 = vshrl.u32 %v1107, 7
          %v1109 = vsub.s32 %v1106, %v1108
          %v1110 = vrot.slane %v1102, %v1109
          %v1112 = vunpack.c.l.s4 1934713408
          %v1113 = vunpack.c.0.s8 %v1112
          %v1114 = vlaneseq
          %v1115 = vshrl.u32 %v1114, 7
          %v1116 = vsub.s32 %v1113, %v1115
          %v1117 = vrot.slane %v1103, %v1116
          %v1118 = vcombine.low %v1062, %v1078
          %v1119 = vcombine.high %v1062, %v1078
          %v1121 = vunpack.c.l.s4 1934713408
          %v1122 = vunpack.c.0.s8 %v1121
          %v1123 = vlaneseq
          %v1124 = vshrl.u32 %v1123, 7
          %v1125 = vsub.s32 %v1122, %v1124
          %v1126 = vrot.slane %v1118, %v1125
          %v1128 = vunpack.c.l.s4 1934713408
          %v1129 = vunpack.c.0.s8 %v1128
          %v1130 = vlaneseq
          %v1131 = vshrl.u32 %v1130, 7
          %v1132 = vsub.s32 %v1129, %v1131
          %v1133 = vrot.slane %v1119, %v1132
          %v1134 = vcombine.low %v1069, %v1085
          %v1135 = vcombine.high %v1069, %v1085
          %v1137 = vunpack.c.l.s4 1934713408
          %v1138 = vunpack.c.0.s8 %v1137
          %v1139 = vlaneseq
          %v1140 = vshrl.u32 %v1139, 7
          %v1141 = vsub.s32 %v1138, %v1140
          %v1142 = vrot.slane %v1134, %v1141
          %v1144 = vunpack.c.l.s4 1934713408
          %v1145 = vunpack.c.0.s8 %v1144
          %v1146 = vlaneseq
          %v1147 = vshrl.u32 %v1146, 7
          %v1148 = vsub.s32 %v1145, %v1147
          %v1149 = vrot.slane %v1135, %v1148
          %v1150 = vcombine.low %v1094, %v1126
          %v1151 = vcombine.high %v1094, %v1126
          %v1152 = vcombine.low %v1101, %v1133
          %v1153 = vcombine.high %v1101, %v1133
          %v1154 = vcombine.low %v1110, %v1142
          %v1155 = vcombine.high %v1110, %v1142
          %v1156 = vcombine.low %v1117, %v1149
          %v1157 = vcombine.high %v1117, %v1149
          %1158 = vxpose.xlu0.b32.start [1/16] %v1150, 128
          %1159 = vxpose.xlu0.b32.cont [2/16] 0.0, 128
          %1160 = vxpose.xlu0.b32.cont [3/16] 0.0, 128
          %1161 = vxpose.xlu0.b32.cont [4/16] 0.0, 128
          %1162 = vxpose.xlu0.b32.cont [5/16] 0.0, 128
          %1163 = vxpose.xlu0.b32.cont [6/16] 0.0, 128
          %1164 = vxpose.xlu0.b32.cont [7/16] 0.0, 128
          %1165 = vxpose.xlu0.b32.cont [8/16] 0.0, 128
          %1166 = vxpose.xlu0.b32.cont [9/16] 0.0, 128
          %1167 = vxpose.xlu0.b32.cont [10/16] 0.0, 128
          %1168 = vxpose.xlu0.b32.cont [11/16] 0.0, 128
          %1169 = vxpose.xlu0.b32.cont [12/16] 0.0, 128
          %1170 = vxpose.xlu0.b32.cont [13/16] 0.0, 128
          %1171 = vxpose.xlu0.b32.cont [14/16] 0.0, 128
          %1172 = vxpose.xlu0.b32.cont [15/16] 0.0, 128
          %1173 = vxpose.xlu0.b32.end [16/16] 0.0, 128
          %v1174 = vpop.trf.xlu0
          %v1175 = vpop.trf.xlu0
          %v1176 = vpop.trf.xlu0
          %v1177 = vpop.trf.xlu0
          %v1178 = vpop.trf.xlu0
          %v1179 = vpop.trf.xlu0
          %v1180 = vpop.trf.xlu0
          %v1181 = vpop.trf.xlu0
          %v1182 = vpop.trf.xlu0
          %v1183 = vpop.trf.xlu0
          %v1184 = vpop.trf.xlu0
          %v1185 = vpop.trf.xlu0
          %v1186 = vpop.trf.xlu0
          %v1187 = vpop.trf.xlu0
          %v1188 = vpop.trf.xlu0
          %v1189 = vpop.trf.xlu0
          %1190 = vxpose.xlu0.b32.start [1/16] %v1151, 128
          %1191 = vxpose.xlu0.b32.cont [2/16] 0.0, 128
          %1192 = vxpose.xlu0.b32.cont [3/16] 0.0, 128
          %1193 = vxpose.xlu0.b32.cont [4/16] 0.0, 128
          %1194 = vxpose.xlu0.b32.cont [5/16] 0.0, 128
          %1195 = vxpose.xlu0.b32.cont [6/16] 0.0, 128
          %1196 = vxpose.xlu0.b32.cont [7/16] 0.0, 128
          %1197 = vxpose.xlu0.b32.cont [8/16] 0.0, 128
          %1198 = vxpose.xlu0.b32.cont [9/16] 0.0, 128
          %1199 = vxpose.xlu0.b32.cont [10/16] 0.0, 128
          %1200 = vxpose.xlu0.b32.cont [11/16] 0.0, 128
          %1201 = vxpose.xlu0.b32.cont [12/16] 0.0, 128
          %1202 = vxpose.xlu0.b32.cont [13/16] 0.0, 128
          %1203 = vxpose.xlu0.b32.cont [14/16] 0.0, 128
          %1204 = vxpose.xlu0.b32.cont [15/16] 0.0, 128
          %1205 = vxpose.xlu0.b32.end [16/16] 0.0, 128
          %v1206 = vpop.trf.xlu0
          %v1207 = vpop.trf.xlu0
          %v1208 = vpop.trf.xlu0
          %v1209 = vpop.trf.xlu0
          %v1210 = vpop.trf.xlu0
          %v1211 = vpop.trf.xlu0
          %v1212 = vpop.trf.xlu0
          %v1213 = vpop.trf.xlu0
          %v1214 = vpop.trf.xlu0
          %v1215 = vpop.trf.xlu0
          %v1216 = vpop.trf.xlu0
          %v1217 = vpop.trf.xlu0
          %v1218 = vpop.trf.xlu0
          %v1219 = vpop.trf.xlu0
          %v1220 = vpop.trf.xlu0
          %v1221 = vpop.trf.xlu0
          %1222 = vxpose.xlu0.b32.start [1/16] %v1152, 128
          %1223 = vxpose.xlu0.b32.cont [2/16] 0.0, 128
          %1224 = vxpose.xlu0.b32.cont [3/16] 0.0, 128
          %1225 = vxpose.xlu0.b32.cont [4/16] 0.0, 128
          %1226 = vxpose.xlu0.b32.cont [5/16] 0.0, 128
          %1227 = vxpose.xlu0.b32.cont [6/16] 0.0, 128
          %1228 = vxpose.xlu0.b32.cont [7/16] 0.0, 128
          %1229 = vxpose.xlu0.b32.cont [8/16] 0.0, 128
          %1230 = vxpose.xlu0.b32.cont [9/16] 0.0, 128
          %1231 = vxpose.xlu0.b32.cont [10/16] 0.0, 128
          %1232 = vxpose.xlu0.b32.cont [11/16] 0.0, 128
          %1233 = vxpose.xlu0.b32.cont [12/16] 0.0, 128
          %1234 = vxpose.xlu0.b32.cont [13/16] 0.0, 128
          %1235 = vxpose.xlu0.b32.cont [14/16] 0.0, 128
          %1236 = vxpose.xlu0.b32.cont [15/16] 0.0, 128
          %1237 = vxpose.xlu0.b32.end [16/16] 0.0, 128
          %v1238 = vpop.trf.xlu0
          %v1239 = vpop.trf.xlu0
          %v1240 = vpop.trf.xlu0
          %v1241 = vpop.trf.xlu0
          %v1242 = vpop.trf.xlu0
          %v1243 = vpop.trf.xlu0
          %v1244 = vpop.trf.xlu0
          %v1245 = vpop.trf.xlu0
          %v1246 = vpop.trf.xlu0
          %v1247 = vpop.trf.xlu0
          %v1248 = vpop.trf.xlu0
          %v1249 = vpop.trf.xlu0
          %v1250 = vpop.trf.xlu0
          %v1251 = vpop.trf.xlu0
          %v1252 = vpop.trf.xlu0
          %v1253 = vpop.trf.xlu0
          %1254 = vxpose.xlu0.b32.start [1/16] %v1153, 128
          %1255 = vxpose.xlu0.b32.cont [2/16] 0.0, 128
          %1256 = vxpose.xlu0.b32.cont [3/16] 0.0, 128
          %1257 = vxpose.xlu0.b32.cont [4/16] 0.0, 128
          %1258 = vxpose.xlu0.b32.cont [5/16] 0.0, 128
          %1259 = vxpose.xlu0.b32.cont [6/16] 0.0, 128
          %1260 = vxpose.xlu0.b32.cont [7/16] 0.0, 128
          %1261 = vxpose.xlu0.b32.cont [8/16] 0.0, 128
          %1262 = vxpose.xlu0.b32.cont [9/16] 0.0, 128
          %1263 = vxpose.xlu0.b32.cont [10/16] 0.0, 128
          %1264 = vxpose.xlu0.b32.cont [11/16] 0.0, 128
          %1265 = vxpose.xlu0.b32.cont [12/16] 0.0, 128
          %1266 = vxpose.xlu0.b32.cont [13/16] 0.0, 128
          %1267 = vxpose.xlu0.b32.cont [14/16] 0.0, 128
          %1268 = vxpose.xlu0.b32.cont [15/16] 0.0, 128
          %1269 = vxpose.xlu0.b32.end [16/16] 0.0, 128
          %v1270 = vpop.trf.xlu0
          %v1271 = vpop.trf.xlu0
          %v1272 = vpop.trf.xlu0
          %v1273 = vpop.trf.xlu0
          %v1274 = vpop.trf.xlu0
          %v1275 = vpop.trf.xlu0
          %v1276 = vpop.trf.xlu0
          %v1277 = vpop.trf.xlu0
          %v1278 = vpop.trf.xlu0
          %v1279 = vpop.trf.xlu0
          %v1280 = vpop.trf.xlu0
          %v1281 = vpop.trf.xlu0
          %v1282 = vpop.trf.xlu0
          %v1283 = vpop.trf.xlu0
          %v1284 = vpop.trf.xlu0
          %v1285 = vpop.trf.xlu0
          %1286 = vxpose.xlu0.b32.start [1/16] %v1154, 128
          %1287 = vxpose.xlu0.b32.cont [2/16] 0.0, 128
          %1288 = vxpose.xlu0.b32.cont [3/16] 0.0, 128
          %1289 = vxpose.xlu0.b32.cont [4/16] 0.0, 128
          %1290 = vxpose.xlu0.b32.cont [5/16] 0.0, 128
          %1291 = vxpose.xlu0.b32.cont [6/16] 0.0, 128
          %1292 = vxpose.xlu0.b32.cont [7/16] 0.0, 128
          %1293 = vxpose.xlu0.b32.cont [8/16] 0.0, 128
          %1294 = vxpose.xlu0.b32.cont [9/16] 0.0, 128
          %1295 = vxpose.xlu0.b32.cont [10/16] 0.0, 128
          %1296 = vxpose.xlu0.b32.cont [11/16] 0.0, 128
          %1297 = vxpose.xlu0.b32.cont [12/16] 0.0, 128
          %1298 = vxpose.xlu0.b32.cont [13/16] 0.0, 128
          %1299 = vxpose.xlu0.b32.cont [14/16] 0.0, 128
          %1300 = vxpose.xlu0.b32.cont [15/16] 0.0, 128
          %1301 = vxpose.xlu0.b32.end [16/16] 0.0, 128
          %v1302 = vpop.trf.xlu0
          %v1303 = vpop.trf.xlu0
          %v1304 = vpop.trf.xlu0
          %v1305 = vpop.trf.xlu0
          %v1306 = vpop.trf.xlu0
          %v1307 = vpop.trf.xlu0
          %v1308 = vpop.trf.xlu0
          %v1309 = vpop.trf.xlu0
          %v1310 = vpop.trf.xlu0
          %v1311 = vpop.trf.xlu0
          %v1312 = vpop.trf.xlu0
          %v1313 = vpop.trf.xlu0
          %v1314 = vpop.trf.xlu0
          %v1315 = vpop.trf.xlu0
          %v1316 = vpop.trf.xlu0
          %v1317 = vpop.trf.xlu0
          %1318 = vxpose.xlu0.b32.start [1/16] %v1155, 128
          %1319 = vxpose.xlu0.b32.cont [2/16] 0.0, 128
          %1320 = vxpose.xlu0.b32.cont [3/16] 0.0, 128
          %1321 = vxpose.xlu0.b32.cont [4/16] 0.0, 128
          %1322 = vxpose.xlu0.b32.cont [5/16] 0.0, 128
          %1323 = vxpose.xlu0.b32.cont [6/16] 0.0, 128
          %1324 = vxpose.xlu0.b32.cont [7/16] 0.0, 128
          %1325 = vxpose.xlu0.b32.cont [8/16] 0.0, 128
          %1326 = vxpose.xlu0.b32.cont [9/16] 0.0, 128
          %1327 = vxpose.xlu0.b32.cont [10/16] 0.0, 128
          %1328 = vxpose.xlu0.b32.cont [11/16] 0.0, 128
          %1329 = vxpose.xlu0.b32.cont [12/16] 0.0, 128
          %1330 = vxpose.xlu0.b32.cont [13/16] 0.0, 128
          %1331 = vxpose.xlu0.b32.cont [14/16] 0.0, 128
          %1332 = vxpose.xlu0.b32.cont [15/16] 0.0, 128
          %1333 = vxpose.xlu0.b32.end [16/16] 0.0, 128
          %v1334 = vpop.trf.xlu0
          %v1335 = vpop.trf.xlu0
          %v1336 = vpop.trf.xlu0
          %v1337 = vpop.trf.xlu0
          %v1338 = vpop.trf.xlu0
          %v1339 = vpop.trf.xlu0
          %v1340 = vpop.trf.xlu0
          %v1341 = vpop.trf.xlu0
          %v1342 = vpop.trf.xlu0
          %v1343 = vpop.trf.xlu0
          %v1344 = vpop.trf.xlu0
          %v1345 = vpop.trf.xlu0
          %v1346 = vpop.trf.xlu0
          %v1347 = vpop.trf.xlu0
          %v1348 = vpop.trf.xlu0
          %v1349 = vpop.trf.xlu0
          %1350 = vxpose.xlu0.b32.start [1/16] %v1156, 128
          %1351 = vxpose.xlu0.b32.cont [2/16] 0.0, 128
          %1352 = vxpose.xlu0.b32.cont [3/16] 0.0, 128
          %1353 = vxpose.xlu0.b32.cont [4/16] 0.0, 128
          %1354 = vxpose.xlu0.b32.cont [5/16] 0.0, 128
          %1355 = vxpose.xlu0.b32.cont [6/16] 0.0, 128
          %1356 = vxpose.xlu0.b32.cont [7/16] 0.0, 128
          %1357 = vxpose.xlu0.b32.cont [8/16] 0.0, 128
          %1358 = vxpose.xlu0.b32.cont [9/16] 0.0, 128
          %1359 = vxpose.xlu0.b32.cont [10/16] 0.0, 128
          %1360 = vxpose.xlu0.b32.cont [11/16] 0.0, 128
          %1361 = vxpose.xlu0.b32.cont [12/16] 0.0, 128
          %1362 = vxpose.xlu0.b32.cont [13/16] 0.0, 128
          %1363 = vxpose.xlu0.b32.cont [14/16] 0.0, 128
          %1364 = vxpose.xlu0.b32.cont [15/16] 0.0, 128
          %1365 = vxpose.xlu0.b32.end [16/16] 0.0, 128
          %v1366 = vpop.trf.xlu0
          %v1367 = vpop.trf.xlu0
          %v1368 = vpop.trf.xlu0
          %v1369 = vpop.trf.xlu0
          %v1370 = vpop.trf.xlu0
          %v1371 = vpop.trf.xlu0
          %v1372 = vpop.trf.xlu0
          %v1373 = vpop.trf.xlu0
          %v1374 = vpop.trf.xlu0
          %v1375 = vpop.trf.xlu0
          %v1376 = vpop.trf.xlu0
          %v1377 = vpop.trf.xlu0
          %v1378 = vpop.trf.xlu0
          %v1379 = vpop.trf.xlu0
          %v1380 = vpop.trf.xlu0
          %v1381 = vpop.trf.xlu0
          %1382 = vxpose.xlu0.b32.start [1/16] %v1157, 128
          %1383 = vxpose.xlu0.b32.cont [2/16] 0.0, 128
          %1384 = vxpose.xlu0.b32.cont [3/16] 0.0, 128
          %1385 = vxpose.xlu0.b32.cont [4/16] 0.0, 128
          %1386 = vxpose.xlu0.b32.cont [5/16] 0.0, 128
          %1387 = vxpose.xlu0.b32.cont [6/16] 0.0, 128
          %1388 = vxpose.xlu0.b32.cont [7/16] 0.0, 128
          %1389 = vxpose.xlu0.b32.cont [8/16] 0.0, 128
          %1390 = vxpose.xlu0.b32.cont [9/16] 0.0, 128
          %1391 = vxpose.xlu0.b32.cont [10/16] 0.0, 128
          %1392 = vxpose.xlu0.b32.cont [11/16] 0.0, 128
          %1393 = vxpose.xlu0.b32.cont [12/16] 0.0, 128
          %1394 = vxpose.xlu0.b32.cont [13/16] 0.0, 128
          %1395 = vxpose.xlu0.b32.cont [14/16] 0.0, 128
          %1396 = vxpose.xlu0.b32.cont [15/16] 0.0, 128
          %1397 = vxpose.xlu0.b32.end [16/16] 0.0, 128
          %v1398 = vpop.trf.xlu0
          %v1399 = vpop.trf.xlu0
          %v1400 = vpop.trf.xlu0
          %v1401 = vpop.trf.xlu0
          %v1402 = vpop.trf.xlu0
          %v1403 = vpop.trf.xlu0
          %v1404 = vpop.trf.xlu0
          %v1405 = vpop.trf.xlu0
          %v1406 = vpop.trf.xlu0
          %v1407 = vpop.trf.xlu0
          %v1408 = vpop.trf.xlu0
          %v1409 = vpop.trf.xlu0
          %v1410 = vpop.trf.xlu0
          %v1411 = vpop.trf.xlu0
          %v1412 = vpop.trf.xlu0
          %v1413 = vpop.trf.xlu0
          %v1414 = vcombine.low %v1174, %v1238
          %v1416 = vunpack.c.l.s4 1983009808
          %v1417 = vunpack.c.0.s8 %v1416
          %v1418 = vlaneseq
          %v1419 = vshrl.u32 %v1418, 7
          %v1420 = vsub.s32 %v1417, %v1419
          %v1421 = vrot.slane %v1414, %v1420
          %v1422 = vcombine.low %v1206, %v1270
          %v1424 = vunpack.c.l.s4 1983009808
          %v1425 = vunpack.c.0.s8 %v1424
          %v1426 = vlaneseq
          %v1427 = vshrl.u32 %v1426, 7
          %v1428 = vsub.s32 %v1425, %v1427
          %v1429 = vrot.slane %v1422, %v1428
          %v1430 = vcombine.low %v1302, %v1366
          %v1432 = vunpack.c.l.s4 1983009808
          %v1433 = vunpack.c.0.s8 %v1432
          %v1434 = vlaneseq
          %v1435 = vshrl.u32 %v1434, 7
          %v1436 = vsub.s32 %v1433, %v1435
          %v1437 = vrot.slane %v1430, %v1436
          %v1438 = vcombine.low %v1334, %v1398
          %v1440 = vunpack.c.l.s4 1983009808
          %v1441 = vunpack.c.0.s8 %v1440
          %v1442 = vlaneseq
          %v1443 = vshrl.u32 %v1442, 7
          %v1444 = vsub.s32 %v1441, %v1443
          %v1445 = vrot.slane %v1438, %v1444
          %v1446 = vcombine.low %v1421, %v1429
          %v1447 = vcombine.high %v1421, %v1429
          %v1449 = vunpack.c.l.s4 1934713408
          %v1450 = vunpack.c.0.s8 %v1449
          %v1451 = vlaneseq
          %v1452 = vshrl.u32 %v1451, 7
          %v1453 = vsub.s32 %v1450, %v1452
          %v1454 = vrot.slane %v1446, %v1453
          %v1456 = vunpack.c.l.s4 1934713408
          %v1457 = vunpack.c.0.s8 %v1456
          %v1458 = vlaneseq
          %v1459 = vshrl.u32 %v1458, 7
          %v1460 = vsub.s32 %v1457, %v1459
          %v1461 = vrot.slane %v1447, %v1460
          %v1462 = vcombine.low %v1437, %v1445
          %v1463 = vcombine.high %v1437, %v1445
          %v1465 = vunpack.c.l.s4 1934713408
          %v1466 = vunpack.c.0.s8 %v1465
          %v1467 = vlaneseq
          %v1468 = vshrl.u32 %v1467, 7
          %v1469 = vsub.s32 %v1466, %v1468
          %v1470 = vrot.slane %v1462, %v1469
          %v1472 = vunpack.c.l.s4 1934713408
          %v1473 = vunpack.c.0.s8 %v1472
          %v1474 = vlaneseq
          %v1475 = vshrl.u32 %v1474, 7
          %v1476 = vsub.s32 %v1473, %v1475
          %v1477 = vrot.slane %v1463, %v1476
          %v1478 = vcombine.low %v1454, %v1470
          %v1479 = vcombine.high %v1454, %v1470
          %v1480 = vcombine.low %v1461, %v1477
          %v1481 = vcombine.high %v1461, %v1477
          %v1482 = vpack.c.bf16 %v1478, %v1478
          %v1483 = vpack.c.bf16 %v1479, %v1479
          %v1484 = vpack.c.bf16 %v1480, %v1480
          %v1485 = vpack.c.bf16 %v1481, %v1481
          %vm1486 = vcmask 60416
          %1487 = vst.msk [vmem:[#allocation2] sm:$0xf] %vm1486, %v1482
          %1488 = vst.msk [vmem:[#allocation2 + $0x4] sm:$0xf] %vm1486, %v1483
          %1489 = vst.msk [vmem:[#allocation2 + $0x8] sm:$0xf] %vm1486, %v1484
          %1490 = vst.msk [vmem:[#allocation2 + $0xc] sm:$0xf] %vm1486, %v1485
          %v1491 = vcombine.low %v738, %v745
          %v1493 = vunpack.c.l.s4 1983009808
          %v1494 = vunpack.c.0.s8 %v1493
          %v1495 = vlaneseq
          %v1496 = vshrl.u32 %v1495, 7
          %v1497 = vsub.s32 %v1494, %v1496
          %v1498 = vrot.slane %v1491, %v1497
          %v1499 = vcombine.low %v762, %v763
          %v1501 = vunpack.c.l.s4 1983009808
          %v1502 = vunpack.c.0.s8 %v1501
          %v1503 = vlaneseq
          %v1504 = vshrl.u32 %v1503, 7
          %v1505 = vsub.s32 %v1502, %v1504
          %v1506 = vrot.slane %v1499, %v1505
          %v1507 = vcombine.low %v754, %v761
          %v1509 = vunpack.c.l.s4 1983009808
          %v1510 = vunpack.c.0.s8 %v1509
          %v1511 = vlaneseq
          %v1512 = vshrl.u32 %v1511, 7
          %v1513 = vsub.s32 %v1510, %v1512
          %v1514 = vrot.slane %v1507, %v1513
          %v1515 = vcombine.low %v764, %v765
          %v1517 = vunpack.c.l.s4 1983009808
          %v1518 = vunpack.c.0.s8 %v1517
          %v1519 = vlaneseq
          %v1520 = vshrl.u32 %v1519, 7
          %v1521 = vsub.s32 %v1518, %v1520
          %v1522 = vrot.slane %v1515, %v1521
          %v1523 = vcombine.low %v1498, %v1506
          %v1524 = vcombine.high %v1498, %v1506
          %v1526 = vunpack.c.l.s4 1934713408
          %v1527 = vunpack.c.0.s8 %v1526
          %v1528 = vlaneseq
          %v1529 = vshrl.u32 %v1528, 7
          %v1530 = vsub.s32 %v1527, %v1529
          %v1531 = vrot.slane %v1523, %v1530
          %v1533 = vunpack.c.l.s4 1934713408
          %v1534 = vunpack.c.0.s8 %v1533
          %v1535 = vlaneseq
          %v1536 = vshrl.u32 %v1535, 7
          %v1537 = vsub.s32 %v1534, %v1536
          %v1538 = vrot.slane %v1524, %v1537
          %v1539 = vcombine.low %v1514, %v1522
          %v1540 = vcombine.high %v1514, %v1522
          %v1542 = vunpack.c.l.s4 1934713408
          %v1543 = vunpack.c.0.s8 %v1542
          %v1544 = vlaneseq
          %v1545 = vshrl.u32 %v1544, 7
          %v1546 = vsub.s32 %v1543, %v1545
          %v1547 = vrot.slane %v1539, %v1546
          %v1549 = vunpack.c.l.s4 1934713408
          %v1550 = vunpack.c.0.s8 %v1549
          %v1551 = vlaneseq
          %v1552 = vshrl.u32 %v1551, 7
          %v1553 = vsub.s32 %v1550, %v1552
          %v1554 = vrot.slane %v1540, %v1553
          %v1555 = vcombine.low %v1531, %v1547
          %v1556 = vcombine.high %v1531, %v1547
          %v1557 = vcombine.low %v1538, %v1554
          %v1558 = vcombine.high %v1538, %v1554
          %v1559 = vpack.c.bf16 %v1555, %v1555
          %v1560 = vpack.c.bf16 %v1556, %v1556
          %v1561 = vpack.c.bf16 %v1557, %v1557
          %v1562 = vpack.c.bf16 %v1558, %v1558
          %1563 = vst.msk [vmem:[#allocation3] sm:$0xf] %vm1486, %v1559
          %1564 = vst.msk [vmem:[#allocation3 + $0x4] sm:$0xf] %vm1486, %v1560
          %1565 = vst.msk [vmem:[#allocation3 + $0x8] sm:$0xf] %vm1486, %v1561
          %1566 = vst.msk [vmem:[#allocation3 + $0xc] sm:$0xf] %vm1486, %v1562
        $region84: #{tpu_custom_call.1} parent=79 // pred_fallthru
          _
        %s1567 = smul.u32 %s34, 8
        %s1568 = scalar_lea.vmem %s503, %s1567
        %v1569 = vld [vmem:[%s1568] sm:$0xff]
        %v1570 = vld [vmem:[%s1] sm:$0x1]
        %v1571 = vld [vmem:[%s2] sm:$0x1]
        %vm1572 = vcmask 261120
        %v1573 = vsel %vm1572, %v1569, 0.0
        %1574 = vadd.xlane.f32.xlu0 %v1573
        %v1575 = vpop.xlane.xlu0 %1574
        %v1576 = vrcp.pop 32.0
        %v1577 = vmul.f32 %v1575, %v1576
        %v1578 = vsub.f32 %v1569, %v1577
        %v1579 = vmul.f32 %v1578, %v1578
        %v1580 = vsel %vm1572, %v1579, 0.0
        %1581 = vadd.xlane.f32.xlu0 %v1580
        %v1582 = vpop.xlane.xlu0 %1581
        %v1583 = vmul.f32 %v1582, %v1576
        %v1584 = vadd.f32 %v1583, 1e-05
        %v1585 = vrsqrt.pop %v1584
        %v1586 = vmul.f32 %v1578, %v1585
        %v1588 = vlaneseq
        %v1589 = vshrl.u32 %v1588, 7
        %v1590 = vsub.s32 0, %v1589
        %v1591 = vrot.slane %v1570, %v1590
        %v1593 = vmul.f32 %v1586, %v1591
        %v1595 = vlaneseq
        %v1596 = vshrl.u32 %v1595, 7
        %v1597 = vsub.s32 0, %v1596
        %v1598 = vrot.slane %v1571, %v1597
        %v1600 = vadd.f32 %v1593, %v1598
        %v1601 = vpack.c.bf16 %v1600, %v1600
        %v1602 = vld [vmem:[%s3] sm:$0xf]
        %v1603 = vld [vmem:[%s3 + $0x4] sm:$0xf]
        %v1604 = vld [vmem:[%s3 + $0x8] sm:$0xf]
        %v1605 = vld [vmem:[%s3 + $0xc] sm:$0xf]
        %v1606 = vld [vmem:[%s4] sm:$0x1]
        %v1608 = vlaneseq
        %v1609 = vshrl.u32 %v1608, 7
        %v1610 = vsub.s32 0, %v1609
        %v1611 = vrot.slane %v1606, %v1610
        %v1617 = vunpack.c.l.b16 %v1602
        %v1618 = vunpack.c.l.b16 %v1603
        %v1619 = vunpack.c.l.b16 %v1604
        %v1620 = vunpack.c.l.b16 %v1605
        %v1621 = vpack.c.b16 %v1618, %v1617
        %v1622 = vpack.c.b16 %v1620, %v1619
        %v1626 = vsel %vm1572, %v1601, 0
        %1628 = vmatprep.subr.bf16.mxu0 0
        %1629 = vmatpush1.bf16.msra.mxu0 %v1621
        %1630 = vmatprep.subr.bf16.mxu0 0
        %1631 = vmatpush1.bf16.msra.mxu0 %v1622
        %1632 = vmatprep.subr.bf16.mxu0 0
        %1633 = vmatpush1.bf16.msra.mxu0 0
        %1634 = vmatprep.subr.bf16.mxu0 0
        %1635 = vmatpush1.bf16.msra.mxu0 0
        %1636 = vmatprep.subr.bf16.mxu0 0
        %1637 = vmatpush1.bf16.msra.mxu0 0
        %1638 = vmatprep.subr.bf16.mxu0 0
        %1639 = vmatpush1.bf16.msra.mxu0 0
        %1640 = vmatprep.subr.bf16.mxu0 0
        %1641 = vmatpush1.bf16.msra.mxu0 0
        %1642 = vmatprep.subr.bf16.mxu0 0
        %1643 = vmatpush1.bf16.msra.mxu0 0
        %1644 = vmatprep.subr.bf16.mxu0 0
        %1645 = vmatpush1.bf16.msra.mxu0 0
        %1646 = vmatprep.subr.bf16.mxu0 0
        %1647 = vmatpush1.bf16.msra.mxu0 0
        %1648 = vmatprep.subr.bf16.mxu0 0
        %1649 = vmatpush1.bf16.msra.mxu0 0
        %1650 = vmatprep.subr.bf16.mxu0 0
        %1651 = vmatpush1.bf16.msra.mxu0 0
        %1652 = vmatprep.subr.bf16.mxu0 0
        %1653 = vmatpush1.bf16.msra.mxu0 0
        %1654 = vmatprep.subr.bf16.mxu0 0
        %1655 = vmatpush1.bf16.msra.mxu0 0
        %1656 = vmatprep.subr.bf16.mxu0 0
        %1657 = vmatpush1.bf16.msra.mxu0 0
        %1658 = vmatprep.subr.bf16.mxu0 0
        %1659 = vmatpush1.bf16.msra.mxu0 0
        %1660 = vmatprep.mubr.bf16.mxu0 0
        %1661 = vmatmul.mubr.bf16.gmra.mrb[0].mxu0 %v1626
        %v1662 = vpop.f32.mrb[0].mxu0
        %v1663 = vadd.f32 %v1611, %v1662
        %v1664 = vpop.f32.mrb[0].mxu0
        %v1665 = vpop.f32.mrb[0].mxu0
        %v1666 = vpop.f32.mrb[0].mxu0
        %1667 = vdwg.mxu0
        %1669 = vrot.lane.b32.xlu0 %v1663, 120
        %v1670 = vpop.permute.xlu0 %1669
        %1672 = vrot.lane.b32.xlu0 %v1663, 112
        %v1673 = vpop.permute.xlu0 %1672
        %1675 = vrot.lane.b32.xlu0 %v1663, 104
        %v1676 = vpop.permute.xlu0 %1675
        %v1678 = vcombine.low %v1663, %v1673
        %v1679 = vcombine.high %v1663, %v1673
        %v1681 = vunpack.c.l.s4 1983009808
        %v1682 = vunpack.c.0.s8 %v1681
        %v1683 = vlaneseq
        %v1684 = vshrl.u32 %v1683, 7
        %v1685 = vsub.s32 %v1682, %v1684
        %v1686 = vrot.slane %v1678, %v1685
        %v1688 = vunpack.c.l.s4 1983009808
        %v1689 = vunpack.c.0.s8 %v1688
        %v1690 = vlaneseq
        %v1691 = vshrl.u32 %v1690, 7
        %v1692 = vsub.s32 %v1689, %v1691
        %v1693 = vrot.slane %v1679, %v1692
        %v1694 = vcombine.low %v1670, %v1676
        %v1695 = vcombine.high %v1670, %v1676
        %v1697 = vunpack.c.l.s4 1983009808
        %v1698 = vunpack.c.0.s8 %v1697
        %v1699 = vlaneseq
        %v1700 = vshrl.u32 %v1699, 7
        %v1701 = vsub.s32 %v1698, %v1700
        %v1702 = vrot.slane %v1694, %v1701
        %v1704 = vunpack.c.l.s4 1983009808
        %v1705 = vunpack.c.0.s8 %v1704
        %v1706 = vlaneseq
        %v1707 = vshrl.u32 %v1706, 7
        %v1708 = vsub.s32 %v1705, %v1707
        %v1709 = vrot.slane %v1695, %v1708
        %v1710 = vcombine.low %v1686, %v1702
        %v1711 = vcombine.high %v1686, %v1702
        %v1713 = vunpack.c.l.s4 1934713408
        %v1714 = vunpack.c.0.s8 %v1713
        %v1715 = vlaneseq
        %v1716 = vshrl.u32 %v1715, 7
        %v1717 = vsub.s32 %v1714, %v1716
        %v1718 = vrot.slane %v1710, %v1717
        %v1720 = vunpack.c.l.s4 1934713408
        %v1721 = vunpack.c.0.s8 %v1720
        %v1722 = vlaneseq
        %v1723 = vshrl.u32 %v1722, 7
        %v1724 = vsub.s32 %v1721, %v1723
        %v1725 = vrot.slane %v1711, %v1724
        %v1726 = vcombine.low %v1693, %v1709
        %v1727 = vcombine.high %v1693, %v1709
        %v1729 = vunpack.c.l.s4 1934713408
        %v1730 = vunpack.c.0.s8 %v1729
        %v1731 = vlaneseq
        %v1732 = vshrl.u32 %v1731, 7
        %v1733 = vsub.s32 %v1730, %v1732
        %v1734 = vrot.slane %v1726, %v1733
        %v1736 = vunpack.c.l.s4 1934713408
        %v1737 = vunpack.c.0.s8 %v1736
        %v1738 = vlaneseq
        %v1739 = vshrl.u32 %v1738, 7
        %v1740 = vsub.s32 %v1737, %v1739
        %v1741 = vrot.slane %v1727, %v1740
        %v1742 = vcombine.high %v1718, 0.0
        %v1743 = vcombine.high %v1725, 0.0
        %v1744 = vcombine.high %v1734, 0.0
        %v1745 = vcombine.high %v1741, 0.0
        %v1746 = vcombine.low %v1718, %v1725
        %v1748 = vunpack.c.l.s4 1983009808
        %v1749 = vunpack.c.0.s8 %v1748
        %v1750 = vlaneseq
        %v1751 = vshrl.u32 %v1750, 7
        %v1752 = vsub.s32 %v1749, %v1751
        %v1753 = vrot.slane %v1746, %v1752
        %v1754 = vcombine.low %v1742, %v1743
        %v1756 = vunpack.c.l.s4 1983009808
        %v1757 = vunpack.c.0.s8 %v1756
        %v1758 = vlaneseq
        %v1759 = vshrl.u32 %v1758, 7
        %v1760 = vsub.s32 %v1757, %v1759
        %v1761 = vrot.slane %v1754, %v1760
        %v1762 = vcombine.low %v1734, %v1741
        %v1764 = vunpack.c.l.s4 1983009808
        %v1765 = vunpack.c.0.s8 %v1764
        %v1766 = vlaneseq
        %v1767 = vshrl.u32 %v1766, 7
        %v1768 = vsub.s32 %v1765, %v1767
        %v1769 = vrot.slane %v1762, %v1768
        %v1770 = vcombine.low %v1744, %v1745
        %v1772 = vunpack.c.l.s4 1983009808
        %v1773 = vunpack.c.0.s8 %v1772
        %v1774 = vlaneseq
        %v1775 = vshrl.u32 %v1774, 7
        %v1776 = vsub.s32 %v1773, %v1775
        %v1777 = vrot.slane %v1770, %v1776
        %v1778 = vcombine.low %v1753, %v1761
        %v1779 = vcombine.high %v1753, %v1761
        %v1781 = vunpack.c.l.s4 1934713408
        %v1782 = vunpack.c.0.s8 %v1781
        %v1783 = vlaneseq
        %v1784 = vshrl.u32 %v1783, 7
        %v1785 = vsub.s32 %v1782, %v1784
        %v1786 = vrot.slane %v1778, %v1785
        %v1788 = vunpack.c.l.s4 1934713408
        %v1789 = vunpack.c.0.s8 %v1788
        %v1790 = vlaneseq
        %v1791 = vshrl.u32 %v1790, 7
        %v1792 = vsub.s32 %v1789, %v1791
        %v1793 = vrot.slane %v1779, %v1792
        %v1794 = vcombine.low %v1769, %v1777
        %v1795 = vcombine.high %v1769, %v1777
        %v1797 = vunpack.c.l.s4 1934713408
        %v1798 = vunpack.c.0.s8 %v1797
        %v1799 = vlaneseq
        %v1800 = vshrl.u32 %v1799, 7
        %v1801 = vsub.s32 %v1798, %v1800
        %v1802 = vrot.slane %v1794, %v1801
        %v1804 = vunpack.c.l.s4 1934713408
        %v1805 = vunpack.c.0.s8 %v1804
        %v1806 = vlaneseq
        %v1807 = vshrl.u32 %v1806, 7
        %v1808 = vsub.s32 %v1805, %v1807
        %v1809 = vrot.slane %v1795, %v1808
        %v1810 = vcombine.low %v1786, %v1802
        %v1811 = vcombine.high %v1786, %v1802
        %v1812 = vcombine.low %v1793, %v1809
        %v1813 = vcombine.high %v1793, %v1809
        %v1814 = vpack.c.bf16 %v1810, %v1810
        %v1815 = vpack.c.bf16 %v1811, %v1811
        %v1816 = vpack.c.bf16 %v1812, %v1812
        %v1817 = vpack.c.bf16 %v1813, %v1813
        %vm1818 = vcmask 60416
        %1819 = vst.msk [vmem:[#allocation4] sm:$0xf] %vm1818, %v1814
        %1820 = vst.msk [vmem:[#allocation4 + $0x4] sm:$0xf] %vm1818, %v1815
        %1821 = vst.msk [vmem:[#allocation4 + $0x8] sm:$0xf] %vm1818, %v1816
        %1822 = vst.msk [vmem:[#allocation4 + $0xc] sm:$0xf] %vm1818, %v1817
        %v1823 = vld [vmem:[#allocation4] sm:$0xf]
        %v1824 = vld [vmem:[#allocation4 + $0x4] sm:$0xf]
        %v1825 = vld [vmem:[#allocation4 + $0x8] sm:$0xf]
        %v1826 = vld [vmem:[#allocation4 + $0xc] sm:$0xf]
        %v1827 = vld [vmem:[#allocation2] sm:$0xf]
        %v1828 = vld [vmem:[#allocation2 + $0x4] sm:$0xf]
        %v1829 = vld [vmem:[#allocation2 + $0x8] sm:$0xf]
        %v1830 = vld [vmem:[#allocation2 + $0xc] sm:$0xf]
        %v1831 = vld [vmem:[#allocation3] sm:$0xf]
        %v1832 = vld [vmem:[#allocation3 + $0x4] sm:$0xf]
        %v1833 = vld [vmem:[#allocation3 + $0x8] sm:$0xf]
        %v1834 = vld [vmem:[#allocation3 + $0xc] sm:$0xf]
        %vm1835 = vcmask 64512
        %v1837 = vsel %vm1835, %v1823, 0
        %vm1839 = vcmask 1043456
        %v1841 = vsel %vm1839, %v1827, 0
        %1843 = vmatprep.subr.bf16.mxu0 0
        %1844 = vmatpush1.bf16.msra.mxu0 %v1841
        %1845 = vmatprep.subr.bf16.mxu0 0
        %1846 = vmatpush1.bf16.msra.mxu0 0
        %1847 = vmatprep.subr.bf16.mxu0 0
        %1848 = vmatpush1.bf16.msra.mxu0 0
        %1849 = vmatprep.subr.bf16.mxu0 0
        %1850 = vmatpush1.bf16.msra.mxu0 0
        %1851 = vmatprep.subr.bf16.mxu0 0
        %1852 = vmatpush1.bf16.msra.mxu0 0
        %1853 = vmatprep.subr.bf16.mxu0 0
        %1854 = vmatpush1.bf16.msra.mxu0 0
        %1855 = vmatprep.subr.bf16.mxu0 0
        %1856 = vmatpush1.bf16.msra.mxu0 0
        %1857 = vmatprep.subr.bf16.mxu0 0
        %1858 = vmatpush1.bf16.msra.mxu0 0
        %1859 = vmatprep.subr.bf16.mxu0 0
        %1860 = vmatpush1.bf16.msra.mxu0 0
        %1861 = vmatprep.subr.bf16.mxu0 0
        %1862 = vmatpush1.bf16.msra.mxu0 0
        %1863 = vmatprep.subr.bf16.mxu0 0
        %1864 = vmatpush1.bf16.msra.mxu0 0
        %1865 = vmatprep.subr.bf16.mxu0 0
        %1866 = vmatpush1.bf16.msra.mxu0 0
        %1867 = vmatprep.subr.bf16.mxu0 0
        %1868 = vmatpush1.bf16.msra.mxu0 0
        %1869 = vmatprep.subr.bf16.mxu0 0
        %1870 = vmatpush1.bf16.msra.mxu0 0
        %1871 = vmatprep.subr.bf16.mxu0 0
        %1872 = vmatpush1.bf16.msra.mxu0 0
        %1873 = vmatprep.subr.bf16.mxu0 0
        %1874 = vmatpush1.bf16.msra.mxu0 0
        %1875 = vmatprep.mubr.bf16.mxu0 0
        %1876 = vmatmul.mubr.bf16.gmra.mrb[0].mxu0 %v1837
        %v1877 = vpop.f32.mrb[0].mxu0
        %v1878 = vadd.f32 0.0, %v1877
        %v1879 = vpop.f32.mrb[0].mxu0
        %v1880 = vpop.f32.mrb[0].mxu0
        %v1881 = vpop.f32.mrb[0].mxu0
        %1882 = vdwg.mxu0
        %v1884 = vsel %vm1835, %v1824, 0
        %v1887 = vsel %vm1839, %v1828, 0
        %1889 = vmatprep.subr.bf16.mxu0 0
        %1890 = vmatpush1.bf16.msra.mxu0 %v1887
        %1891 = vmatprep.subr.bf16.mxu0 0
        %1892 = vmatpush1.bf16.msra.mxu0 0
        %1893 = vmatprep.subr.bf16.mxu0 0
        %1894 = vmatpush1.bf16.msra.mxu0 0
        %1895 = vmatprep.subr.bf16.mxu0 0
        %1896 = vmatpush1.bf16.msra.mxu0 0
        %1897 = vmatprep.subr.bf16.mxu0 0
        %1898 = vmatpush1.bf16.msra.mxu0 0
        %1899 = vmatprep.subr.bf16.mxu0 0
        %1900 = vmatpush1.bf16.msra.mxu0 0
        %1901 = vmatprep.subr.bf16.mxu0 0
        %1902 = vmatpush1.bf16.msra.mxu0 0
        %1903 = vmatprep.subr.bf16.mxu0 0
        %1904 = vmatpush1.bf16.msra.mxu0 0
        %1905 = vmatprep.subr.bf16.mxu0 0
        %1906 = vmatpush1.bf16.msra.mxu0 0
        %1907 = vmatprep.subr.bf16.mxu0 0
        %1908 = vmatpush1.bf16.msra.mxu0 0
        %1909 = vmatprep.subr.bf16.mxu0 0
        %1910 = vmatpush1.bf16.msra.mxu0 0
        %1911 = vmatprep.subr.bf16.mxu0 0
        %1912 = vmatpush1.bf16.msra.mxu0 0
        %1913 = vmatprep.subr.bf16.mxu0 0
        %1914 = vmatpush1.bf16.msra.mxu0 0
        %1915 = vmatprep.subr.bf16.mxu0 0
        %1916 = vmatpush1.bf16.msra.mxu0 0
        %1917 = vmatprep.subr.bf16.mxu0 0
        %1918 = vmatpush1.bf16.msra.mxu0 0
        %1919 = vmatprep.subr.bf16.mxu0 0
        %1920 = vmatpush1.bf16.msra.mxu0 0
        %1921 = vmatprep.mubr.bf16.mxu0 0
        %1922 = vmatmul.mubr.bf16.gmra.mrb[0].mxu0 %v1884
        %v1923 = vpop.f32.mrb[0].mxu0
        %v1924 = vadd.f32 0.0, %v1923
        %v1925 = vpop.f32.mrb[0].mxu0
        %v1926 = vpop.f32.mrb[0].mxu0
        %v1927 = vpop.f32.mrb[0].mxu0
        %1928 = vdwg.mxu0
        %v1930 = vsel %vm1835, %v1825, 0
        %v1933 = vsel %vm1839, %v1829, 0
        %1935 = vmatprep.subr.bf16.mxu0 0
        %1936 = vmatpush1.bf16.msra.mxu0 %v1933
        %1937 = vmatprep.subr.bf16.mxu0 0
        %1938 = vmatpush1.bf16.msra.mxu0 0
        %1939 = vmatprep.subr.bf16.mxu0 0
        %1940 = vmatpush1.bf16.msra.mxu0 0
        %1941 = vmatprep.subr.bf16.mxu0 0
        %1942 = vmatpush1.bf16.msra.mxu0 0
        %1943 = vmatprep.subr.bf16.mxu0 0
        %1944 = vmatpush1.bf16.msra.mxu0 0
        %1945 = vmatprep.subr.bf16.mxu0 0
        %1946 = vmatpush1.bf16.msra.mxu0 0
        %1947 = vmatprep.subr.bf16.mxu0 0
        %1948 = vmatpush1.bf16.msra.mxu0 0
        %1949 = vmatprep.subr.bf16.mxu0 0
        %1950 = vmatpush1.bf16.msra.mxu0 0
        %1951 = vmatprep.subr.bf16.mxu0 0
        %1952 = vmatpush1.bf16.msra.mxu0 0
        %1953 = vmatprep.subr.bf16.mxu0 0
        %1954 = vmatpush1.bf16.msra.mxu0 0
        %1955 = vmatprep.subr.bf16.mxu0 0
        %1956 = vmatpush1.bf16.msra.mxu0 0
        %1957 = vmatprep.subr.bf16.mxu0 0
        %1958 = vmatpush1.bf16.msra.mxu0 0
        %1959 = vmatprep.subr.bf16.mxu0 0
        %1960 = vmatpush1.bf16.msra.mxu0 0
        %1961 = vmatprep.subr.bf16.mxu0 0
        %1962 = vmatpush1.bf16.msra.mxu0 0
        %1963 = vmatprep.subr.bf16.mxu0 0
        %1964 = vmatpush1.bf16.msra.mxu0 0
        %1965 = vmatprep.subr.bf16.mxu0 0
        %1966 = vmatpush1.bf16.msra.mxu0 0
        %1967 = vmatprep.mubr.bf16.mxu0 0
        %1968 = vmatmul.mubr.bf16.gmra.mrb[0].mxu0 %v1930
        %v1969 = vpop.f32.mrb[0].mxu0
        %v1970 = vadd.f32 0.0, %v1969
        %v1971 = vpop.f32.mrb[0].mxu0
        %v1972 = vpop.f32.mrb[0].mxu0
        %v1973 = vpop.f32.mrb[0].mxu0
        %1974 = vdwg.mxu0
        %v1976 = vsel %vm1835, %v1826, 0
        %v1979 = vsel %vm1839, %v1830, 0
        %1981 = vmatprep.subr.bf16.mxu0 0
        %1982 = vmatpush1.bf16.msra.mxu0 %v1979
        %1983 = vmatprep.subr.bf16.mxu0 0
        %1984 = vmatpush1.bf16.msra.mxu0 0
        %1985 = vmatprep.subr.bf16.mxu0 0
        %1986 = vmatpush1.bf16.msra.mxu0 0
        %1987 = vmatprep.subr.bf16.mxu0 0
        %1988 = vmatpush1.bf16.msra.mxu0 0
        %1989 = vmatprep.subr.bf16.mxu0 0
        %1990 = vmatpush1.bf16.msra.mxu0 0
        %1991 = vmatprep.subr.bf16.mxu0 0
        %1992 = vmatpush1.bf16.msra.mxu0 0
        %1993 = vmatprep.subr.bf16.mxu0 0
        %1994 = vmatpush1.bf16.msra.mxu0 0
        %1995 = vmatprep.subr.bf16.mxu0 0
        %1996 = vmatpush1.bf16.msra.mxu0 0
        %1997 = vmatprep.subr.bf16.mxu0 0
        %1998 = vmatpush1.bf16.msra.mxu0 0
        %1999 = vmatprep.subr.bf16.mxu0 0
        %2000 = vmatpush1.bf16.msra.mxu0 0
        %2001 = vmatprep.subr.bf16.mxu0 0
        %2002 = vmatpush1.bf16.msra.mxu0 0
        %2003 = vmatprep.subr.bf16.mxu0 0
        %2004 = vmatpush1.bf16.msra.mxu0 0
        %2005 = vmatprep.subr.bf16.mxu0 0
        %2006 = vmatpush1.bf16.msra.mxu0 0
        %2007 = vmatprep.subr.bf16.mxu0 0
        %2008 = vmatpush1.bf16.msra.mxu0 0
        %2009 = vmatprep.subr.bf16.mxu0 0
        %2010 = vmatpush1.bf16.msra.mxu0 0
        %2011 = vmatprep.subr.bf16.mxu0 0
        %2012 = vmatpush1.bf16.msra.mxu0 0
        %2013 = vmatprep.mubr.bf16.mxu0 0
        %2014 = vmatmul.mubr.bf16.gmra.mrb[0].mxu0 %v1976
        %v2015 = vpop.f32.mrb[0].mxu0
        %v2016 = vadd.f32 0.0, %v2015
        %v2017 = vpop.f32.mrb[0].mxu0
        %v2018 = vpop.f32.mrb[0].mxu0
        %v2019 = vpop.f32.mrb[0].mxu0
        %2020 = vdwg.mxu0
        %v2021 = vsel %vm1835, %v1878, -inf
        %2022 = vmax.xlane.f32.xlu0 %v2021
        %v2023 = vpop.xlane.xlu0 %2022
        %v2024 = vsel %vm1835, %v1924, -inf
        %2025 = vmax.xlane.f32.xlu0 %v2024
        %v2026 = vpop.xlane.xlu0 %2025
        %v2027 = vsel %vm1835, %v1970, -inf
        %2028 = vmax.xlane.f32.xlu0 %v2027
        %v2029 = vpop.xlane.xlu0 %2028
        %v2030 = vsel %vm1835, %v2016, -inf
        %2031 = vmax.xlane.f32.xlu0 %v2030
        %v2032 = vpop.xlane.xlu0 %2031
        %v2033 = vsub.f32 %v1878, %v2023
        %v2034 = vsub.f32 %v1924, %v2026
        %v2035 = vsub.f32 %v1970, %v2029
        %v2036 = vsub.f32 %v2016, %v2032
        %v2037 = vmul.f32 %v2033, 1.442695
        %v2038 = vpow.pop %v2037
        %v2039 = vmul.f32 %v2034, 1.442695
        %v2040 = vpow.pop %v2039
        %v2041 = vmul.f32 %v2035, 1.442695
        %v2042 = vpow.pop %v2041
        %v2043 = vmul.f32 %v2036, 1.442695
        %v2044 = vpow.pop %v2043
        %v2045 = vsel %vm1835, %v2038, 0.0
        %2046 = vadd.xlane.f32.xlu0 %v2045
        %v2047 = vpop.xlane.xlu0 %2046
        %v2048 = vsel %vm1835, %v2040, 0.0
        %2049 = vadd.xlane.f32.xlu0 %v2048
        %v2050 = vpop.xlane.xlu0 %2049
        %v2051 = vsel %vm1835, %v2042, 0.0
        %2052 = vadd.xlane.f32.xlu0 %v2051
        %v2053 = vpop.xlane.xlu0 %2052
        %v2054 = vsel %vm1835, %v2044, 0.0
        %2055 = vadd.xlane.f32.xlu0 %v2054
        %v2056 = vpop.xlane.xlu0 %2055
        %v2057 = vpack.c.bf16 %v2038, %v2038
        %v2058 = vpack.c.bf16 %v2040, %v2040
        %v2059 = vpack.c.bf16 %v2042, %v2042
        %v2060 = vpack.c.bf16 %v2044, %v2044
        %v2062 = vsel %vm1835, %v2057, 0
        %v2065 = vsel %vm1839, %v1831, 0
        %2067 = vmatprep.subr.bf16.mxu0 0
        %2068 = vmatpush1.bf16.msra.mxu0 %v2065
        %2069 = vmatprep.subr.bf16.mxu0 0
        %2070 = vmatpush1.bf16.msra.mxu0 0
        %2071 = vmatprep.subr.bf16.mxu0 0
        %2072 = vmatpush1.bf16.msra.mxu0 0
        %2073 = vmatprep.subr.bf16.mxu0 0
        %2074 = vmatpush1.bf16.msra.mxu0 0
        %2075 = vmatprep.subr.bf16.mxu0 0
        %2076 = vmatpush1.bf16.msra.mxu0 0
        %2077 = vmatprep.subr.bf16.mxu0 0
        %2078 = vmatpush1.bf16.msra.mxu0 0
        %2079 = vmatprep.subr.bf16.mxu0 0
        %2080 = vmatpush1.bf16.msra.mxu0 0
        %2081 = vmatprep.subr.bf16.mxu0 0
        %2082 = vmatpush1.bf16.msra.mxu0 0
        %2083 = vmatprep.subr.bf16.mxu0 0
        %2084 = vmatpush1.bf16.msra.mxu0 0
        %2085 = vmatprep.subr.bf16.mxu0 0
        %2086 = vmatpush1.bf16.msra.mxu0 0
        %2087 = vmatprep.subr.bf16.mxu0 0
        %2088 = vmatpush1.bf16.msra.mxu0 0
        %2089 = vmatprep.subr.bf16.mxu0 0
        %2090 = vmatpush1.bf16.msra.mxu0 0
        %2091 = vmatprep.subr.bf16.mxu0 0
        %2092 = vmatpush1.bf16.msra.mxu0 0
        %2093 = vmatprep.subr.bf16.mxu0 0
        %2094 = vmatpush1.bf16.msra.mxu0 0
        %2095 = vmatprep.subr.bf16.mxu0 0
        %2096 = vmatpush1.bf16.msra.mxu0 0
        %2097 = vmatprep.subr.bf16.mxu0 0
        %2098 = vmatpush1.bf16.msra.mxu0 0
        %2099 = vmatprep.mubr.bf16.mxu0 0
        %2100 = vmatmul.mubr.bf16.gmra.mrb[0].mxu0 %v2062
        %v2101 = vpop.f32.mrb[0].mxu0
        %v2102 = vadd.f32 0.0, %v2101
        %v2103 = vpop.f32.mrb[0].mxu0
        %v2104 = vpop.f32.mrb[0].mxu0
        %v2105 = vpop.f32.mrb[0].mxu0
        %2106 = vdwg.mxu0
        %v2108 = vsel %vm1835, %v2058, 0
        %v2111 = vsel %vm1839, %v1832, 0
        %2113 = vmatprep.subr.bf16.mxu0 0
        %2114 = vmatpush1.bf16.msra.mxu0 %v2111
        %2115 = vmatprep.subr.bf16.mxu0 0
        %2116 = vmatpush1.bf16.msra.mxu0 0
        %2117 = vmatprep.subr.bf16.mxu0 0
        %2118 = vmatpush1.bf16.msra.mxu0 0
        %2119 = vmatprep.subr.bf16.mxu0 0
        %2120 = vmatpush1.bf16.msra.mxu0 0
        %2121 = vmatprep.subr.bf16.mxu0 0
        %2122 = vmatpush1.bf16.msra.mxu0 0
        %2123 = vmatprep.subr.bf16.mxu0 0
        %2124 = vmatpush1.bf16.msra.mxu0 0
        %2125 = vmatprep.subr.bf16.mxu0 0
        %2126 = vmatpush1.bf16.msra.mxu0 0
        %2127 = vmatprep.subr.bf16.mxu0 0
        %2128 = vmatpush1.bf16.msra.mxu0 0
        %2129 = vmatprep.subr.bf16.mxu0 0
        %2130 = vmatpush1.bf16.msra.mxu0 0
        %2131 = vmatprep.subr.bf16.mxu0 0
        %2132 = vmatpush1.bf16.msra.mxu0 0
        %2133 = vmatprep.subr.bf16.mxu0 0
        %2134 = vmatpush1.bf16.msra.mxu0 0
        %2135 = vmatprep.subr.bf16.mxu0 0
        %2136 = vmatpush1.bf16.msra.mxu0 0
        %2137 = vmatprep.subr.bf16.mxu0 0
        %2138 = vmatpush1.bf16.msra.mxu0 0
        %2139 = vmatprep.subr.bf16.mxu0 0
        %2140 = vmatpush1.bf16.msra.mxu0 0
        %2141 = vmatprep.subr.bf16.mxu0 0
        %2142 = vmatpush1.bf16.msra.mxu0 0
        %2143 = vmatprep.subr.bf16.mxu0 0
        %2144 = vmatpush1.bf16.msra.mxu0 0
        %2145 = vmatprep.mubr.bf16.mxu0 0
        %2146 = vmatmul.mubr.bf16.gmra.mrb[0].mxu0 %v2108
        %v2147 = vpop.f32.mrb[0].mxu0
        %v2148 = vadd.f32 0.0, %v2147
        %v2149 = vpop.f32.mrb[0].mxu0
        %v2150 = vpop.f32.mrb[0].mxu0
        %v2151 = vpop.f32.mrb[0].mxu0
        %2152 = vdwg.mxu0
        %v2154 = vsel %vm1835, %v2059, 0
        %v2157 = vsel %vm1839, %v1833, 0
        %2159 = vmatprep.subr.bf16.mxu0 0
        %2160 = vmatpush1.bf16.msra.mxu0 %v2157
        %2161 = vmatprep.subr.bf16.mxu0 0
        %2162 = vmatpush1.bf16.msra.mxu0 0
        %2163 = vmatprep.subr.bf16.mxu0 0
        %2164 = vmatpush1.bf16.msra.mxu0 0
        %2165 = vmatprep.subr.bf16.mxu0 0
        %2166 = vmatpush1.bf16.msra.mxu0 0
        %2167 = vmatprep.subr.bf16.mxu0 0
        %2168 = vmatpush1.bf16.msra.mxu0 0
        %2169 = vmatprep.subr.bf16.mxu0 0
        %2170 = vmatpush1.bf16.msra.mxu0 0
        %2171 = vmatprep.subr.bf16.mxu0 0
        %2172 = vmatpush1.bf16.msra.mxu0 0
        %2173 = vmatprep.subr.bf16.mxu0 0
        %2174 = vmatpush1.bf16.msra.mxu0 0
        %2175 = vmatprep.subr.bf16.mxu0 0
        %2176 = vmatpush1.bf16.msra.mxu0 0
        %2177 = vmatprep.subr.bf16.mxu0 0
        %2178 = vmatpush1.bf16.msra.mxu0 0
        %2179 = vmatprep.subr.bf16.mxu0 0
        %2180 = vmatpush1.bf16.msra.mxu0 0
        %2181 = vmatprep.subr.bf16.mxu0 0
        %2182 = vmatpush1.bf16.msra.mxu0 0
        %2183 = vmatprep.subr.bf16.mxu0 0
        %2184 = vmatpush1.bf16.msra.mxu0 0
        %2185 = vmatprep.subr.bf16.mxu0 0
        %2186 = vmatpush1.bf16.msra.mxu0 0
        %2187 = vmatprep.subr.bf16.mxu0 0
        %2188 = vmatpush1.bf16.msra.mxu0 0
        %2189 = vmatprep.subr.bf16.mxu0 0
        %2190 = vmatpush1.bf16.msra.mxu0 0
        %2191 = vmatprep.mubr.bf16.mxu0 0
        %2192 = vmatmul.mubr.bf16.gmra.mrb[0].mxu0 %v2154
        %v2193 = vpop.f32.mrb[0].mxu0
        %v2194 = vadd.f32 0.0, %v2193
        %v2195 = vpop.f32.mrb[0].mxu0
        %v2196 = vpop.f32.mrb[0].mxu0
        %v2197 = vpop.f32.mrb[0].mxu0
        %2198 = vdwg.mxu0
        %v2200 = vsel %vm1835, %v2060, 0
        %v2203 = vsel %vm1839, %v1834, 0
        %2205 = vmatprep.subr.bf16.mxu0 0
        %2206 = vmatpush1.bf16.msra.mxu0 %v2203
        %2207 = vmatprep.subr.bf16.mxu0 0
        %2208 = vmatpush1.bf16.msra.mxu0 0
        %2209 = vmatprep.subr.bf16.mxu0 0
        %2210 = vmatpush1.bf16.msra.mxu0 0
        %2211 = vmatprep.subr.bf16.mxu0 0
        %2212 = vmatpush1.bf16.msra.mxu0 0
        %2213 = vmatprep.subr.bf16.mxu0 0
        %2214 = vmatpush1.bf16.msra.mxu0 0
        %2215 = vmatprep.subr.bf16.mxu0 0
        %2216 = vmatpush1.bf16.msra.mxu0 0
        %2217 = vmatprep.subr.bf16.mxu0 0
        %2218 = vmatpush1.bf16.msra.mxu0 0
        %2219 = vmatprep.subr.bf16.mxu0 0
        %2220 = vmatpush1.bf16.msra.mxu0 0
        %2221 = vmatprep.subr.bf16.mxu0 0
        %2222 = vmatpush1.bf16.msra.mxu0 0
        %2223 = vmatprep.subr.bf16.mxu0 0
        %2224 = vmatpush1.bf16.msra.mxu0 0
        %2225 = vmatprep.subr.bf16.mxu0 0
        %2226 = vmatpush1.bf16.msra.mxu0 0
        %2227 = vmatprep.subr.bf16.mxu0 0
        %2228 = vmatpush1.bf16.msra.mxu0 0
        %2229 = vmatprep.subr.bf16.mxu0 0
        %2230 = vmatpush1.bf16.msra.mxu0 0
        %2231 = vmatprep.subr.bf16.mxu0 0
        %2232 = vmatpush1.bf16.msra.mxu0 0
        %2233 = vmatprep.subr.bf16.mxu0 0
        %2234 = vmatpush1.bf16.msra.mxu0 0
        %2235 = vmatprep.subr.bf16.mxu0 0
        %2236 = vmatpush1.bf16.msra.mxu0 0
        %2237 = vmatprep.mubr.bf16.mxu0 0
        %2238 = vmatmul.mubr.bf16.gmra.mrb[0].mxu0 %v2200
        %v2239 = vpop.f32.mrb[0].mxu0
        %v2240 = vadd.f32 0.0, %v2239
        %v2241 = vpop.f32.mrb[0].mxu0
        %v2242 = vpop.f32.mrb[0].mxu0
        %v2243 = vpop.f32.mrb[0].mxu0
        %2244 = vdwg.mxu0
        %v2245 = vrcp.pop %v2047
        %v2246 = vrcp.pop %v2050
        %v2247 = vrcp.pop %v2053
        %v2248 = vrcp.pop %v2056
        %v2249 = vmul.f32 %v2102, %v2245
        %v2250 = vmul.f32 %v2148, %v2246
        %v2251 = vmul.f32 %v2194, %v2247
        %v2252 = vmul.f32 %v2240, %v2248
        %2253 = vst.msk [vmem:[#allocation5] sm:$0xff] %vm1835, %v2249
        %2254 = vst.msk [vmem:[#allocation5 + $0x8] sm:$0xff] %vm1835, %v2250
        %2255 = vst.msk [vmem:[#allocation5 + $0x10] sm:$0xff] %vm1835, %v2251
        %2256 = vst.msk [vmem:[#allocation5 + $0x18] sm:$0xff] %vm1835, %v2252
        %v2257 = vld [vmem:[#allocation5] sm:$0xff]
        %v2258 = vld [vmem:[#allocation5 + $0x8] sm:$0xff]
        %v2259 = vld [vmem:[#allocation5 + $0x10] sm:$0xff]
        %v2260 = vld [vmem:[#allocation5 + $0x18] sm:$0xff]
        %v2261 = vcombine.low %v2257, %v2259
        %v2262 = vcombine.high %v2257, %v2259
        %v2264 = vunpack.c.l.s4 1983009808
        %v2265 = vunpack.c.0.s8 %v2264
        %v2266 = vlaneseq
        %v2267 = vshrl.u32 %v2266, 7
        %v2268 = vsub.s32 %v2265, %v2267
        %v2269 = vrot.slane %v2261, %v2268
        %v2271 = vunpack.c.l.s4 1983009808
        %v2272 = vunpack.c.0.s8 %v2271
        %v2273 = vlaneseq
        %v2274 = vshrl.u32 %v2273, 7
        %v2275 = vsub.s32 %v2272, %v2274
        %v2276 = vrot.slane %v2262, %v2275
        %v2277 = vcombine.low %v2258, %v2260
        %v2278 = vcombine.high %v2258, %v2260
        %v2280 = vunpack.c.l.s4 1983009808
        %v2281 = vunpack.c.0.s8 %v2280
        %v2282 = vlaneseq
        %v2283 = vshrl.u32 %v2282, 7
        %v2284 = vsub.s32 %v2281, %v2283
        %v2285 = vrot.slane %v2277, %v2284
        %v2287 = vunpack.c.l.s4 1983009808
        %v2288 = vunpack.c.0.s8 %v2287
        %v2289 = vlaneseq
        %v2290 = vshrl.u32 %v2289, 7
        %v2291 = vsub.s32 %v2288, %v2290
        %v2292 = vrot.slane %v2278, %v2291
        %v2293 = vcombine.low %v2269, %v2285
        %v2294 = vcombine.high %v2269, %v2285
        %v2296 = vunpack.c.l.s4 1934713408
        %v2297 = vunpack.c.0.s8 %v2296
        %v2298 = vlaneseq
        %v2299 = vshrl.u32 %v2298, 7
        %v2300 = vsub.s32 %v2297, %v2299
        %v2301 = vrot.slane %v2293, %v2300
        %v2303 = vunpack.c.l.s4 1934713408
        %v2304 = vunpack.c.0.s8 %v2303
        %v2305 = vlaneseq
        %v2306 = vshrl.u32 %v2305, 7
        %v2307 = vsub.s32 %v2304, %v2306
        %v2308 = vrot.slane %v2294, %v2307
        %v2309 = vcombine.low %v2276, %v2292
        %v2310 = vcombine.high %v2276, %v2292
        %v2312 = vunpack.c.l.s4 1934713408
        %v2313 = vunpack.c.0.s8 %v2312
        %v2314 = vlaneseq
        %v2315 = vshrl.u32 %v2314, 7
        %v2316 = vsub.s32 %v2313, %v2315
        %v2317 = vrot.slane %v2309, %v2316
        %v2319 = vunpack.c.l.s4 1934713408
        %v2320 = vunpack.c.0.s8 %v2319
        %v2321 = vlaneseq
        %v2322 = vshrl.u32 %v2321, 7
        %v2323 = vsub.s32 %v2320, %v2322
        %v2324 = vrot.slane %v2310, %v2323
        %v2325 = vcombine.high %v2301, 0.0
        %v2326 = vcombine.high %v2308, 0.0
        %v2327 = vcombine.high %v2317, 0.0
        %v2328 = vcombine.high %v2324, 0.0
        %v2329 = vcombine.low %v2301, %v2308
        %v2331 = vunpack.c.l.s4 1983009808
        %v2332 = vunpack.c.0.s8 %v2331
        %v2333 = vlaneseq
        %v2334 = vshrl.u32 %v2333, 7
        %v2335 = vsub.s32 %v2332, %v2334
        %v2336 = vrot.slane %v2329, %v2335
        %v2337 = vcombine.low %v2325, %v2326
        %v2339 = vunpack.c.l.s4 1983009808
        %v2340 = vunpack.c.0.s8 %v2339
        %v2341 = vlaneseq
        %v2342 = vshrl.u32 %v2341, 7
        %v2343 = vsub.s32 %v2340, %v2342
        %v2344 = vrot.slane %v2337, %v2343
        %v2345 = vcombine.low %v2317, %v2324
        %v2347 = vunpack.c.l.s4 1983009808
        %v2348 = vunpack.c.0.s8 %v2347
        %v2349 = vlaneseq
        %v2350 = vshrl.u32 %v2349, 7
        %v2351 = vsub.s32 %v2348, %v2350
        %v2352 = vrot.slane %v2345, %v2351
        %v2353 = vcombine.low %v2327, %v2328
        %v2355 = vunpack.c.l.s4 1983009808
        %v2356 = vunpack.c.0.s8 %v2355
        %v2357 = vlaneseq
        %v2358 = vshrl.u32 %v2357, 7
        %v2359 = vsub.s32 %v2356, %v2358
        %v2360 = vrot.slane %v2353, %v2359
        %v2361 = vcombine.low %v2336, %v2344
        %v2362 = vcombine.high %v2336, %v2344
        %v2364 = vunpack.c.l.s4 1934713408
        %v2365 = vunpack.c.0.s8 %v2364
        %v2366 = vlaneseq
        %v2367 = vshrl.u32 %v2366, 7
        %v2368 = vsub.s32 %v2365, %v2367
        %v2369 = vrot.slane %v2361, %v2368
        %v2371 = vunpack.c.l.s4 1934713408
        %v2372 = vunpack.c.0.s8 %v2371
        %v2373 = vlaneseq
        %v2374 = vshrl.u32 %v2373, 7
        %v2375 = vsub.s32 %v2372, %v2374
        %v2376 = vrot.slane %v2362, %v2375
        %v2377 = vcombine.low %v2352, %v2360
        %v2378 = vcombine.high %v2352, %v2360
        %v2380 = vunpack.c.l.s4 1934713408
        %v2381 = vunpack.c.0.s8 %v2380
        %v2382 = vlaneseq
        %v2383 = vshrl.u32 %v2382, 7
        %v2384 = vsub.s32 %v2381, %v2383
        %v2385 = vrot.slane %v2377, %v2384
        %v2387 = vunpack.c.l.s4 1934713408
        %v2388 = vunpack.c.0.s8 %v2387
        %v2389 = vlaneseq
        %v2390 = vshrl.u32 %v2389, 7
        %v2391 = vsub.s32 %v2388, %v2390
        %v2392 = vrot.slane %v2378, %v2391
        %v2393 = vcombine.low %v2369, %v2385
        %v2394 = vcombine.high %v2369, %v2385
        %v2395 = vcombine.low %v2376, %v2392
        %v2396 = vcombine.high %v2376, %v2392
        %2398 = vrot.lane.b32.xlu0 %v2394, 8
        %v2399 = vpop.permute.xlu0 %2398
        %2402 = vrot.lane.b32.xlu0 %v2395, 16
        %v2403 = vpop.permute.xlu0 %2402
        %2406 = vrot.lane.b32.xlu0 %v2396, 24
        %v2407 = vpop.permute.xlu0 %2406
        %v2409 = vsel %vm1835, %v2393, %v2399
        %vm2410 = vcmask 130048
        %v2411 = vsel %vm2410, %v2409, %v2403
        %vm2412 = vcmask 195584
        %v2413 = vsel %vm2412, %v2411, %v2407
        %v2414 = vpack.c.bf16 %v2413, %v2413
        %v2415 = vld [vmem:[%s7] sm:$0xf]
        %v2416 = vld [vmem:[%s7 + $0x4] sm:$0xf]
        %v2417 = vld [vmem:[%s7 + $0x8] sm:$0xf]
        %v2418 = vld [vmem:[%s7 + $0xc] sm:$0xf]
        %v2419 = vld [vmem:[%s8] sm:$0x1]
        %v2421 = vlaneseq
        %v2422 = vshrl.u32 %v2421, 7
        %v2423 = vsub.s32 0, %v2422
        %v2424 = vrot.slane %v2419, %v2423
        %v2430 = vunpack.c.l.b16 %v2415
        %v2431 = vunpack.c.l.b16 %v2416
        %v2432 = vunpack.c.l.b16 %v2417
        %v2433 = vunpack.c.l.b16 %v2418
        %v2434 = vpack.c.b16 %v2431, %v2430
        %v2435 = vpack.c.b16 %v2433, %v2432
        %v2439 = vsel %vm1572, %v2414, 0
        %2441 = vmatprep.subr.bf16.mxu0 0
        %2442 = vmatpush1.bf16.msra.mxu0 %v2434
        %2443 = vmatprep.subr.bf16.mxu0 0
        %2444 = vmatpush1.bf16.msra.mxu0 %v2435
        %2445 = vmatprep.subr.bf16.mxu0 0
        %2446 = vmatpush1.bf16.msra.mxu0 0
        %2447 = vmatprep.subr.bf16.mxu0 0
        %2448 = vmatpush1.bf16.msra.mxu0 0
        %2449 = vmatprep.subr.bf16.mxu0 0
        %2450 = vmatpush1.bf16.msra.mxu0 0
        %2451 = vmatprep.subr.bf16.mxu0 0
        %2452 = vmatpush1.bf16.msra.mxu0 0
        %2453 = vmatprep.subr.bf16.mxu0 0
        %2454 = vmatpush1.bf16.msra.mxu0 0
        %2455 = vmatprep.subr.bf16.mxu0 0
        %2456 = vmatpush1.bf16.msra.mxu0 0
        %2457 = vmatprep.subr.bf16.mxu0 0
        %2458 = vmatpush1.bf16.msra.mxu0 0
        %2459 = vmatprep.subr.bf16.mxu0 0
        %2460 = vmatpush1.bf16.msra.mxu0 0
        %2461 = vmatprep.subr.bf16.mxu0 0
        %2462 = vmatpush1.bf16.msra.mxu0 0
        %2463 = vmatprep.subr.bf16.mxu0 0
        %2464 = vmatpush1.bf16.msra.mxu0 0
        %2465 = vmatprep.subr.bf16.mxu0 0
        %2466 = vmatpush1.bf16.msra.mxu0 0
        %2467 = vmatprep.subr.bf16.mxu0 0
        %2468 = vmatpush1.bf16.msra.mxu0 0
        %2469 = vmatprep.subr.bf16.mxu0 0
        %2470 = vmatpush1.bf16.msra.mxu0 0
        %2471 = vmatprep.subr.bf16.mxu0 0
        %2472 = vmatpush1.bf16.msra.mxu0 0
        %2473 = vmatprep.mubr.bf16.mxu0 0
        %2474 = vmatmul.mubr.bf16.gmra.mrb[0].mxu0 %v2439
        %v2475 = vpop.f32.mrb[0].mxu0
        %v2476 = vadd.f32 %v2424, %v2475
        %v2477 = vpop.f32.mrb[0].mxu0
        %v2478 = vpop.f32.mrb[0].mxu0
        %v2479 = vpop.f32.mrb[0].mxu0
        %2480 = vdwg.mxu0
        %v2481 = vadd.f32 %v1569, %v2476
        %v2482 = vld [vmem:[%s9] sm:$0x1]
        %v2483 = vld [vmem:[%s10] sm:$0x1]
        %v2484 = vsel %vm1572, %v2481, 0.0
        %2485 = vadd.xlane.f32.xlu0 %v2484
        %v2486 = vpop.xlane.xlu0 %2485
        %v2487 = vmul.f32 %v2486, %v1576
        %v2488 = vsub.f32 %v2481, %v2487
        %v2489 = vmul.f32 %v2488, %v2488
        %v2490 = vsel %vm1572, %v2489, 0.0
        %2491 = vadd.xlane.f32.xlu0 %v2490
        %v2492 = vpop.xlane.xlu0 %2491
        %v2493 = vmul.f32 %v2492, %v1576
        %v2494 = vadd.f32 %v2493, 1e-05
        %v2495 = vrsqrt.pop %v2494
        %v2496 = vmul.f32 %v2488, %v2495
        %v2498 = vlaneseq
        %v2499 = vshrl.u32 %v2498, 7
        %v2500 = vsub.s32 0, %v2499
        %v2501 = vrot.slane %v2482, %v2500
        %v2503 = vmul.f32 %v2496, %v2501
        %v2505 = vlaneseq
        %v2506 = vshrl.u32 %v2505, 7
        %v2507 = vsub.s32 0, %v2506
        %v2508 = vrot.slane %v2483, %v2507
        %v2510 = vadd.f32 %v2503, %v2508
        %v2511 = vpack.c.bf16 %v2510, %v2510
        %v2512 = vld [vmem:[%s11] sm:$0xf]
        %v2513 = vld [vmem:[%s11 + $0x4] sm:$0xf]
        %v2514 = vld [vmem:[%s11 + $0x8] sm:$0xf]
        %v2515 = vld [vmem:[%s11 + $0xc] sm:$0xf]
        %v2516 = vld [vmem:[%s12] sm:$0x1]
        %v2518 = vlaneseq
        %v2519 = vshrl.u32 %v2518, 7
        %v2520 = vsub.s32 0, %v2519
        %v2521 = vrot.slane %v2516, %v2520
        %v2527 = vunpack.c.l.b16 %v2512
        %v2528 = vunpack.c.l.b16 %v2513
        %v2529 = vunpack.c.l.b16 %v2514
        %v2530 = vunpack.c.l.b16 %v2515
        %v2531 = vpack.c.b16 %v2528, %v2527
        %v2532 = vpack.c.b16 %v2530, %v2529
        %v2536 = vsel %vm1572, %v2511, 0
        %2538 = vmatprep.subr.bf16.mxu0 0
        %2539 = vmatpush1.bf16.msra.mxu0 %v2531
        %2540 = vmatprep.subr.bf16.mxu0 0
        %2541 = vmatpush1.bf16.msra.mxu0 %v2532
        %2542 = vmatprep.subr.bf16.mxu0 0
        %2543 = vmatpush1.bf16.msra.mxu0 0
        %2544 = vmatprep.subr.bf16.mxu0 0
        %2545 = vmatpush1.bf16.msra.mxu0 0
        %2546 = vmatprep.subr.bf16.mxu0 0
        %2547 = vmatpush1.bf16.msra.mxu0 0
        %2548 = vmatprep.subr.bf16.mxu0 0
        %2549 = vmatpush1.bf16.msra.mxu0 0
        %2550 = vmatprep.subr.bf16.mxu0 0
        %2551 = vmatpush1.bf16.msra.mxu0 0
        %2552 = vmatprep.subr.bf16.mxu0 0
        %2553 = vmatpush1.bf16.msra.mxu0 0
        %2554 = vmatprep.subr.bf16.mxu0 0
        %2555 = vmatpush1.bf16.msra.mxu0 0
        %2556 = vmatprep.subr.bf16.mxu0 0
        %2557 = vmatpush1.bf16.msra.mxu0 0
        %2558 = vmatprep.subr.bf16.mxu0 0
        %2559 = vmatpush1.bf16.msra.mxu0 0
        %2560 = vmatprep.subr.bf16.mxu0 0
        %2561 = vmatpush1.bf16.msra.mxu0 0
        %2562 = vmatprep.subr.bf16.mxu0 0
        %2563 = vmatpush1.bf16.msra.mxu0 0
        %2564 = vmatprep.subr.bf16.mxu0 0
        %2565 = vmatpush1.bf16.msra.mxu0 0
        %2566 = vmatprep.subr.bf16.mxu0 0
        %2567 = vmatpush1.bf16.msra.mxu0 0
        %2568 = vmatprep.subr.bf16.mxu0 0
        %2569 = vmatpush1.bf16.msra.mxu0 0
        %2570 = vmatprep.mubr.bf16.mxu0 0
        %2571 = vmatmul.mubr.bf16.gmra.mrb[0].mxu0 %v2536
        %v2572 = vpop.f32.mrb[0].mxu0
        %v2573 = vadd.f32 %v2521, %v2572
        %v2574 = vpop.f32.mrb[0].mxu0
        %v2575 = vpop.f32.mrb[0].mxu0
        %v2576 = vpop.f32.mrb[0].mxu0
        %2577 = vdwg.mxu0
        %v2578 = vmul.f32 %v2573, 0.5
        %v2579 = vmul.f32 %v2573, 0.70710677
        %v2580 = verf.f32.pop %v2579
        %v2581 = vadd.f32 %v2580, 1.0
        %v2582 = vmul.f32 %v2578, %v2581
        %v2583 = vpack.c.bf16 %v2582, %v2582
        %v2584 = vld [vmem:[%s13] sm:$0xf]
        %v2585 = vld [vmem:[%s13 + $0x4] sm:$0xf]
        %v2586 = vld [vmem:[%s13 + $0x8] sm:$0xf]
        %v2587 = vld [vmem:[%s13 + $0xc] sm:$0xf]
        %v2588 = vld [vmem:[%s13 + $0x10] sm:$0xf]
        %v2589 = vld [vmem:[%s13 + $0x14] sm:$0xf]
        %v2590 = vld [vmem:[%s13 + $0x18] sm:$0xf]
        %v2591 = vld [vmem:[%s13 + $0x1c] sm:$0xf]
        %v2592 = vld [vmem:[%s13 + $0x20] sm:$0xf]
        %v2593 = vld [vmem:[%s13 + $0x24] sm:$0xf]
        %v2594 = vld [vmem:[%s13 + $0x28] sm:$0xf]
        %v2595 = vld [vmem:[%s13 + $0x2c] sm:$0xf]
        %v2596 = vld [vmem:[%s13 + $0x30] sm:$0xf]
        %v2597 = vld [vmem:[%s13 + $0x34] sm:$0xf]
        %v2598 = vld [vmem:[%s13 + $0x38] sm:$0xf]
        %v2599 = vld [vmem:[%s13 + $0x3c] sm:$0xf]
        %v2600 = vld [vmem:[%s14] sm:$0x1]
        %v2602 = vlaneseq
        %v2603 = vshrl.u32 %v2602, 7
        %v2604 = vsub.s32 0, %v2603
        %v2605 = vrot.slane %v2600, %v2604
        %v2623 = vunpack.c.l.b16 %v2584
        %v2624 = vunpack.c.l.b16 %v2585
        %v2625 = vunpack.c.l.b16 %v2586
        %v2626 = vunpack.c.l.b16 %v2587
        %v2627 = vunpack.c.l.b16 %v2588
        %v2628 = vunpack.c.l.b16 %v2589
        %v2629 = vunpack.c.l.b16 %v2590
        %v2630 = vunpack.c.l.b16 %v2591
        %v2631 = vunpack.c.l.b16 %v2592
        %v2632 = vunpack.c.l.b16 %v2593
        %v2633 = vunpack.c.l.b16 %v2594
        %v2634 = vunpack.c.l.b16 %v2595
        %v2635 = vunpack.c.l.b16 %v2596
        %v2636 = vunpack.c.l.b16 %v2597
        %v2637 = vunpack.c.l.b16 %v2598
        %v2638 = vunpack.c.l.b16 %v2599
        %v2639 = vpack.c.b16 %v2624, %v2623
        %v2640 = vpack.c.b16 %v2626, %v2625
        %v2641 = vpack.c.b16 %v2628, %v2627
        %v2642 = vpack.c.b16 %v2630, %v2629
        %v2643 = vpack.c.b16 %v2632, %v2631
        %v2644 = vpack.c.b16 %v2634, %v2633
        %v2645 = vpack.c.b16 %v2636, %v2635
        %v2646 = vpack.c.b16 %v2638, %v2637
        %2655 = vmatprep.subr.bf16.mxu0 0
        %2656 = vmatpush1.bf16.msra.mxu0 %v2639
        %2657 = vmatprep.subr.bf16.mxu0 0
        %2658 = vmatpush1.bf16.msra.mxu0 %v2640
        %2659 = vmatprep.subr.bf16.mxu0 0
        %2660 = vmatpush1.bf16.msra.mxu0 %v2641
        %2661 = vmatprep.subr.bf16.mxu0 0
        %2662 = vmatpush1.bf16.msra.mxu0 %v2642
        %2663 = vmatprep.subr.bf16.mxu0 0
        %2664 = vmatpush1.bf16.msra.mxu0 %v2643
        %2665 = vmatprep.subr.bf16.mxu0 0
        %2666 = vmatpush1.bf16.msra.mxu0 %v2644
        %2667 = vmatprep.subr.bf16.mxu0 0
        %2668 = vmatpush1.bf16.msra.mxu0 %v2645
        %2669 = vmatprep.subr.bf16.mxu0 0
        %2670 = vmatpush1.bf16.msra.mxu0 %v2646
        %2671 = vmatprep.subr.bf16.mxu0 0
        %2672 = vmatpush1.bf16.msra.mxu0 0
        %2673 = vmatprep.subr.bf16.mxu0 0
        %2674 = vmatpush1.bf16.msra.mxu0 0
        %2675 = vmatprep.subr.bf16.mxu0 0
        %2676 = vmatpush1.bf16.msra.mxu0 0
        %2677 = vmatprep.subr.bf16.mxu0 0
        %2678 = vmatpush1.bf16.msra.mxu0 0
        %2679 = vmatprep.subr.bf16.mxu0 0
        %2680 = vmatpush1.bf16.msra.mxu0 0
        %2681 = vmatprep.subr.bf16.mxu0 0
        %2682 = vmatpush1.bf16.msra.mxu0 0
        %2683 = vmatprep.subr.bf16.mxu0 0
        %2684 = vmatpush1.bf16.msra.mxu0 0
        %2685 = vmatprep.subr.bf16.mxu0 0
        %2686 = vmatpush1.bf16.msra.mxu0 0
        %2687 = vmatprep.mubr.bf16.mxu0 0
        %2688 = vmatmul.mubr.bf16.gmra.mrb[0].mxu0 %v2583
        %v2689 = vpop.f32.mrb[0].mxu0
        %v2690 = vadd.f32 %v2605, %v2689
        %v2691 = vpop.f32.mrb[0].mxu0
        %v2692 = vpop.f32.mrb[0].mxu0
        %v2693 = vpop.f32.mrb[0].mxu0
        %2694 = vdwg.mxu0
        %v2695 = vadd.f32 %v2481, %v2690
        %2696 = vst.msk [vmem:[%s499] sm:$0xff] %vm1572, %v2695
        %s2697 = sand.u32 %s371, 1
        %s2698 = scalar_lea.sflag [#allocation7], %s2697
        %s2699 = sand.u32 %s371, 1
        %s2700 = smul.addr %s2699, 8
        %s2701 = scalar_lea.vmem [#allocation6], %s2700
        // Predicated region
        $region85: #{tpu_custom_call.1} parent=79 // pred_check
          %p2702 = pneg %p381
        $region86: #{tpu_custom_call.1} parent=79 // pred_check_branch
          %2704 = sbr.rel (%p2702) target = $region88
        $region87: #{tpu_custom_call.1} parent=79 // pred_region
          %s2706 = ssub.s32 128, 128
          %2707 = vsyncadd %s2698, %s2706
          %s2708 = sadd.s32 %s34, %s33
          %s2709 = smul.addr %s2708, 128
          %s2710 = scalar_lea.hbm %s15, %s2709
          %s2712 = sshll.u32 %s2701, 4
          %s2713 = int_to_ptr.vmem [resolvable:$true] %s2712
          %2715 = dma.vmem_to_hbm [thread:$0]  %s2713, 128, %s2710, %s2698
        $region88: #{tpu_custom_call.1} parent=79 // pred_fallthru
          _
      $region80: #{tpu_custom_call.1} parent=5 // pred_fallthru
        _
      %p2716 = scmp.le.s32.totalorder 2, %s24
      // Predicated region
      $region89: #{tpu_custom_call.1} parent=5 // pred_check
        %p2717 = pneg %p2716
      $region90: #{tpu_custom_call.1} parent=5 // pred_check_branch
        %2719 = sbr.rel (%p2717) target = $region92
      $region91: #{tpu_custom_call.1} parent=5 // pred_region
        %s2720 = ssub.s32 %s24, 2
        // Predicated region
        $region93: #{tpu_custom_call.1} parent=91 // pred_check
          %p2721 = pneg %p387
        $region94: #{tpu_custom_call.1} parent=91 // pred_check_branch
          %2723 = sbr.rel (%p2721) target = $region96
        $region95: #{tpu_custom_call.1} parent=91 // pred_region
          %s2724 = sand.u32 %s372, 1
          %s2725 = scalar_lea.sflag [#allocation7], %s2724
          %s2726 = sand.u32 %s372, 1
          %s2727 = smul.addr %s2726, 8
          %s2728 = scalar_lea.vmem [#allocation6], %s2727
          %2729 = dma.done %s2725, 128
        $region96: #{tpu_custom_call.1} parent=91 // pred_fallthru
          _
      $region92: #{tpu_custom_call.1} parent=5 // pred_fallthru
        _
    $region6: #{tpu_custom_call.1} parent=1 // loop_footer
      %s28 = sadd.s32 1, %s24
    $region7: #{tpu_custom_call.1} parent=1 // loop_footer_branch
      %23 = sbr.rel target = $region3
    $region8: #{tpu_custom_call.1} parent=1 // loop_exit
      _
    %2730 = vsyncpa [#allocation7], 1
    %s2731 = scalar_lea.sflag [#allocation7], 1
    %2732 = vsyncpa %s2731, 1

</llo_original>
